<compile_context>
chip_gen: v5e
topology: v5e:2x2
jax: 0.10.0
libtpu: 0.0.40
codegen_flags: <defaults>
</compile_context>

<pallas_src>
import functools

import jax
import jax.numpy as jnp
from jax.experimental import pallas as pl
from jax.experimental.pallas import tpu as pltpu


def _sam_kernel(x_ref, ximg_ref, w12_ref, b12_ref, w3_ref, b3_ref,
                x1_ref, img_ref,
                xpad_ref, imgpad_ref, patch12_ref, patch3_ref,
                *, H, W, k):
    # x_ref:      (1, H*W, Cf)            ximg_ref:  (1, H*W, 3)
    # w12_ref:    (k*k*Cf, Cf+3)          b12_ref:   (1, Cf+3)
    # w3_ref:     (k*k*3, Cf)             b3_ref:    (1, Cf)
    # x1_ref:     (1, H*W, Cf)            img_ref:   (1, H*W, 3)
    # xpad_ref:   (H+2p, W+2p, Cf)        imgpad_ref:(H+2p, W+2p, 3)    [cdtype]
    # patch12_ref:(H*W, k*k*Cf)           patch3_ref:(H*W, k*k*3)       [cdtype]
    Cf = x_ref.shape[-1]
    pad = k // 2
    HW = H * W
    cdtype = xpad_ref.dtype

    # --- zero only the halo ring (interior is fully overwritten each step) ---
    if pad > 0:
        for ref, c in ((xpad_ref, Cf), (imgpad_ref, 3)):
            Hp_, Wp_ = ref.shape[0], ref.shape[1]
            ref[:pad, :, :] = jnp.zeros((pad, Wp_, c), cdtype)
            ref[pad + H:, :, :] = jnp.zeros((Hp_ - pad - H, Wp_, c), cdtype)
            ref[pad:pad + H, :pad, :] = jnp.zeros((H, pad, c), cdtype)
            ref[pad:pad + H, pad + W:, :] = jnp.zeros((H, Wp_ - pad - W, c), cdtype)

    # --- stage x interior into the padded VMEM frame (no HBM pad round-trip) ---
    xpad_ref[pad:pad + H, pad:pad + W, :] = x_ref[0].reshape(H, W, Cf).astype(cdtype)

    # --- im2col slab for conv1+conv2 and a single fused MXU matmul (K = k*k*Cf) ---
    for di in range(k):
        for dj in range(k):
            t = di * k + dj
            win = xpad_ref[di:di + H, dj:dj + W, :].reshape(HW, Cf)
            patch12_ref[:, t * Cf:(t + 1) * Cf] = win

    acc12 = jnp.dot(patch12_ref[...], w12_ref[...],
                    preferred_element_type=jnp.float32)
    acc12 = acc12 + b12_ref[...].astype(jnp.float32)          # (HW, Cf+3)
    acc1 = acc12[:, :Cf]                                       # conv1(x), f32
    img = acc12[:, Cf:] + ximg_ref[0].astype(jnp.float32)      # conv2(x)+x_img, (HW,3)
    img_ref[0] = img.astype(img_ref.dtype)

    # --- im2col slab for conv3 over img and one MXU matmul (K = k*k*3) ---
    imgpad_ref[pad:pad + H, pad:pad + W, :] = img.reshape(H, W, 3).astype(cdtype)
    for di in range(k):
        for dj in range(k):
            t = di * k + dj
            win3 = imgpad_ref[di:di + H, dj:dj + W, :].reshape(HW, 3)
            patch3_ref[:, t * 3:(t + 1) * 3] = win3

    acc3 = jnp.dot(patch3_ref[...], w3_ref[...],
                   preferred_element_type=jnp.float32)
    acc3 = acc3 + b3_ref[...].astype(jnp.float32)              # (HW, Cf)
    x2 = jax.nn.sigmoid(acc3)

    # --- out = conv1(x) * sigmoid(conv3(img)) + x  (x reloaded late from VMEM) ---
    out = acc1 * x2 + x_ref[0].astype(jnp.float32)
    x1_ref[0] = out.astype(x1_ref.dtype)


def sam_forward(x, x_img, w1, w2, w3, b1=None, b2=None, b3=None):
    """Fused SAM forward. x: (B,H,W,Cf) NHWC, x_img: (B,H,W,3), w*: HWIO."""
    B, H, W, Cf = x.shape
    k = w1.shape[0]
    assert k % 2 == 1, "padding=k//2 only matches the reference for odd kernel sizes"
    assert x_img.shape == (B, H, W, 3)
    assert w1.shape == (k, k, Cf, Cf)
    assert w2.shape == (k, k, Cf, 3)
    assert w3.shape == (k, k, 3, Cf)
    pad = k // 2
    Hp, Wp = H + 2 * pad, W + 2 * pad
    HW = H * W
    dtype = x.dtype

    if b1 is None:
        b1 = jnp.zeros((Cf,), dtype)
    if b2 is None:
        b2 = jnp.zeros((3,), dtype)
    if b3 is None:
        b3 = jnp.zeros((Cf,), dtype)

    # Fuse conv1/conv2 weights into one im2col weight matrix (rows ordered
    # (di, dj, cin) to match the patch slab the kernel builds).
    w12 = jnp.concatenate([w1.reshape(k * k * Cf, Cf).astype(dtype),
                           w2.reshape(k * k * Cf, 3).astype(dtype)], axis=1)
    b12 = jnp.concatenate([b1, b2]).reshape(1, Cf + 3).astype(dtype)
    w3r = w3.reshape(k * k * 3, Cf).astype(dtype)
    b3r = b3.reshape(1, Cf).astype(dtype)

    # Flattened-spatial views (free reshapes; channel stays on the lane axis).
    x_f = x.reshape(B, HW, Cf)
    ximg_f = x_img.reshape(B, HW, 3)

    kernel = functools.partial(_sam_kernel, H=H, W=W, k=k)

    grid_spec = pltpu.PrefetchScalarGridSpec(
        num_scalar_prefetch=0,
        grid=(B,),
        in_specs=[
            pl.BlockSpec((1, HW, Cf), lambda b: (b, 0, 0)),        # x tile
            pl.BlockSpec((1, HW, 3), lambda b: (b, 0, 0)),         # x_img tile
            pl.BlockSpec((k * k * Cf, Cf + 3), lambda b: (0, 0)),  # fused w1|w2
            pl.BlockSpec((1, Cf + 3), lambda b: (0, 0)),           # fused b1|b2
            pl.BlockSpec((k * k * 3, Cf), lambda b: (0, 0)),       # w3
            pl.BlockSpec((1, Cf), lambda b: (0, 0)),               # b3
        ],
        out_specs=(
            pl.BlockSpec((1, HW, Cf), lambda b: (b, 0, 0)),        # x1 out
            pl.BlockSpec((1, HW, 3), lambda b: (b, 0, 0)),         # img out
        ),
        scratch_shapes=[
            pltpu.VMEM((Hp, Wp, Cf), dtype),                       # padded x
            pltpu.VMEM((Hp, Wp, 3), dtype),                        # padded img
            pltpu.VMEM((HW, k * k * Cf), dtype),                   # im2col (conv1+2)
            pltpu.VMEM((HW, k * k * 3), dtype),                    # im2col (conv3)
        ],
    )

    # VMEM budget: double-buffered I/O tiles + resident weights + scratch + f32 temps.
    isz = jnp.dtype(dtype).itemsize
    est = (2 * 2 * HW * (Cf + 3) * isz                               # in/out tiles x2 buf
           + 2 * (k * k * Cf * (Cf + 3) + k * k * 3 * Cf + 2 * Cf + 3) * isz
           + Hp * Wp * (Cf + 3) * isz                                # padded frames
           + HW * k * k * (Cf + 3) * isz                             # im2col slabs
           + 3 * HW * (Cf + 3) * 4)                                  # f32 accumulators
    vmem_limit = int(min(max(2 * est, 32 * 1024 * 1024), 64 * 1024 * 1024))

    out_shape = (jax.ShapeDtypeStruct((B, HW, Cf), dtype),
                 jax.ShapeDtypeStruct((B, HW, 3), dtype))

    x1_f, img_f = pl.pallas_call(
        kernel,
        out_shape=out_shape,
        grid_spec=grid_spec,
        compiler_params=pltpu.CompilerParams(
            dimension_semantics=("parallel",),                      # batch over TCs
            vmem_limit_bytes=vmem_limit),
    )(x_f, ximg_f, w12, b12, w3r, b3r)

    return x1_f.reshape(B, H, W, Cf), img_f.reshape(B, H, W, 3)


def sam_ref(x, x_img, w1, w2, w3, b1, b2, b3):
    dn = ("NHWC", "HWIO", "NHWC")

    def conv2d(inp, w, b):
        out = jax.lax.conv_general_dilated(
            inp, w, window_strides=(1, 1), padding="SAME",
            dimension_numbers=dn, precision=jax.lax.Precision.HIGHEST)
        return out + b.reshape(1, 1, 1, -1)

    x1 = conv2d(x, w1, b1)
    img = conv2d(x, w2, b2) + x_img
    x2 = jax.nn.sigmoid(conv2d(img, w3, b3))
    return x1 * x2 + x, img


if __name__ == "__main__":
    key = jax.random.PRNGKey(0)
    B, Cf, H, W, k = 2, 32, 16, 16, 3          # n_feat=32, kernel_size=3, bias=False
    kx, ki, k1, k2, k3 = jax.random.split(key, 5)

    x = jax.random.normal(kx, (B, H, W, Cf), dtype=jnp.float32)
    x_img = jax.random.normal(ki, (B, H, W, 3), dtype=jnp.float32)
    w1 = 0.1 * jax.random.normal(k1, (k, k, Cf, Cf), dtype=jnp.float32)
    w2 = 0.1 * jax.random.normal(k2, (k, k, Cf, 3), dtype=jnp.float32)
    w3 = 0.1 * jax.random.normal(k3, (k, k, 3, Cf), dtype=jnp.float32)
    b1 = jnp.zeros((Cf,), jnp.float32)         # bias=False in the module
    b2 = jnp.zeros((3,), jnp.float32)
    b3 = jnp.zeros((Cf,), jnp.float32)

    x1, img = sam_forward(x, x_img, w1, w2, w3, b1, b2, b3)
    x1, img = jax.block_until_ready((x1, img))

    x1_ref, img_ref = sam_ref(x, x_img, w1, w2, w3, b1, b2, b3)
    assert jnp.allclose(img, img_ref, atol=5e-2, rtol=5e-2), "img mismatch vs reference"
    assert jnp.allclose(x1, x1_ref, atol=5e-2, rtol=5e-2), "x1 mismatch vs reference"

    print("KERNEL_OK")
</pallas_src>

<mosaic_0001>
module attributes {stable_mosaic.version = 11 : i64} {
  func.func @_sam_kernel(%arg0: i32, %arg1: memref<1x256x32xf32, #tpu.memory_space<vmem>>, %arg2: memref<1x256x3xf32, #tpu.memory_space<vmem>>, %arg3: memref<288x35xf32, #tpu.memory_space<vmem>>, %arg4: memref<1x35xf32, #tpu.memory_space<vmem>>, %arg5: memref<27x32xf32, #tpu.memory_space<vmem>>, %arg6: memref<1x32xf32, #tpu.memory_space<vmem>>, %arg7: memref<1x256x32xf32, #tpu.memory_space<vmem>>, %arg8: memref<1x256x3xf32, #tpu.memory_space<vmem>>, %arg9: memref<18x18x32xf32, #tpu.memory_space<vmem>>, %arg10: memref<18x18x3xf32, #tpu.memory_space<vmem>>, %arg11: memref<256x288xf32, #tpu.memory_space<vmem>>, %arg12: memref<256x27xf32, #tpu.memory_space<vmem>>) attributes {dimension_semantics = [#tpu.dimension_semantics<parallel>], iteration_bounds = array<i64: 2>, scalar_prefetch = 0 : i64, scratch_operands = 4 : i64, tpu.core_type = #tpu.core_type<tc>, window_params = [{transform_indices = @transform_0, window_bounds = array<i64: 1, 256, 32>}, {transform_indices = @transform_1, window_bounds = array<i64: 1, 256, 3>}, {pipeline_mode = #tpu.pipeline_mode<synchronous>, transform_indices = @transform_2, window_bounds = array<i64: 288, 35>}, {pipeline_mode = #tpu.pipeline_mode<synchronous>, transform_indices = @transform_3, window_bounds = array<i64: 1, 35>}, {pipeline_mode = #tpu.pipeline_mode<synchronous>, transform_indices = @transform_4, window_bounds = array<i64: 27, 32>}, {pipeline_mode = #tpu.pipeline_mode<synchronous>, transform_indices = @transform_5, window_bounds = array<i64: 1, 32>}, {transform_indices = @transform_6, window_bounds = array<i64: 1, 256, 32>}, {transform_indices = @transform_7, window_bounds = array<i64: 1, 256, 3>}]} {
    %cst = arith.constant 0.000000e+00 : f32
    %0 = vector.broadcast %cst : f32 to vector<1x18x32xf32>
    %c0 = arith.constant 0 : index
    %c0_0 = arith.constant 0 : index
    %c0_1 = arith.constant 0 : index
    %1 = vector.load %arg9[%c0, %c0_0, %c0_1] : memref<18x18x32xf32, #tpu.memory_space<vmem>>, vector<1x18x32xf32>
    tpu.vector_store %arg9[%c0, %c0_0, %c0_1], %0 {strides = array<i32>} : memref<18x18x32xf32, #tpu.memory_space<vmem>>, vector<1x18x32xf32>,
    %cst_2 = arith.constant 0.000000e+00 : f32
    %2 = vector.broadcast %cst_2 : f32 to vector<1x18x32xf32>
    %c17 = arith.constant 17 : index
    %c0_3 = arith.constant 0 : index
    %c0_4 = arith.constant 0 : index
    %3 = vector.load %arg9[%c17, %c0_3, %c0_4] : memref<18x18x32xf32, #tpu.memory_space<vmem>>, vector<1x18x32xf32>
    tpu.vector_store %arg9[%c17, %c0_3, %c0_4], %2 {strides = array<i32>} : memref<18x18x32xf32, #tpu.memory_space<vmem>>, vector<1x18x32xf32>,
    %cst_5 = arith.constant 0.000000e+00 : f32
    %4 = vector.broadcast %cst_5 : f32 to vector<16x1x32xf32>
    %c1 = arith.constant 1 : index
    %c0_6 = arith.constant 0 : index
    %c0_7 = arith.constant 0 : index
    %5 = vector.load %arg9[%c1, %c0_6, %c0_7] : memref<18x18x32xf32, #tpu.memory_space<vmem>>, vector<16x1x32xf32>
    tpu.vector_store %arg9[%c1, %c0_6, %c0_7], %4 {strides = array<i32>} : memref<18x18x32xf32, #tpu.memory_space<vmem>>, vector<16x1x32xf32>,
    %cst_8 = arith.constant 0.000000e+00 : f32
    %6 = vector.broadcast %cst_8 : f32 to vector<16x1x32xf32>
    %c1_9 = arith.constant 1 : index
    %c17_10 = arith.constant 17 : index
    %c0_11 = arith.constant 0 : index
    %7 = vector.load %arg9[%c1_9, %c17_10, %c0_11] : memref<18x18x32xf32, #tpu.memory_space<vmem>>, vector<16x1x32xf32>
    tpu.vector_store %arg9[%c1_9, %c17_10, %c0_11], %6 {strides = array<i32>} : memref<18x18x32xf32, #tpu.memory_space<vmem>>, vector<16x1x32xf32>,
    %cst_12 = arith.constant 0.000000e+00 : f32
    %8 = vector.broadcast %cst_12 : f32 to vector<1x18x3xf32>
    %c0_13 = arith.constant 0 : index
    %c0_14 = arith.constant 0 : index
    %c0_15 = arith.constant 0 : index
    %9 = vector.load %arg10[%c0_13, %c0_14, %c0_15] : memref<18x18x3xf32, #tpu.memory_space<vmem>>, vector<1x18x3xf32>
    tpu.vector_store %arg10[%c0_13, %c0_14, %c0_15], %8 {strides = array<i32>} : memref<18x18x3xf32, #tpu.memory_space<vmem>>, vector<1x18x3xf32>,
    %cst_16 = arith.constant 0.000000e+00 : f32
    %10 = vector.broadcast %cst_16 : f32 to vector<1x18x3xf32>
    %c17_17 = arith.constant 17 : index
    %c0_18 = arith.constant 0 : index
    %c0_19 = arith.constant 0 : index
    %11 = vector.load %arg10[%c17_17, %c0_18, %c0_19] : memref<18x18x3xf32, #tpu.memory_space<vmem>>, vector<1x18x3xf32>
    tpu.vector_store %arg10[%c17_17, %c0_18, %c0_19], %10 {strides = array<i32>} : memref<18x18x3xf32, #tpu.memory_space<vmem>>, vector<1x18x3xf32>,
    %cst_20 = arith.constant 0.000000e+00 : f32
    %12 = vector.broadcast %cst_20 : f32 to vector<16x1x3xf32>
    %c1_21 = arith.constant 1 : index
    %c0_22 = arith.constant 0 : index
    %c0_23 = arith.constant 0 : index
    %13 = vector.load %arg10[%c1_21, %c0_22, %c0_23] : memref<18x18x3xf32, #tpu.memory_space<vmem>>, vector<16x1x3xf32>
    tpu.vector_store %arg10[%c1_21, %c0_22, %c0_23], %12 {strides = array<i32>} : memref<18x18x3xf32, #tpu.memory_space<vmem>>, vector<16x1x3xf32>,
    %cst_24 = arith.constant 0.000000e+00 : f32
    %14 = vector.broadcast %cst_24 : f32 to vector<16x1x3xf32>
    %c1_25 = arith.constant 1 : index
    %c17_26 = arith.constant 17 : index
    %c0_27 = arith.constant 0 : index
    %15 = vector.load %arg10[%c1_25, %c17_26, %c0_27] : memref<18x18x3xf32, #tpu.memory_space<vmem>>, vector<16x1x3xf32>
    tpu.vector_store %arg10[%c1_25, %c17_26, %c0_27], %14 {strides = array<i32>} : memref<18x18x3xf32, #tpu.memory_space<vmem>>, vector<16x1x3xf32>,
    %c0_28 = arith.constant 0 : index
    %c0_29 = arith.constant 0 : index
    %c0_30 = arith.constant 0 : index
    %16 = vector.load %arg1[%c0_28, %c0_29, %c0_30] : memref<1x256x32xf32, #tpu.memory_space<vmem>>, vector<1x256x32xf32>
    %17 = vector.shape_cast %16 : vector<1x256x32xf32> to vector<256x32xf32>
    %18 = vector.shape_cast %17 : vector<256x32xf32> to vector<16x16x32xf32>
    %c1_31 = arith.constant 1 : index
    %c1_32 = arith.constant 1 : index
    %c0_33 = arith.constant 0 : index
    %19 = vector.load %arg9[%c1_31, %c1_32, %c0_33] : memref<18x18x32xf32, #tpu.memory_space<vmem>>, vector<16x16x32xf32>
    tpu.vector_store %arg9[%c1_31, %c1_32, %c0_33], %18 {strides = array<i32>} : memref<18x18x32xf32, #tpu.memory_space<vmem>>, vector<16x16x32xf32>,
    %c0_34 = arith.constant 0 : index
    %c0_35 = arith.constant 0 : index
    %c0_36 = arith.constant 0 : index
    %20 = vector.load %arg9[%c0_34, %c0_35, %c0_36] : memref<18x18x32xf32, #tpu.memory_space<vmem>>, vector<16x16x32xf32>
    %21 = vector.shape_cast %20 : vector<16x16x32xf32> to vector<256x32xf32>
    %c0_37 = arith.constant 0 : index
    %c0_38 = arith.constant 0 : index
    %22 = vector.load %arg11[%c0_37, %c0_38] : memref<256x288xf32, #tpu.memory_space<vmem>>, vector<256x32xf32>
    tpu.vector_store %arg11[%c0_37, %c0_38], %21 {strides = array<i32>} : memref<256x288xf32, #tpu.memory_space<vmem>>, vector<256x32xf32>,
    %c0_39 = arith.constant 0 : index
    %c1_40 = arith.constant 1 : index
    %c0_41 = arith.constant 0 : index
    %23 = vector.load %arg9[%c0_39, %c1_40, %c0_41] : memref<18x18x32xf32, #tpu.memory_space<vmem>>, vector<16x16x32xf32>
    %24 = vector.shape_cast %23 : vector<16x16x32xf32> to vector<256x32xf32>
    %c0_42 = arith.constant 0 : index
    %c32 = arith.constant 32 : index
    %25 = vector.load %arg11[%c0_42, %c32] : memref<256x288xf32, #tpu.memory_space<vmem>>, vector<256x32xf32>
    tpu.vector_store %arg11[%c0_42, %c32], %24 {strides = array<i32>} : memref<256x288xf32, #tpu.memory_space<vmem>>, vector<256x32xf32>,
    %c0_43 = arith.constant 0 : index
    %c2 = arith.constant 2 : index
    %c0_44 = arith.constant 0 : index
    %26 = vector.load %arg9[%c0_43, %c2, %c0_44] : memref<18x18x32xf32, #tpu.memory_space<vmem>>, vector<16x16x32xf32>
    %27 = vector.shape_cast %26 : vector<16x16x32xf32> to vector<256x32xf32>
    %c0_45 = arith.constant 0 : index
    %c64 = arith.constant 64 : index
    %28 = vector.load %arg11[%c0_45, %c64] : memref<256x288xf32, #tpu.memory_space<vmem>>, vector<256x32xf32>
    tpu.vector_store %arg11[%c0_45, %c64], %27 {strides = array<i32>} : memref<256x288xf32, #tpu.memory_space<vmem>>, vector<256x32xf32>,
    %c1_46 = arith.constant 1 : index
    %c0_47 = arith.constant 0 : index
    %c0_48 = arith.constant 0 : index
    %29 = vector.load %arg9[%c1_46, %c0_47, %c0_48] : memref<18x18x32xf32, #tpu.memory_space<vmem>>, vector<16x16x32xf32>
    %30 = vector.shape_cast %29 : vector<16x16x32xf32> to vector<256x32xf32>
    %c0_49 = arith.constant 0 : index
    %c96 = arith.constant 96 : index
    %31 = vector.load %arg11[%c0_49, %c96] : memref<256x288xf32, #tpu.memory_space<vmem>>, vector<256x32xf32>
    tpu.vector_store %arg11[%c0_49, %c96], %30 {strides = array<i32>} : memref<256x288xf32, #tpu.memory_space<vmem>>, vector<256x32xf32>,
    %c1_50 = arith.constant 1 : index
    %c1_51 = arith.constant 1 : index
    %c0_52 = arith.constant 0 : index
    %32 = vector.load %arg9[%c1_50, %c1_51, %c0_52] : memref<18x18x32xf32, #tpu.memory_space<vmem>>, vector<16x16x32xf32>
    %33 = vector.shape_cast %32 : vector<16x16x32xf32> to vector<256x32xf32>
    %c0_53 = arith.constant 0 : index
    %c128 = arith.constant 128 : index
    %34 = vector.load %arg11[%c0_53, %c128] : memref<256x288xf32, #tpu.memory_space<vmem>>, vector<256x32xf32>
    tpu.vector_store %arg11[%c0_53, %c128], %33 {strides = array<i32>} : memref<256x288xf32, #tpu.memory_space<vmem>>, vector<256x32xf32>,
    %c1_54 = arith.constant 1 : index
    %c2_55 = arith.constant 2 : index
    %c0_56 = arith.constant 0 : index
    %35 = vector.load %arg9[%c1_54, %c2_55, %c0_56] : memref<18x18x32xf32, #tpu.memory_space<vmem>>, vector<16x16x32xf32>
    %36 = vector.shape_cast %35 : vector<16x16x32xf32> to vector<256x32xf32>
    %c0_57 = arith.constant 0 : index
    %c160 = arith.constant 160 : index
    %37 = vector.load %arg11[%c0_57, %c160] : memref<256x288xf32, #tpu.memory_space<vmem>>, vector<256x32xf32>
    tpu.vector_store %arg11[%c0_57, %c160], %36 {strides = array<i32>} : memref<256x288xf32, #tpu.memory_space<vmem>>, vector<256x32xf32>,
    %c2_58 = arith.constant 2 : index
    %c0_59 = arith.constant 0 : index
    %c0_60 = arith.constant 0 : index
    %38 = vector.load %arg9[%c2_58, %c0_59, %c0_60] : memref<18x18x32xf32, #tpu.memory_space<vmem>>, vector<16x16x32xf32>
    %39 = vector.shape_cast %38 : vector<16x16x32xf32> to vector<256x32xf32>
    %c0_61 = arith.constant 0 : index
    %c192 = arith.constant 192 : index
    %40 = vector.load %arg11[%c0_61, %c192] : memref<256x288xf32, #tpu.memory_space<vmem>>, vector<256x32xf32>
    tpu.vector_store %arg11[%c0_61, %c192], %39 {strides = array<i32>} : memref<256x288xf32, #tpu.memory_space<vmem>>, vector<256x32xf32>,
    %c2_62 = arith.constant 2 : index
    %c1_63 = arith.constant 1 : index
    %c0_64 = arith.constant 0 : index
    %41 = vector.load %arg9[%c2_62, %c1_63, %c0_64] : memref<18x18x32xf32, #tpu.memory_space<vmem>>, vector<16x16x32xf32>
    %42 = vector.shape_cast %41 : vector<16x16x32xf32> to vector<256x32xf32>
    %c0_65 = arith.constant 0 : index
    %c224 = arith.constant 224 : index
    %43 = vector.load %arg11[%c0_65, %c224] : memref<256x288xf32, #tpu.memory_space<vmem>>, vector<256x32xf32>
    tpu.vector_store %arg11[%c0_65, %c224], %42 {strides = array<i32>} : memref<256x288xf32, #tpu.memory_space<vmem>>, vector<256x32xf32>,
    %c2_66 = arith.constant 2 : index
    %c2_67 = arith.constant 2 : index
    %c0_68 = arith.constant 0 : index
    %44 = vector.load %arg9[%c2_66, %c2_67, %c0_68] : memref<18x18x32xf32, #tpu.memory_space<vmem>>, vector<16x16x32xf32>
    %45 = vector.shape_cast %44 : vector<16x16x32xf32> to vector<256x32xf32>
    %c0_69 = arith.constant 0 : index
    %c256 = arith.constant 256 : index
    %46 = vector.load %arg11[%c0_69, %c256] : memref<256x288xf32, #tpu.memory_space<vmem>>, vector<256x32xf32>
    tpu.vector_store %arg11[%c0_69, %c256], %45 {strides = array<i32>} : memref<256x288xf32, #tpu.memory_space<vmem>>, vector<256x32xf32>,
    %c0_70 = arith.constant 0 : index
    %c0_71 = arith.constant 0 : index
    %47 = vector.load %arg11[%c0_70, %c0_71] : memref<256x288xf32, #tpu.memory_space<vmem>>, vector<256x288xf32>
    %c0_72 = arith.constant 0 : index
    %c0_73 = arith.constant 0 : index
    %48 = vector.load %arg3[%c0_72, %c0_73] : memref<288x35xf32, #tpu.memory_space<vmem>>, vector<288x35xf32>
    %cst_74 = arith.constant dense<0.000000e+00> : vector<256x35xf32>
    %49 = tpu.matmul %47, %48, %cst_74 {dimension_numbers = #tpu.dot_dimension_numbers<[1], [0], [0], [1], [0, 0, 1, 1], [], []>} : vector<256x288xf32>, vector<288x35xf32>, vector<256x35xf32> -> vector<256x35xf32>
    %c0_75 = arith.constant 0 : index
    %c0_76 = arith.constant 0 : index
    %50 = vector.load %arg4[%c0_75, %c0_76] : memref<1x35xf32, #tpu.memory_space<vmem>>, vector<1x35xf32>
    %51 = vector.broadcast %50 : vector<1x35xf32> to vector<256x35xf32>
    %52 = arith.addf %49, %51 : vector<256x35xf32>
    %53 = vector.extract_strided_slice %52 {offsets = [0, 0], sizes = [256, 32], strides = [1, 1]} : vector<256x35xf32> to vector<256x32xf32>
    %54 = vector.extract_strided_slice %52 {offsets = [0, 32], sizes = [256, 3], strides = [1, 1]} : vector<256x35xf32> to vector<256x3xf32>
    %c0_77 = arith.constant 0 : index
    %c0_78 = arith.constant 0 : index
    %c0_79 = arith.constant 0 : index
    %55 = vector.load %arg2[%c0_77, %c0_78, %c0_79] : memref<1x256x3xf32, #tpu.memory_space<vmem>>, vector<1x256x3xf32>
    %56 = vector.shape_cast %55 : vector<1x256x3xf32> to vector<256x3xf32>
    %57 = arith.addf %54, %56 : vector<256x3xf32>
    %c0_80 = arith.constant 0 : index
    %c0_81 = arith.constant 0 : index
    %c0_82 = arith.constant 0 : index
    %58 = vector.load %arg8[%c0_80, %c0_81, %c0_82] : memref<1x256x3xf32, #tpu.memory_space<vmem>>, vector<1x256x3xf32>
    %59 = vector.shape_cast %58 : vector<1x256x3xf32> to vector<256x3xf32>
    %60 = vector.shape_cast %57 : vector<256x3xf32> to vector<1x256x3xf32>
    tpu.vector_store %arg8[%c0_80, %c0_81, %c0_82], %60 {strides = array<i32>} : memref<1x256x3xf32, #tpu.memory_space<vmem>>, vector<1x256x3xf32>,
    %61 = vector.shape_cast %57 : vector<256x3xf32> to vector<16x16x3xf32>
    %c1_83 = arith.constant 1 : index
    %c1_84 = arith.constant 1 : index
    %c0_85 = arith.constant 0 : index
    %62 = vector.load %arg10[%c1_83, %c1_84, %c0_85] : memref<18x18x3xf32, #tpu.memory_space<vmem>>, vector<16x16x3xf32>
    tpu.vector_store %arg10[%c1_83, %c1_84, %c0_85], %61 {strides = array<i32>} : memref<18x18x3xf32, #tpu.memory_space<vmem>>, vector<16x16x3xf32>,
    %c0_86 = arith.constant 0 : index
    %c0_87 = arith.constant 0 : index
    %c0_88 = arith.constant 0 : index
    %63 = vector.load %arg10[%c0_86, %c0_87, %c0_88] : memref<18x18x3xf32, #tpu.memory_space<vmem>>, vector<16x16x3xf32>
    %64 = vector.shape_cast %63 : vector<16x16x3xf32> to vector<256x3xf32>
    %c0_89 = arith.constant 0 : index
    %c0_90 = arith.constant 0 : index
    %65 = vector.load %arg12[%c0_89, %c0_90] : memref<256x27xf32, #tpu.memory_space<vmem>>, vector<256x3xf32>
    tpu.vector_store %arg12[%c0_89, %c0_90], %64 {strides = array<i32>} : memref<256x27xf32, #tpu.memory_space<vmem>>, vector<256x3xf32>,
    %c0_91 = arith.constant 0 : index
    %c1_92 = arith.constant 1 : index
    %c0_93 = arith.constant 0 : index
    %66 = vector.load %arg10[%c0_91, %c1_92, %c0_93] : memref<18x18x3xf32, #tpu.memory_space<vmem>>, vector<16x16x3xf32>
    %67 = vector.shape_cast %66 : vector<16x16x3xf32> to vector<256x3xf32>
    %c0_94 = arith.constant 0 : index
    %c3 = arith.constant 3 : index
    %68 = vector.load %arg12[%c0_94, %c3] : memref<256x27xf32, #tpu.memory_space<vmem>>, vector<256x3xf32>
    tpu.vector_store %arg12[%c0_94, %c3], %67 {strides = array<i32>} : memref<256x27xf32, #tpu.memory_space<vmem>>, vector<256x3xf32>,
    %c0_95 = arith.constant 0 : index
    %c2_96 = arith.constant 2 : index
    %c0_97 = arith.constant 0 : index
    %69 = vector.load %arg10[%c0_95, %c2_96, %c0_97] : memref<18x18x3xf32, #tpu.memory_space<vmem>>, vector<16x16x3xf32>
    %70 = vector.shape_cast %69 : vector<16x16x3xf32> to vector<256x3xf32>
    %c0_98 = arith.constant 0 : index
    %c6 = arith.constant 6 : index
    %71 = vector.load %arg12[%c0_98, %c6] : memref<256x27xf32, #tpu.memory_space<vmem>>, vector<256x3xf32>
    tpu.vector_store %arg12[%c0_98, %c6], %70 {strides = array<i32>} : memref<256x27xf32, #tpu.memory_space<vmem>>, vector<256x3xf32>,
    %c1_99 = arith.constant 1 : index
    %c0_100 = arith.constant 0 : index
    %c0_101 = arith.constant 0 : index
    %72 = vector.load %arg10[%c1_99, %c0_100, %c0_101] : memref<18x18x3xf32, #tpu.memory_space<vmem>>, vector<16x16x3xf32>
    %73 = vector.shape_cast %72 : vector<16x16x3xf32> to vector<256x3xf32>
    %c0_102 = arith.constant 0 : index
    %c9 = arith.constant 9 : index
    %74 = vector.load %arg12[%c0_102, %c9] : memref<256x27xf32, #tpu.memory_space<vmem>>, vector<256x3xf32>
    tpu.vector_store %arg12[%c0_102, %c9], %73 {strides = array<i32>} : memref<256x27xf32, #tpu.memory_space<vmem>>, vector<256x3xf32>,
    %c1_103 = arith.constant 1 : index
    %c1_104 = arith.constant 1 : index
    %c0_105 = arith.constant 0 : index
    %75 = vector.load %arg10[%c1_103, %c1_104, %c0_105] : memref<18x18x3xf32, #tpu.memory_space<vmem>>, vector<16x16x3xf32>
    %76 = vector.shape_cast %75 : vector<16x16x3xf32> to vector<256x3xf32>
    %c0_106 = arith.constant 0 : index
    %c12 = arith.constant 12 : index
    %77 = vector.load %arg12[%c0_106, %c12] : memref<256x27xf32, #tpu.memory_space<vmem>>, vector<256x3xf32>
    tpu.vector_store %arg12[%c0_106, %c12], %76 {strides = array<i32>} : memref<256x27xf32, #tpu.memory_space<vmem>>, vector<256x3xf32>,
    %c1_107 = arith.constant 1 : index
    %c2_108 = arith.constant 2 : index
    %c0_109 = arith.constant 0 : index
    %78 = vector.load %arg10[%c1_107, %c2_108, %c0_109] : memref<18x18x3xf32, #tpu.memory_space<vmem>>, vector<16x16x3xf32>
    %79 = vector.shape_cast %78 : vector<16x16x3xf32> to vector<256x3xf32>
    %c0_110 = arith.constant 0 : index
    %c15 = arith.constant 15 : index
    %80 = vector.load %arg12[%c0_110, %c15] : memref<256x27xf32, #tpu.memory_space<vmem>>, vector<256x3xf32>
    tpu.vector_store %arg12[%c0_110, %c15], %79 {strides = array<i32>} : memref<256x27xf32, #tpu.memory_space<vmem>>, vector<256x3xf32>,
    %c2_111 = arith.constant 2 : index
    %c0_112 = arith.constant 0 : index
    %c0_113 = arith.constant 0 : index
    %81 = vector.load %arg10[%c2_111, %c0_112, %c0_113] : memref<18x18x3xf32, #tpu.memory_space<vmem>>, vector<16x16x3xf32>
    %82 = vector.shape_cast %81 : vector<16x16x3xf32> to vector<256x3xf32>
    %c0_114 = arith.constant 0 : index
    %c18 = arith.constant 18 : index
    %83 = vector.load %arg12[%c0_114, %c18] : memref<256x27xf32, #tpu.memory_space<vmem>>, vector<256x3xf32>
    tpu.vector_store %arg12[%c0_114, %c18], %82 {strides = array<i32>} : memref<256x27xf32, #tpu.memory_space<vmem>>, vector<256x3xf32>,
    %c2_115 = arith.constant 2 : index
    %c1_116 = arith.constant 1 : index
    %c0_117 = arith.constant 0 : index
    %84 = vector.load %arg10[%c2_115, %c1_116, %c0_117] : memref<18x18x3xf32, #tpu.memory_space<vmem>>, vector<16x16x3xf32>
    %85 = vector.shape_cast %84 : vector<16x16x3xf32> to vector<256x3xf32>
    %c0_118 = arith.constant 0 : index
    %c21 = arith.constant 21 : index
    %86 = vector.load %arg12[%c0_118, %c21] : memref<256x27xf32, #tpu.memory_space<vmem>>, vector<256x3xf32>
    tpu.vector_store %arg12[%c0_118, %c21], %85 {strides = array<i32>} : memref<256x27xf32, #tpu.memory_space<vmem>>, vector<256x3xf32>,
    %c2_119 = arith.constant 2 : index
    %c2_120 = arith.constant 2 : index
    %c0_121 = arith.constant 0 : index
    %87 = vector.load %arg10[%c2_119, %c2_120, %c0_121] : memref<18x18x3xf32, #tpu.memory_space<vmem>>, vector<16x16x3xf32>
    %88 = vector.shape_cast %87 : vector<16x16x3xf32> to vector<256x3xf32>
    %c0_122 = arith.constant 0 : index
    %c24 = arith.constant 24 : index
    %89 = vector.load %arg12[%c0_122, %c24] : memref<256x27xf32, #tpu.memory_space<vmem>>, vector<256x3xf32>
    tpu.vector_store %arg12[%c0_122, %c24], %88 {strides = array<i32>} : memref<256x27xf32, #tpu.memory_space<vmem>>, vector<256x3xf32>,
    %c0_123 = arith.constant 0 : index
    %c0_124 = arith.constant 0 : index
    %90 = vector.load %arg12[%c0_123, %c0_124] : memref<256x27xf32, #tpu.memory_space<vmem>>, vector<256x27xf32>
    %c0_125 = arith.constant 0 : index
    %c0_126 = arith.constant 0 : index
    %91 = vector.load %arg5[%c0_125, %c0_126] : memref<27x32xf32, #tpu.memory_space<vmem>>, vector<27x32xf32>
    %cst_127 = arith.constant dense<0.000000e+00> : vector<256x32xf32>
    %92 = tpu.matmul %90, %91, %cst_127 {dimension_numbers = #tpu.dot_dimension_numbers<[1], [0], [0], [1], [0, 0, 1, 1], [], []>} : vector<256x27xf32>, vector<27x32xf32>, vector<256x32xf32> -> vector<256x32xf32>
    %c0_128 = arith.constant 0 : index
    %c0_129 = arith.constant 0 : index
    %93 = vector.load %arg6[%c0_128, %c0_129] : memref<1x32xf32, #tpu.memory_space<vmem>>, vector<1x32xf32>
    %94 = vector.broadcast %93 : vector<1x32xf32> to vector<256x32xf32>
    %95 = arith.addf %92, %94 : vector<256x32xf32>
    %96 = arith.negf %95 : vector<256x32xf32>
    %97 = math.exp %96 : vector<256x32xf32>
    %cst_130 = arith.constant 1.000000e+00 : f32
    %98 = vector.broadcast %cst_130 : f32 to vector<256x32xf32>
    %99 = arith.addf %98, %97 : vector<256x32xf32>
    %100 = arith.divf %98, %99 : vector<256x32xf32>
    %101 = arith.mulf %53, %100 : vector<256x32xf32>
    %c0_131 = arith.constant 0 : index
    %c0_132 = arith.constant 0 : index
    %c0_133 = arith.constant 0 : index
    %102 = vector.load %arg1[%c0_131, %c0_132, %c0_133] : memref<1x256x32xf32, #tpu.memory_space<vmem>>, vector<1x256x32xf32>
    %103 = vector.shape_cast %102 : vector<1x256x32xf32> to vector<256x32xf32>
    %104 = arith.addf %101, %103 : vector<256x32xf32>
    %c0_134 = arith.constant 0 : index
    %c0_135 = arith.constant 0 : index
    %c0_136 = arith.constant 0 : index
    %105 = vector.load %arg7[%c0_134, %c0_135, %c0_136] : memref<1x256x32xf32, #tpu.memory_space<vmem>>, vector<1x256x32xf32>
    %106 = vector.shape_cast %105 : vector<1x256x32xf32> to vector<256x32xf32>
    %107 = vector.shape_cast %104 : vector<256x32xf32> to vector<1x256x32xf32>
    tpu.vector_store %arg7[%c0_134, %c0_135, %c0_136], %107 {strides = array<i32>} : memref<1x256x32xf32, #tpu.memory_space<vmem>>, vector<1x256x32xf32>,
    return
  }
  func.func @transform_0(%arg0: i32) -> (i32, i32, i32) {
    %c0_i32 = arith.constant 0 : i32
    %c0_i32_0 = arith.constant 0 : i32
    %c0_i32_1 = arith.constant 0 : i32
    return %arg0, %c0_i32, %c0_i32_0 : i32, i32, i32
  }
  func.func @transform_1(%arg0: i32) -> (i32, i32, i32) {
    %c0_i32 = arith.constant 0 : i32
    %c0_i32_0 = arith.constant 0 : i32
    %c0_i32_1 = arith.constant 0 : i32
    return %arg0, %c0_i32, %c0_i32_0 : i32, i32, i32
  }
  func.func @transform_2(%arg0: i32) -> (i32, i32) {
    %c0_i32 = arith.constant 0 : i32
    %c0_i32_0 = arith.constant 0 : i32
    %c0_i32_1 = arith.constant 0 : i32
    return %c0_i32, %c0_i32_0 : i32, i32
  }
  func.func @transform_3(%arg0: i32) -> (i32, i32) {
    %c0_i32 = arith.constant 0 : i32
    %c0_i32_0 = arith.constant 0 : i32
    %c0_i32_1 = arith.constant 0 : i32
    return %c0_i32, %c0_i32_0 : i32, i32
  }
  func.func @transform_4(%arg0: i32) -> (i32, i32) {
    %c0_i32 = arith.constant 0 : i32
    %c0_i32_0 = arith.constant 0 : i32
    %c0_i32_1 = arith.constant 0 : i32
    return %c0_i32, %c0_i32_0 : i32, i32
  }
  func.func @transform_5(%arg0: i32) -> (i32, i32) {
    %c0_i32 = arith.constant 0 : i32
    %c0_i32_0 = arith.constant 0 : i32
    %c0_i32_1 = arith.constant 0 : i32
    return %c0_i32, %c0_i32_0 : i32, i32
  }
  func.func @transform_6(%arg0: i32) -> (i32, i32, i32) {
    %c0_i32 = arith.constant 0 : i32
    %c0_i32_0 = arith.constant 0 : i32
    %c0_i32_1 = arith.constant 0 : i32
    return %arg0, %c0_i32, %c0_i32_0 : i32, i32, i32
  }
  func.func @transform_7(%arg0: i32) -> (i32, i32, i32) {
    %c0_i32 = arith.constant 0 : i32
    %c0_i32_0 = arith.constant 0 : i32
    %c0_i32_1 = arith.constant 0 : i32
    return %arg0, %c0_i32, %c0_i32_0 : i32, i32, i32
  }
}

</mosaic_0001>

<llo_original>
// kernel: tpu_custom_call.1
$region0: #{tpu_custom_call.1}
  #allocation0 [shape = 'u32[]', space=smem, size = 0x4, offset = 0x4, fixed_abs, tag = 'smem constant byte address 0x4 - core index']
  #allocation1 [shape = 'u32[72,128]{1,0:T(1,128)}', space=vmem, size = 0x9000, scoped, tag = 'internal scratch']
  #allocation2 [shape = 'f32[18,18,32]{2,1,0:T(8,128)}', space=vmem, size = 0x36000, scoped, tag = 'scratch operand']
  #allocation3 [shape = 'f32[18,18,3]{2,1,0:T(8,128)}', space=vmem, size = 0x36000, scoped, tag = 'scratch operand']
  #allocation4 [shape = 'f32[256,288]{1,0:T(8,128)}', space=vmem, size = 0x60000, scoped, tag = 'scratch operand']
  #allocation5 [shape = 'f32[256,27]{1,0:T(8,128)}', space=vmem, size = 0x20000, scoped, tag = 'scratch operand']
  %s0 = inlined_call_operand.vmem [shape: f32[2,256,32], index: 0, kind: input, shape index: {}]
  %s1 = inlined_call_operand.vmem [shape: f32[2,256,3], index: 1, kind: input, shape index: {}]
  %s2 = inlined_call_operand.vmem [shape: f32[288,35], index: 2, kind: input, shape index: {}]
  %s3 = inlined_call_operand.vmem [shape: f32[1,35], index: 3, kind: input, shape index: {}]
  %s4 = inlined_call_operand.vmem [shape: f32[27,32], index: 4, kind: input, shape index: {}]
  %s5 = inlined_call_operand.vmem [shape: f32[1,32], index: 5, kind: input, shape index: {}]
  %s6 = inlined_call_operand.vmem [shape: f32[2,256,32], index: 6, kind: output, shape index: {0}]
  %s7 = inlined_call_operand.vmem [shape: f32[2,256,3], index: 7, kind: output, shape index: {1}]
  %8 = xla_tuple %s6, %s7
  %s9 = sld [smem:[#allocation0]]
  $region65: #{tpu_custom_call.1} parent=0
    _
  %s11 = ssub.s32 1, %s9
  %s12 = scalar_select 0, %s11, %s9
  loop: start=0, step=1, limit=4
  $region2: #{tpu_custom_call.1} parent=0 // loop_pre_header
    _
  $region3: #{tpu_custom_call.1} parent=0 // loop_header
    %s14 = sphi 0, %s18
    %p15 = scmp.ge.s32.totalorder %s14, 4
    %s24 = sphi 0, %s26
    %s27 = sphi 0, %s24
    %s28 = sphi 0, %s27
    %s44 = sphi 0, %s28
    %s50 = sphi 0, %s52
    %s53 = sphi 0, %s50
    %s54 = sphi 0, %s53
    %s70 = sphi 0, %s54
    %s74 = sphi 0, %s74
    %s76 = sphi 0, %s74
    %s77 = sphi 0, %s76
    %s91 = sphi 0, %s77
    %s95 = sphi 0, %s95
    %s97 = sphi 0, %s95
    %s98 = sphi 0, %s97
    %s112 = sphi 0, %s98
    %s116 = sphi 0, %s116
    %s118 = sphi 0, %s116
    %s119 = sphi 0, %s118
    %s133 = sphi 0, %s119
    %s137 = sphi 0, %s137
    %s139 = sphi 0, %s137
    %s140 = sphi 0, %s139
    %s154 = sphi 0, %s140
    %s160 = sphi 0, %s162
    %s163 = sphi 0, %s160
    %s164 = sphi 0, %s163
    %s180 = sphi 0, %s164
    %s186 = sphi 0, %s188
    %s189 = sphi 0, %s186
    %s190 = sphi 0, %s189
    %s206 = sphi 0, %s190
  $region4: #{tpu_custom_call.1} parent=0 // loop_header_branch
    %17 = sbr.rel (%p15) target = $region8
  $region5: #{tpu_custom_call.1} parent=0 // loop_body
    %s19 = ssub.s32 %s14, 1
    %s20 = ssub.s32 %s14, 2
    %s21 = sadd.s32 %s14, 1
    %s22 = ssub.s32 %s14, %s21
    %p23 = scmp.eq.s32.totalorder %s22, 0
    %s25 = sadd.s32 %s24, 1
    %s26 = scalar_select %p23, %s24, %s25
    %p29 = pneg %p23
    %p30 = scmp.eq.s32.totalorder %s14, 1
    %p31 = por %p29, %p30
    %p32 = scmp.ne.s32.totalorder %s24, %s27
    %p33 = scmp.eq.s32.totalorder %s14, 0
    %p34 = por %p32, %p33
    %p35 = scmp.ne.s32.totalorder %s24, %s27
    %p36 = scmp.eq.s32.totalorder %s19, 1
    %p37 = por %p35, %p36
    %p38 = scmp.ne.s32.totalorder %s27, %s28
    %p39 = scmp.eq.s32.totalorder %s19, 0
    %p40 = por %p38, %p39
    %p41 = scmp.ne.s32.totalorder %s27, %s28
    %p42 = scmp.eq.s32.totalorder %s20, 1
    %p43 = por %p41, %p42
    %p45 = scmp.ne.s32.totalorder %s28, %s44
    %p46 = scmp.eq.s32.totalorder %s20, 0
    %p47 = por %p45, %p46
    %s48 = ssub.s32 %s14, %s21
    %p49 = scmp.eq.s32.totalorder %s48, 0
    %s51 = sadd.s32 %s50, 1
    %s52 = scalar_select %p49, %s50, %s51
    %p55 = pneg %p49
    %p56 = scmp.eq.s32.totalorder %s14, 1
    %p57 = por %p55, %p56
    %p58 = scmp.ne.s32.totalorder %s50, %s53
    %p59 = scmp.eq.s32.totalorder %s14, 0
    %p60 = por %p58, %p59
    %p61 = scmp.ne.s32.totalorder %s50, %s53
    %p62 = scmp.eq.s32.totalorder %s19, 1
    %p63 = por %p61, %p62
    %p64 = scmp.ne.s32.totalorder %s53, %s54
    %p65 = scmp.eq.s32.totalorder %s19, 0
    %p66 = por %p64, %p65
    %p67 = scmp.ne.s32.totalorder %s53, %s54
    %p68 = scmp.eq.s32.totalorder %s20, 1
    %p69 = por %p67, %p68
    %p71 = scmp.ne.s32.totalorder %s54, %s70
    %p72 = scmp.eq.s32.totalorder %s20, 0
    %p73 = por %p71, %p72
    %s75 = sadd.s32 %s74, 1
    %p78 = scmp.eq.s32.totalorder %s14, 1
    %p79 = scmp.ne.s32.totalorder %s74, %s76
    %p80 = scmp.eq.s32.totalorder %s14, 0
    %p81 = por %p79, %p80
    %p82 = scmp.ne.s32.totalorder %s74, %s76
    %p83 = scmp.eq.s32.totalorder %s19, 1
    %p84 = por %p82, %p83
    %p85 = scmp.ne.s32.totalorder %s76, %s77
    %p86 = scmp.eq.s32.totalorder %s19, 0
    %p87 = por %p85, %p86
    %p88 = scmp.ne.s32.totalorder %s76, %s77
    %p89 = scmp.eq.s32.totalorder %s20, 1
    %p90 = por %p88, %p89
    %p92 = scmp.ne.s32.totalorder %s77, %s91
    %p93 = scmp.eq.s32.totalorder %s20, 0
    %p94 = por %p92, %p93
    %s96 = sadd.s32 %s95, 1
    %p99 = scmp.eq.s32.totalorder %s14, 1
    %p100 = scmp.ne.s32.totalorder %s95, %s97
    %p101 = scmp.eq.s32.totalorder %s14, 0
    %p102 = por %p100, %p101
    %p103 = scmp.ne.s32.totalorder %s95, %s97
    %p104 = scmp.eq.s32.totalorder %s19, 1
    %p105 = por %p103, %p104
    %p106 = scmp.ne.s32.totalorder %s97, %s98
    %p107 = scmp.eq.s32.totalorder %s19, 0
    %p108 = por %p106, %p107
    %p109 = scmp.ne.s32.totalorder %s97, %s98
    %p110 = scmp.eq.s32.totalorder %s20, 1
    %p111 = por %p109, %p110
    %p113 = scmp.ne.s32.totalorder %s98, %s112
    %p114 = scmp.eq.s32.totalorder %s20, 0
    %p115 = por %p113, %p114
    %s117 = sadd.s32 %s116, 1
    %p120 = scmp.eq.s32.totalorder %s14, 1
    %p121 = scmp.ne.s32.totalorder %s116, %s118
    %p122 = scmp.eq.s32.totalorder %s14, 0
    %p123 = por %p121, %p122
    %p124 = scmp.ne.s32.totalorder %s116, %s118
    %p125 = scmp.eq.s32.totalorder %s19, 1
    %p126 = por %p124, %p125
    %p127 = scmp.ne.s32.totalorder %s118, %s119
    %p128 = scmp.eq.s32.totalorder %s19, 0
    %p129 = por %p127, %p128
    %p130 = scmp.ne.s32.totalorder %s118, %s119
    %p131 = scmp.eq.s32.totalorder %s20, 1
    %p132 = por %p130, %p131
    %p134 = scmp.ne.s32.totalorder %s119, %s133
    %p135 = scmp.eq.s32.totalorder %s20, 0
    %p136 = por %p134, %p135
    %s138 = sadd.s32 %s137, 1
    %p141 = scmp.eq.s32.totalorder %s14, 1
    %p142 = scmp.ne.s32.totalorder %s137, %s139
    %p143 = scmp.eq.s32.totalorder %s14, 0
    %p144 = por %p142, %p143
    %p145 = scmp.ne.s32.totalorder %s137, %s139
    %p146 = scmp.eq.s32.totalorder %s19, 1
    %p147 = por %p145, %p146
    %p148 = scmp.ne.s32.totalorder %s139, %s140
    %p149 = scmp.eq.s32.totalorder %s19, 0
    %p150 = por %p148, %p149
    %p151 = scmp.ne.s32.totalorder %s139, %s140
    %p152 = scmp.eq.s32.totalorder %s20, 1
    %p153 = por %p151, %p152
    %p155 = scmp.ne.s32.totalorder %s140, %s154
    %p156 = scmp.eq.s32.totalorder %s20, 0
    %p157 = por %p155, %p156
    %s158 = ssub.s32 %s14, %s21
    %p159 = scmp.eq.s32.totalorder %s158, 0
    %s161 = sadd.s32 %s160, 1
    %s162 = scalar_select %p159, %s160, %s161
    %p165 = pneg %p159
    %p166 = scmp.eq.s32.totalorder %s14, 1
    %p167 = por %p165, %p166
    %p168 = scmp.ne.s32.totalorder %s160, %s163
    %p169 = scmp.eq.s32.totalorder %s14, 0
    %p170 = por %p168, %p169
    %p171 = scmp.ne.s32.totalorder %s160, %s163
    %p172 = scmp.eq.s32.totalorder %s19, 1
    %p173 = por %p171, %p172
    %p174 = scmp.ne.s32.totalorder %s163, %s164
    %p175 = scmp.eq.s32.totalorder %s19, 0
    %p176 = por %p174, %p175
    %p177 = scmp.ne.s32.totalorder %s163, %s164
    %p178 = scmp.eq.s32.totalorder %s20, 1
    %p179 = por %p177, %p178
    %p181 = scmp.ne.s32.totalorder %s164, %s180
    %p182 = scmp.eq.s32.totalorder %s20, 0
    %p183 = por %p181, %p182
    %s184 = ssub.s32 %s14, %s21
    %p185 = scmp.eq.s32.totalorder %s184, 0
    %s187 = sadd.s32 %s186, 1
    %s188 = scalar_select %p185, %s186, %s187
    %p191 = pneg %p185
    %p192 = scmp.eq.s32.totalorder %s14, 1
    %p193 = por %p191, %p192
    %p194 = scmp.ne.s32.totalorder %s186, %s189
    %p195 = scmp.eq.s32.totalorder %s14, 0
    %p196 = por %p194, %p195
    %p197 = scmp.ne.s32.totalorder %s186, %s189
    %p198 = scmp.eq.s32.totalorder %s19, 1
    %p199 = por %p197, %p198
    %p200 = scmp.ne.s32.totalorder %s189, %s190
    %p201 = scmp.eq.s32.totalorder %s19, 0
    %p202 = por %p200, %p201
    %p203 = scmp.ne.s32.totalorder %s189, %s190
    %p204 = scmp.eq.s32.totalorder %s20, 1
    %p205 = por %p203, %p204
    %p207 = scmp.ne.s32.totalorder %s190, %s206
    %p208 = scmp.eq.s32.totalorder %s20, 0
    %p209 = por %p207, %p208
    %p210 = scmp.le.s32.totalorder 1, %s14
    %p211 = scmp.lt.s32.totalorder %s14, 3
    %p212 = pnand %p210, %p211
    %p213 = pneg %p212
    // Predicated region
    $region9: #{tpu_custom_call.1} parent=5 // pred_check
      _
    $region10: #{tpu_custom_call.1} parent=5 // pred_check_branch
      %215 = sbr.rel (%p212) target = $region12
    $region11: #{tpu_custom_call.1} parent=5 // pred_region
      %s216 = ssub.s32 %s14, 1
      // Predicated region
      $region13: #{tpu_custom_call.1} parent=11 // pred_check
        %p217 = pneg %p87
      $region14: #{tpu_custom_call.1} parent=11 // pred_check_branch
        %219 = sbr.rel (%p217) target = $region16
      $region15: #{tpu_custom_call.1} parent=11 // pred_region
        _
      $region16: #{tpu_custom_call.1} parent=11 // pred_fallthru
        _
      // Predicated region
      $region17: #{tpu_custom_call.1} parent=11 // pred_check
        %p220 = pneg %p108
      $region18: #{tpu_custom_call.1} parent=11 // pred_check_branch
        %222 = sbr.rel (%p220) target = $region20
      $region19: #{tpu_custom_call.1} parent=11 // pred_region
        _
      $region20: #{tpu_custom_call.1} parent=11 // pred_fallthru
        _
      // Predicated region
      $region21: #{tpu_custom_call.1} parent=11 // pred_check
        %p223 = pneg %p129
      $region22: #{tpu_custom_call.1} parent=11 // pred_check_branch
        %225 = sbr.rel (%p223) target = $region24
      $region23: #{tpu_custom_call.1} parent=11 // pred_region
        _
      $region24: #{tpu_custom_call.1} parent=11 // pred_fallthru
        _
      // Predicated region
      $region25: #{tpu_custom_call.1} parent=11 // pred_check
        %p226 = pneg %p150
      $region26: #{tpu_custom_call.1} parent=11 // pred_check_branch
        %228 = sbr.rel (%p226) target = $region28
      $region27: #{tpu_custom_call.1} parent=11 // pred_region
        _
      $region28: #{tpu_custom_call.1} parent=11 // pred_fallthru
        _
    $region12: #{tpu_custom_call.1} parent=5 // pred_fallthru
      _
    %p229 = scmp.lt.s32.totalorder %s14, 2
    // Predicated region
    $region29: #{tpu_custom_call.1} parent=5 // pred_check
      %p230 = pneg %p229
    $region30: #{tpu_custom_call.1} parent=5 // pred_check_branch
      %232 = sbr.rel (%p230) target = $region32
    $region31: #{tpu_custom_call.1} parent=5 // pred_region
      // Predicated region
      $region33: #{tpu_custom_call.1} parent=31 // pred_check
        %p233 = pneg %p34
      $region34: #{tpu_custom_call.1} parent=31 // pred_check_branch
        %235 = sbr.rel (%p233) target = $region36
      $region35: #{tpu_custom_call.1} parent=31 // pred_region
        %p236 = scmp.lt.s32.totalorder %s14, 1
        %s237 = scalar_select %p236, %s14, 1
        %s238 = smul.addr %s237, 32
        %s239 = smul.addr %s238, 8
        %s240 = scalar_lea.vmem %s0, %s239
      $region36: #{tpu_custom_call.1} parent=31 // pred_fallthru
        _
      // Predicated region
      $region37: #{tpu_custom_call.1} parent=31 // pred_check
        %p241 = pneg %p60
      $region38: #{tpu_custom_call.1} parent=31 // pred_check_branch
        %243 = sbr.rel (%p241) target = $region40
      $region39: #{tpu_custom_call.1} parent=31 // pred_region
        %p244 = scmp.lt.s32.totalorder %s14, 1
        %s245 = scalar_select %p244, %s14, 1
        %s246 = smul.addr %s245, 32
        %s247 = smul.addr %s246, 8
        %s248 = scalar_lea.vmem %s1, %s247
      $region40: #{tpu_custom_call.1} parent=31 // pred_fallthru
        _
    $region32: #{tpu_custom_call.1} parent=5 // pred_fallthru
      _
    %p249 = scmp.le.s32.totalorder 1, %s14
    %p250 = scmp.lt.s32.totalorder %s14, 3
    %p251 = pnand %p249, %p250
    %p252 = pneg %p251
    // Predicated region
    $region41: #{tpu_custom_call.1} parent=5 // pred_check
      _
    $region42: #{tpu_custom_call.1} parent=5 // pred_check_branch
      %254 = sbr.rel (%p251) target = $region44
    $region43: #{tpu_custom_call.1} parent=5 // pred_region
      %s255 = ssub.s32 %s14, 1
      %p256 = scmp.lt.s32.totalorder %s19, 1
      %s257 = scalar_select %p256, %s19, 1
      %s258 = smul.addr %s257, 32
      %s259 = smul.addr %s258, 8
      %s260 = scalar_lea.vmem %s0, %s259
      %p261 = pneg %p40
      %p262 = pneg %p37
      %p263 = scmp.lt.s32.totalorder %s19, 1
      %s264 = scalar_select %p263, %s19, 1
      %s265 = smul.addr %s264, 32
      %s266 = smul.addr %s265, 8
      %s267 = scalar_lea.vmem %s1, %s266
      %p268 = pneg %p66
      %p269 = pneg %p63
      %p270 = pneg %p87
      %p271 = pneg %p84
      %p272 = pneg %p108
      %p273 = pneg %p105
      %p274 = pneg %p129
      %p275 = pneg %p126
      %p276 = pneg %p150
      %p277 = pneg %p147
      %p278 = pneg %p176
      %p279 = pneg %p173
      %p280 = scmp.lt.s32.totalorder %s19, 1
      %s281 = scalar_select %p280, %s19, 1
      %s282 = smul.addr %s281, 32
      %s283 = smul.addr %s282, 8
      %s284 = scalar_lea.vmem %s6, %s283
      %p285 = pneg %p202
      %p286 = pneg %p199
      %p287 = scmp.lt.s32.totalorder %s19, 1
      %s288 = scalar_select %p287, %s19, 1
      %s289 = smul.addr %s288, 32
      %s290 = smul.addr %s289, 8
      %s291 = scalar_lea.vmem %s7, %s290
      %p292 = scmp.lt.s32.totalorder %s19, 1
      %s293 = scalar_select %p292, %s19, 1
      %s294 = smul.addr %s293, 32
      %s295 = smul.addr %s294, 8
      %s296 = scalar_lea.vmem %s0, %s295
      %p297 = scmp.lt.s32.totalorder %s19, 1
      %s298 = scalar_select %p297, %s19, 1
      %s299 = smul.addr %s298, 32
      %s300 = smul.addr %s299, 8
      %s301 = scalar_lea.vmem %s1, %s300
      %p302 = scmp.lt.s32.totalorder %s19, 1
      %s303 = scalar_select %p302, %s19, 1
      %s304 = smul.addr %s303, 32
      %s305 = smul.addr %s304, 8
      %s306 = scalar_lea.vmem %s6, %s305
      %p307 = scmp.lt.s32.totalorder %s19, 1
      %s308 = scalar_select %p307, %s19, 1
      %s309 = smul.addr %s308, 32
      %s310 = smul.addr %s309, 8
      %s311 = scalar_lea.vmem %s7, %s310
      %vm312 = vcmask 261120
      %313 = vst.msk [vmem:[#allocation2] sm:$0xff] %vm312, 0.0
      %314 = vst.msk [vmem:[#allocation2 + $0x8] sm:$0xff] %vm312, 0.0
      %vm315 = vcmask 254976
      %316 = vst.msk [vmem:[#allocation2 + $0x10] sm:$0x3] %vm315, 0.0
      %s317 = scalar_lea.vmem [#allocation2], 408
      %318 = vst.msk [vmem:[%s317] sm:$0xff] %vm312, 0.0
      %319 = vst.msk [vmem:[%s317 + $0x8] sm:$0xff] %vm312, 0.0
      %320 = vst.msk [vmem:[%s317 + $0x10] sm:$0x3] %vm315, 0.0
      %s321 = scalar_lea.vmem [#allocation2], 24
      %vm322 = vcmask 253952
      %323 = vst.msk [vmem:[%s321] sm:$0x1] %vm322, 0.0
      %324 = vst.msk [vmem:[%s321 + $0x18] sm:$0x1] %vm322, 0.0
      %325 = vst.msk [vmem:[%s321 + $0x30] sm:$0x1] %vm322, 0.0
      %326 = vst.msk [vmem:[%s321 + $0x48] sm:$0x1] %vm322, 0.0
      %327 = vst.msk [vmem:[%s321 + $0x60] sm:$0x1] %vm322, 0.0
      %328 = vst.msk [vmem:[%s321 + $0x78] sm:$0x1] %vm322, 0.0
      %329 = vst.msk [vmem:[%s321 + $0x90] sm:$0x1] %vm322, 0.0
      %330 = vst.msk [vmem:[%s321 + $0xa8] sm:$0x1] %vm322, 0.0
      %331 = vst.msk [vmem:[%s321 + $0xc0] sm:$0x1] %vm322, 0.0
      %332 = vst.msk [vmem:[%s321 + $0xd8] sm:$0x1] %vm322, 0.0
      %333 = vst.msk [vmem:[%s321 + $0xf0] sm:$0x1] %vm322, 0.0
      %334 = vst.msk [vmem:[%s321 + $0x108] sm:$0x1] %vm322, 0.0
      %335 = vst.msk [vmem:[%s321 + $0x120] sm:$0x1] %vm322, 0.0
      %336 = vst.msk [vmem:[%s321 + $0x138] sm:$0x1] %vm322, 0.0
      %337 = vst.msk [vmem:[%s321 + $0x150] sm:$0x1] %vm322, 0.0
      %338 = vst.msk [vmem:[%s321 + $0x168] sm:$0x1] %vm322, 0.0
      %339 = vst.msk [vmem:[%s321 + $0x11] sm:$0x1] %vm322, 0.0
      %340 = vst.msk [vmem:[%s321 + $0x29] sm:$0x1] %vm322, 0.0
      %341 = vst.msk [vmem:[%s321 + $0x41] sm:$0x1] %vm322, 0.0
      %342 = vst.msk [vmem:[%s321 + $0x59] sm:$0x1] %vm322, 0.0
      %343 = vst.msk [vmem:[%s321 + $0x71] sm:$0x1] %vm322, 0.0
      %344 = vst.msk [vmem:[%s321 + $0x89] sm:$0x1] %vm322, 0.0
      %345 = vst.msk [vmem:[%s321 + $0xa1] sm:$0x1] %vm322, 0.0
      %346 = vst.msk [vmem:[%s321 + $0xb9] sm:$0x1] %vm322, 0.0
      %347 = vst.msk [vmem:[%s321 + $0xd1] sm:$0x1] %vm322, 0.0
      %348 = vst.msk [vmem:[%s321 + $0xe9] sm:$0x1] %vm322, 0.0
      %349 = vst.msk [vmem:[%s321 + $0x101] sm:$0x1] %vm322, 0.0
      %350 = vst.msk [vmem:[%s321 + $0x119] sm:$0x1] %vm322, 0.0
      %351 = vst.msk [vmem:[%s321 + $0x131] sm:$0x1] %vm322, 0.0
      %352 = vst.msk [vmem:[%s321 + $0x149] sm:$0x1] %vm322, 0.0
      %353 = vst.msk [vmem:[%s321 + $0x161] sm:$0x1] %vm322, 0.0
      %354 = vst.msk [vmem:[%s321 + $0x179] sm:$0x1] %vm322, 0.0
      %vm355 = vcmask 23552
      %356 = vst.msk [vmem:[#allocation3] sm:$0xff] %vm355, 0.0
      %357 = vst.msk [vmem:[#allocation3 + $0x8] sm:$0xff] %vm355, 0.0
      %vm358 = vcmask 17408
      %359 = vst.msk [vmem:[#allocation3 + $0x10] sm:$0x3] %vm358, 0.0
      %s360 = scalar_lea.vmem [#allocation3], 408
      %361 = vst.msk [vmem:[%s360] sm:$0xff] %vm355, 0.0
      %362 = vst.msk [vmem:[%s360 + $0x8] sm:$0xff] %vm355, 0.0
      %363 = vst.msk [vmem:[%s360 + $0x10] sm:$0x3] %vm358, 0.0
      %s364 = scalar_lea.vmem [#allocation3], 24
      %vm365 = vcmask 16384
      %366 = vst.msk [vmem:[%s364] sm:$0x1] %vm365, 0.0
      %367 = vst.msk [vmem:[%s364 + $0x18] sm:$0x1] %vm365, 0.0
      %368 = vst.msk [vmem:[%s364 + $0x30] sm:$0x1] %vm365, 0.0
      %369 = vst.msk [vmem:[%s364 + $0x48] sm:$0x1] %vm365, 0.0
      %370 = vst.msk [vmem:[%s364 + $0x60] sm:$0x1] %vm365, 0.0
      %371 = vst.msk [vmem:[%s364 + $0x78] sm:$0x1] %vm365, 0.0
      %372 = vst.msk [vmem:[%s364 + $0x90] sm:$0x1] %vm365, 0.0
      %373 = vst.msk [vmem:[%s364 + $0xa8] sm:$0x1] %vm365, 0.0
      %374 = vst.msk [vmem:[%s364 + $0xc0] sm:$0x1] %vm365, 0.0
      %375 = vst.msk [vmem:[%s364 + $0xd8] sm:$0x1] %vm365, 0.0
      %376 = vst.msk [vmem:[%s364 + $0xf0] sm:$0x1] %vm365, 0.0
      %377 = vst.msk [vmem:[%s364 + $0x108] sm:$0x1] %vm365, 0.0
      %378 = vst.msk [vmem:[%s364 + $0x120] sm:$0x1] %vm365, 0.0
      %379 = vst.msk [vmem:[%s364 + $0x138] sm:$0x1] %vm365, 0.0
      %380 = vst.msk [vmem:[%s364 + $0x150] sm:$0x1] %vm365, 0.0
      %381 = vst.msk [vmem:[%s364 + $0x168] sm:$0x1] %vm365, 0.0
      %382 = vst.msk [vmem:[%s364 + $0x11] sm:$0x1] %vm365, 0.0
      %383 = vst.msk [vmem:[%s364 + $0x29] sm:$0x1] %vm365, 0.0
      %384 = vst.msk [vmem:[%s364 + $0x41] sm:$0x1] %vm365, 0.0
      %385 = vst.msk [vmem:[%s364 + $0x59] sm:$0x1] %vm365, 0.0
      %386 = vst.msk [vmem:[%s364 + $0x71] sm:$0x1] %vm365, 0.0
      %387 = vst.msk [vmem:[%s364 + $0x89] sm:$0x1] %vm365, 0.0
      %388 = vst.msk [vmem:[%s364 + $0xa1] sm:$0x1] %vm365, 0.0
      %389 = vst.msk [vmem:[%s364 + $0xb9] sm:$0x1] %vm365, 0.0
      %390 = vst.msk [vmem:[%s364 + $0xd1] sm:$0x1] %vm365, 0.0
      %391 = vst.msk [vmem:[%s364 + $0xe9] sm:$0x1] %vm365, 0.0
      %392 = vst.msk [vmem:[%s364 + $0x101] sm:$0x1] %vm365, 0.0
      %393 = vst.msk [vmem:[%s364 + $0x119] sm:$0x1] %vm365, 0.0
      %394 = vst.msk [vmem:[%s364 + $0x131] sm:$0x1] %vm365, 0.0
      %395 = vst.msk [vmem:[%s364 + $0x149] sm:$0x1] %vm365, 0.0
      %396 = vst.msk [vmem:[%s364 + $0x161] sm:$0x1] %vm365, 0.0
      %397 = vst.msk [vmem:[%s364 + $0x179] sm:$0x1] %vm365, 0.0
      %v398 = vld [vmem:[%s296] sm:$0xff]
      %v399 = vld [vmem:[%s296 + $0x8] sm:$0xff]
      %v400 = vld [vmem:[%s296 + $0x10] sm:$0xff]
      %v401 = vld [vmem:[%s296 + $0x18] sm:$0xff]
      %v402 = vld [vmem:[%s296 + $0x20] sm:$0xff]
      %v403 = vld [vmem:[%s296 + $0x28] sm:$0xff]
      %v404 = vld [vmem:[%s296 + $0x30] sm:$0xff]
      %v405 = vld [vmem:[%s296 + $0x38] sm:$0xff]
      %v406 = vld [vmem:[%s296 + $0x40] sm:$0xff]
      %v407 = vld [vmem:[%s296 + $0x48] sm:$0xff]
      %v408 = vld [vmem:[%s296 + $0x50] sm:$0xff]
      %v409 = vld [vmem:[%s296 + $0x58] sm:$0xff]
      %v410 = vld [vmem:[%s296 + $0x60] sm:$0xff]
      %v411 = vld [vmem:[%s296 + $0x68] sm:$0xff]
      %v412 = vld [vmem:[%s296 + $0x70] sm:$0xff]
      %v413 = vld [vmem:[%s296 + $0x78] sm:$0xff]
      %v414 = vld [vmem:[%s296 + $0x80] sm:$0xff]
      %v415 = vld [vmem:[%s296 + $0x88] sm:$0xff]
      %v416 = vld [vmem:[%s296 + $0x90] sm:$0xff]
      %v417 = vld [vmem:[%s296 + $0x98] sm:$0xff]
      %v418 = vld [vmem:[%s296 + $0xa0] sm:$0xff]
      %v419 = vld [vmem:[%s296 + $0xa8] sm:$0xff]
      %v420 = vld [vmem:[%s296 + $0xb0] sm:$0xff]
      %v421 = vld [vmem:[%s296 + $0xb8] sm:$0xff]
      %v422 = vld [vmem:[%s296 + $0xc0] sm:$0xff]
      %v423 = vld [vmem:[%s296 + $0xc8] sm:$0xff]
      %v424 = vld [vmem:[%s296 + $0xd0] sm:$0xff]
      %v425 = vld [vmem:[%s296 + $0xd8] sm:$0xff]
      %v426 = vld [vmem:[%s296 + $0xe0] sm:$0xff]
      %v427 = vld [vmem:[%s296 + $0xe8] sm:$0xff]
      %v428 = vld [vmem:[%s296 + $0xf0] sm:$0xff]
      %v429 = vld [vmem:[%s296 + $0xf8] sm:$0xff]
      %430 = vst.msk [vmem:[%s321 + $0x1] sm:$0xff] %vm312, %v398
      %431 = vst.msk [vmem:[%s321 + $0x9] sm:$0xff] %vm312, %v399
      %432 = vst.msk [vmem:[%s321 + $0x19] sm:$0xff] %vm312, %v400
      %433 = vst.msk [vmem:[%s321 + $0x21] sm:$0xff] %vm312, %v401
      %434 = vst.msk [vmem:[%s321 + $0x31] sm:$0xff] %vm312, %v402
      %435 = vst.msk [vmem:[%s321 + $0x39] sm:$0xff] %vm312, %v403
      %436 = vst.msk [vmem:[%s321 + $0x49] sm:$0xff] %vm312, %v404
      %437 = vst.msk [vmem:[%s321 + $0x51] sm:$0xff] %vm312, %v405
      %438 = vst.msk [vmem:[%s321 + $0x61] sm:$0xff] %vm312, %v406
      %439 = vst.msk [vmem:[%s321 + $0x69] sm:$0xff] %vm312, %v407
      %440 = vst.msk [vmem:[%s321 + $0x79] sm:$0xff] %vm312, %v408
      %441 = vst.msk [vmem:[%s321 + $0x81] sm:$0xff] %vm312, %v409
      %442 = vst.msk [vmem:[%s321 + $0x91] sm:$0xff] %vm312, %v410
      %443 = vst.msk [vmem:[%s321 + $0x99] sm:$0xff] %vm312, %v411
      %444 = vst.msk [vmem:[%s321 + $0xa9] sm:$0xff] %vm312, %v412
      %445 = vst.msk [vmem:[%s321 + $0xb1] sm:$0xff] %vm312, %v413
      %446 = vst.msk [vmem:[%s321 + $0xc1] sm:$0xff] %vm312, %v414
      %447 = vst.msk [vmem:[%s321 + $0xc9] sm:$0xff] %vm312, %v415
      %448 = vst.msk [vmem:[%s321 + $0xd9] sm:$0xff] %vm312, %v416
      %449 = vst.msk [vmem:[%s321 + $0xe1] sm:$0xff] %vm312, %v417
      %450 = vst.msk [vmem:[%s321 + $0xf1] sm:$0xff] %vm312, %v418
      %451 = vst.msk [vmem:[%s321 + $0xf9] sm:$0xff] %vm312, %v419
      %452 = vst.msk [vmem:[%s321 + $0x109] sm:$0xff] %vm312, %v420
      %453 = vst.msk [vmem:[%s321 + $0x111] sm:$0xff] %vm312, %v421
      %454 = vst.msk [vmem:[%s321 + $0x121] sm:$0xff] %vm312, %v422
      %455 = vst.msk [vmem:[%s321 + $0x129] sm:$0xff] %vm312, %v423
      %456 = vst.msk [vmem:[%s321 + $0x139] sm:$0xff] %vm312, %v424
      %457 = vst.msk [vmem:[%s321 + $0x141] sm:$0xff] %vm312, %v425
      %458 = vst.msk [vmem:[%s321 + $0x151] sm:$0xff] %vm312, %v426
      %459 = vst.msk [vmem:[%s321 + $0x159] sm:$0xff] %vm312, %v427
      %460 = vst.msk [vmem:[%s321 + $0x169] sm:$0xff] %vm312, %v428
      %461 = vst.msk [vmem:[%s321 + $0x171] sm:$0xff] %vm312, %v429
      %v462 = vld [vmem:[#allocation2] sm:$0xff]
      %v463 = vld [vmem:[#allocation2 + $0x8] sm:$0xff]
      %v464 = vld [vmem:[#allocation2 + $0x18] sm:$0xff]
      %v465 = vld [vmem:[#allocation2 + $0x20] sm:$0xff]
      %v466 = vld [vmem:[#allocation2 + $0x30] sm:$0xff]
      %v467 = vld [vmem:[#allocation2 + $0x38] sm:$0xff]
      %v468 = vld [vmem:[#allocation2 + $0x48] sm:$0xff]
      %v469 = vld [vmem:[#allocation2 + $0x50] sm:$0xff]
      %v470 = vld [vmem:[#allocation2 + $0x60] sm:$0xff]
      %v471 = vld [vmem:[#allocation2 + $0x68] sm:$0xff]
      %v472 = vld [vmem:[#allocation2 + $0x78] sm:$0xff]
      %v473 = vld [vmem:[#allocation2 + $0x80] sm:$0xff]
      %v474 = vld [vmem:[#allocation2 + $0x90] sm:$0xff]
      %v475 = vld [vmem:[#allocation2 + $0x98] sm:$0xff]
      %v476 = vld [vmem:[#allocation2 + $0xa8] sm:$0xff]
      %v477 = vld [vmem:[#allocation2 + $0xb0] sm:$0xff]
      %v478 = vld [vmem:[#allocation2 + $0xc0] sm:$0xff]
      %v479 = vld [vmem:[#allocation2 + $0xc8] sm:$0xff]
      %v480 = vld [vmem:[#allocation2 + $0xd8] sm:$0xff]
      %v481 = vld [vmem:[#allocation2 + $0xe0] sm:$0xff]
      %v482 = vld [vmem:[#allocation2 + $0xf0] sm:$0xff]
      %v483 = vld [vmem:[#allocation2 + $0xf8] sm:$0xff]
      %v484 = vld [vmem:[#allocation2 + $0x108] sm:$0xff]
      %v485 = vld [vmem:[#allocation2 + $0x110] sm:$0xff]
      %v486 = vld [vmem:[#allocation2 + $0x120] sm:$0xff]
      %v487 = vld [vmem:[#allocation2 + $0x128] sm:$0xff]
      %v488 = vld [vmem:[#allocation2 + $0x138] sm:$0xff]
      %v489 = vld [vmem:[#allocation2 + $0x140] sm:$0xff]
      %v490 = vld [vmem:[#allocation2 + $0x150] sm:$0xff]
      %v491 = vld [vmem:[#allocation2 + $0x158] sm:$0xff]
      %v492 = vld [vmem:[#allocation2 + $0x168] sm:$0xff]
      %v493 = vld [vmem:[#allocation2 + $0x170] sm:$0xff]
      %494 = vst.msk [vmem:[#allocation4] sm:$0xff] %vm312, %v462
      %495 = vst.msk [vmem:[#allocation4 + $0x18] sm:$0xff] %vm312, %v463
      %496 = vst.msk [vmem:[#allocation4 + $0x30] sm:$0xff] %vm312, %v464
      %497 = vst.msk [vmem:[#allocation4 + $0x48] sm:$0xff] %vm312, %v465
      %498 = vst.msk [vmem:[#allocation4 + $0x60] sm:$0xff] %vm312, %v466
      %499 = vst.msk [vmem:[#allocation4 + $0x78] sm:$0xff] %vm312, %v467
      %500 = vst.msk [vmem:[#allocation4 + $0x90] sm:$0xff] %vm312, %v468
      %501 = vst.msk [vmem:[#allocation4 + $0xa8] sm:$0xff] %vm312, %v469
      %502 = vst.msk [vmem:[#allocation4 + $0xc0] sm:$0xff] %vm312, %v470
      %503 = vst.msk [vmem:[#allocation4 + $0xd8] sm:$0xff] %vm312, %v471
      %504 = vst.msk [vmem:[#allocation4 + $0xf0] sm:$0xff] %vm312, %v472
      %505 = vst.msk [vmem:[#allocation4 + $0x108] sm:$0xff] %vm312, %v473
      %506 = vst.msk [vmem:[#allocation4 + $0x120] sm:$0xff] %vm312, %v474
      %507 = vst.msk [vmem:[#allocation4 + $0x138] sm:$0xff] %vm312, %v475
      %508 = vst.msk [vmem:[#allocation4 + $0x150] sm:$0xff] %vm312, %v476
      %509 = vst.msk [vmem:[#allocation4 + $0x168] sm:$0xff] %vm312, %v477
      %510 = vst.msk [vmem:[#allocation4 + $0x180] sm:$0xff] %vm312, %v478
      %511 = vst.msk [vmem:[#allocation4 + $0x198] sm:$0xff] %vm312, %v479
      %512 = vst.msk [vmem:[#allocation4 + $0x1b0] sm:$0xff] %vm312, %v480
      %513 = vst.msk [vmem:[#allocation4 + $0x1c8] sm:$0xff] %vm312, %v481
      %514 = vst.msk [vmem:[#allocation4 + $0x1e0] sm:$0xff] %vm312, %v482
      %515 = vst.msk [vmem:[#allocation4 + $0x1f8] sm:$0xff] %vm312, %v483
      %516 = vst.msk [vmem:[#allocation4 + $0x210] sm:$0xff] %vm312, %v484
      %517 = vst.msk [vmem:[#allocation4 + $0x228] sm:$0xff] %vm312, %v485
      %518 = vst.msk [vmem:[#allocation4 + $0x240] sm:$0xff] %vm312, %v486
      %519 = vst.msk [vmem:[#allocation4 + $0x258] sm:$0xff] %vm312, %v487
      %520 = vst.msk [vmem:[#allocation4 + $0x270] sm:$0xff] %vm312, %v488
      %521 = vst.msk [vmem:[#allocation4 + $0x288] sm:$0xff] %vm312, %v489
      %522 = vst.msk [vmem:[#allocation4 + $0x2a0] sm:$0xff] %vm312, %v490
      %523 = vst.msk [vmem:[#allocation4 + $0x2b8] sm:$0xff] %vm312, %v491
      %524 = vst.msk [vmem:[#allocation4 + $0x2d0] sm:$0xff] %vm312, %v492
      %525 = vst.msk [vmem:[#allocation4 + $0x2e8] sm:$0xff] %vm312, %v493
      %v526 = vld [vmem:[#allocation2 + $0x1] sm:$0xff]
      %v527 = vld [vmem:[#allocation2 + $0x9] sm:$0xff]
      %v528 = vld [vmem:[#allocation2 + $0x19] sm:$0xff]
      %v529 = vld [vmem:[#allocation2 + $0x21] sm:$0xff]
      %v530 = vld [vmem:[#allocation2 + $0x31] sm:$0xff]
      %v531 = vld [vmem:[#allocation2 + $0x39] sm:$0xff]
      %v532 = vld [vmem:[#allocation2 + $0x49] sm:$0xff]
      %v533 = vld [vmem:[#allocation2 + $0x51] sm:$0xff]
      %v534 = vld [vmem:[#allocation2 + $0x61] sm:$0xff]
      %v535 = vld [vmem:[#allocation2 + $0x69] sm:$0xff]
      %v536 = vld [vmem:[#allocation2 + $0x79] sm:$0xff]
      %v537 = vld [vmem:[#allocation2 + $0x81] sm:$0xff]
      %v538 = vld [vmem:[#allocation2 + $0x91] sm:$0xff]
      %v539 = vld [vmem:[#allocation2 + $0x99] sm:$0xff]
      %v540 = vld [vmem:[#allocation2 + $0xa9] sm:$0xff]
      %v541 = vld [vmem:[#allocation2 + $0xb1] sm:$0xff]
      %v542 = vld [vmem:[#allocation2 + $0xc1] sm:$0xff]
      %v543 = vld [vmem:[#allocation2 + $0xc9] sm:$0xff]
      %v544 = vld [vmem:[#allocation2 + $0xd9] sm:$0xff]
      %v545 = vld [vmem:[#allocation2 + $0xe1] sm:$0xff]
      %v546 = vld [vmem:[#allocation2 + $0xf1] sm:$0xff]
      %v547 = vld [vmem:[#allocation2 + $0xf9] sm:$0xff]
      %v548 = vld [vmem:[#allocation2 + $0x109] sm:$0xff]
      %v549 = vld [vmem:[#allocation2 + $0x111] sm:$0xff]
      %v550 = vld [vmem:[#allocation2 + $0x121] sm:$0xff]
      %v551 = vld [vmem:[#allocation2 + $0x129] sm:$0xff]
      %v552 = vld [vmem:[#allocation2 + $0x139] sm:$0xff]
      %v553 = vld [vmem:[#allocation2 + $0x141] sm:$0xff]
      %v554 = vld [vmem:[#allocation2 + $0x151] sm:$0xff]
      %v555 = vld [vmem:[#allocation2 + $0x159] sm:$0xff]
      %v556 = vld [vmem:[#allocation2 + $0x169] sm:$0xff]
      %v557 = vld [vmem:[#allocation2 + $0x171] sm:$0xff]
      %590 = vrot.lane.b32.xlu0 %v526, 32
      %v591 = vpop.permute.xlu0 %590
      %592 = vrot.lane.b32.xlu0 %v527, 32
      %v593 = vpop.permute.xlu0 %592
      %594 = vrot.lane.b32.xlu0 %v528, 32
      %v595 = vpop.permute.xlu0 %594
      %596 = vrot.lane.b32.xlu0 %v529, 32
      %v597 = vpop.permute.xlu0 %596
      %598 = vrot.lane.b32.xlu0 %v530, 32
      %v599 = vpop.permute.xlu0 %598
      %600 = vrot.lane.b32.xlu0 %v531, 32
      %v601 = vpop.permute.xlu0 %600
      %602 = vrot.lane.b32.xlu0 %v532, 32
      %v603 = vpop.permute.xlu0 %602
      %604 = vrot.lane.b32.xlu0 %v533, 32
      %v605 = vpop.permute.xlu0 %604
      %606 = vrot.lane.b32.xlu0 %v534, 32
      %v607 = vpop.permute.xlu0 %606
      %608 = vrot.lane.b32.xlu0 %v535, 32
      %v609 = vpop.permute.xlu0 %608
      %610 = vrot.lane.b32.xlu0 %v536, 32
      %v611 = vpop.permute.xlu0 %610
      %612 = vrot.lane.b32.xlu0 %v537, 32
      %v613 = vpop.permute.xlu0 %612
      %614 = vrot.lane.b32.xlu0 %v538, 32
      %v615 = vpop.permute.xlu0 %614
      %616 = vrot.lane.b32.xlu0 %v539, 32
      %v617 = vpop.permute.xlu0 %616
      %618 = vrot.lane.b32.xlu0 %v540, 32
      %v619 = vpop.permute.xlu0 %618
      %620 = vrot.lane.b32.xlu0 %v541, 32
      %v621 = vpop.permute.xlu0 %620
      %622 = vrot.lane.b32.xlu0 %v542, 32
      %v623 = vpop.permute.xlu0 %622
      %624 = vrot.lane.b32.xlu0 %v543, 32
      %v625 = vpop.permute.xlu0 %624
      %626 = vrot.lane.b32.xlu0 %v544, 32
      %v627 = vpop.permute.xlu0 %626
      %628 = vrot.lane.b32.xlu0 %v545, 32
      %v629 = vpop.permute.xlu0 %628
      %630 = vrot.lane.b32.xlu0 %v546, 32
      %v631 = vpop.permute.xlu0 %630
      %632 = vrot.lane.b32.xlu0 %v547, 32
      %v633 = vpop.permute.xlu0 %632
      %634 = vrot.lane.b32.xlu0 %v548, 32
      %v635 = vpop.permute.xlu0 %634
      %636 = vrot.lane.b32.xlu0 %v549, 32
      %v637 = vpop.permute.xlu0 %636
      %638 = vrot.lane.b32.xlu0 %v550, 32
      %v639 = vpop.permute.xlu0 %638
      %640 = vrot.lane.b32.xlu0 %v551, 32
      %v641 = vpop.permute.xlu0 %640
      %642 = vrot.lane.b32.xlu0 %v552, 32
      %v643 = vpop.permute.xlu0 %642
      %644 = vrot.lane.b32.xlu0 %v553, 32
      %v645 = vpop.permute.xlu0 %644
      %646 = vrot.lane.b32.xlu0 %v554, 32
      %v647 = vpop.permute.xlu0 %646
      %648 = vrot.lane.b32.xlu0 %v555, 32
      %v649 = vpop.permute.xlu0 %648
      %650 = vrot.lane.b32.xlu0 %v556, 32
      %v651 = vpop.permute.xlu0 %650
      %652 = vrot.lane.b32.xlu0 %v557, 32
      %v653 = vpop.permute.xlu0 %652
      %vm686 = vcmask 523520
      %687 = vst.msk [vmem:[#allocation4] sm:$0xff] %vm686, %v591
      %688 = vst.msk [vmem:[#allocation4 + $0x18] sm:$0xff] %vm686, %v593
      %689 = vst.msk [vmem:[#allocation4 + $0x30] sm:$0xff] %vm686, %v595
      %690 = vst.msk [vmem:[#allocation4 + $0x48] sm:$0xff] %vm686, %v597
      %691 = vst.msk [vmem:[#allocation4 + $0x60] sm:$0xff] %vm686, %v599
      %692 = vst.msk [vmem:[#allocation4 + $0x78] sm:$0xff] %vm686, %v601
      %693 = vst.msk [vmem:[#allocation4 + $0x90] sm:$0xff] %vm686, %v603
      %694 = vst.msk [vmem:[#allocation4 + $0xa8] sm:$0xff] %vm686, %v605
      %695 = vst.msk [vmem:[#allocation4 + $0xc0] sm:$0xff] %vm686, %v607
      %696 = vst.msk [vmem:[#allocation4 + $0xd8] sm:$0xff] %vm686, %v609
      %697 = vst.msk [vmem:[#allocation4 + $0xf0] sm:$0xff] %vm686, %v611
      %698 = vst.msk [vmem:[#allocation4 + $0x108] sm:$0xff] %vm686, %v613
      %699 = vst.msk [vmem:[#allocation4 + $0x120] sm:$0xff] %vm686, %v615
      %700 = vst.msk [vmem:[#allocation4 + $0x138] sm:$0xff] %vm686, %v617
      %701 = vst.msk [vmem:[#allocation4 + $0x150] sm:$0xff] %vm686, %v619
      %702 = vst.msk [vmem:[#allocation4 + $0x168] sm:$0xff] %vm686, %v621
      %703 = vst.msk [vmem:[#allocation4 + $0x180] sm:$0xff] %vm686, %v623
      %704 = vst.msk [vmem:[#allocation4 + $0x198] sm:$0xff] %vm686, %v625
      %705 = vst.msk [vmem:[#allocation4 + $0x1b0] sm:$0xff] %vm686, %v627
      %706 = vst.msk [vmem:[#allocation4 + $0x1c8] sm:$0xff] %vm686, %v629
      %707 = vst.msk [vmem:[#allocation4 + $0x1e0] sm:$0xff] %vm686, %v631
      %708 = vst.msk [vmem:[#allocation4 + $0x1f8] sm:$0xff] %vm686, %v633
      %709 = vst.msk [vmem:[#allocation4 + $0x210] sm:$0xff] %vm686, %v635
      %710 = vst.msk [vmem:[#allocation4 + $0x228] sm:$0xff] %vm686, %v637
      %711 = vst.msk [vmem:[#allocation4 + $0x240] sm:$0xff] %vm686, %v639
      %712 = vst.msk [vmem:[#allocation4 + $0x258] sm:$0xff] %vm686, %v641
      %713 = vst.msk [vmem:[#allocation4 + $0x270] sm:$0xff] %vm686, %v643
      %714 = vst.msk [vmem:[#allocation4 + $0x288] sm:$0xff] %vm686, %v645
      %715 = vst.msk [vmem:[#allocation4 + $0x2a0] sm:$0xff] %vm686, %v647
      %716 = vst.msk [vmem:[#allocation4 + $0x2b8] sm:$0xff] %vm686, %v649
      %717 = vst.msk [vmem:[#allocation4 + $0x2d0] sm:$0xff] %vm686, %v651
      %718 = vst.msk [vmem:[#allocation4 + $0x2e8] sm:$0xff] %vm686, %v653
      %v719 = vld [vmem:[#allocation2 + $0x2] sm:$0xff]
      %v720 = vld [vmem:[#allocation2 + $0xa] sm:$0xff]
      %v721 = vld [vmem:[#allocation2 + $0x1a] sm:$0xff]
      %v722 = vld [vmem:[#allocation2 + $0x22] sm:$0xff]
      %v723 = vld [vmem:[#allocation2 + $0x32] sm:$0xff]
      %v724 = vld [vmem:[#allocation2 + $0x3a] sm:$0xff]
      %v725 = vld [vmem:[#allocation2 + $0x4a] sm:$0xff]
      %v726 = vld [vmem:[#allocation2 + $0x52] sm:$0xff]
      %v727 = vld [vmem:[#allocation2 + $0x62] sm:$0xff]
      %v728 = vld [vmem:[#allocation2 + $0x6a] sm:$0xff]
      %v729 = vld [vmem:[#allocation2 + $0x7a] sm:$0xff]
      %v730 = vld [vmem:[#allocation2 + $0x82] sm:$0xff]
      %v731 = vld [vmem:[#allocation2 + $0x92] sm:$0xff]
      %v732 = vld [vmem:[#allocation2 + $0x9a] sm:$0xff]
      %v733 = vld [vmem:[#allocation2 + $0xaa] sm:$0xff]
      %v734 = vld [vmem:[#allocation2 + $0xb2] sm:$0xff]
      %v735 = vld [vmem:[#allocation2 + $0xc2] sm:$0xff]
      %v736 = vld [vmem:[#allocation2 + $0xca] sm:$0xff]
      %v737 = vld [vmem:[#allocation2 + $0xda] sm:$0xff]
      %v738 = vld [vmem:[#allocation2 + $0xe2] sm:$0xff]
      %v739 = vld [vmem:[#allocation2 + $0xf2] sm:$0xff]
      %v740 = vld [vmem:[#allocation2 + $0xfa] sm:$0xff]
      %v741 = vld [vmem:[#allocation2 + $0x10a] sm:$0xff]
      %v742 = vld [vmem:[#allocation2 + $0x112] sm:$0xff]
      %v743 = vld [vmem:[#allocation2 + $0x122] sm:$0xff]
      %v744 = vld [vmem:[#allocation2 + $0x12a] sm:$0xff]
      %v745 = vld [vmem:[#allocation2 + $0x13a] sm:$0xff]
      %v746 = vld [vmem:[#allocation2 + $0x142] sm:$0xff]
      %v747 = vld [vmem:[#allocation2 + $0x152] sm:$0xff]
      %v748 = vld [vmem:[#allocation2 + $0x15a] sm:$0xff]
      %v749 = vld [vmem:[#allocation2 + $0x16a] sm:$0xff]
      %v750 = vld [vmem:[#allocation2 + $0x172] sm:$0xff]
      %783 = vrot.lane.b32.xlu0 %v719, 64
      %v784 = vpop.permute.xlu0 %783
      %785 = vrot.lane.b32.xlu0 %v720, 64
      %v786 = vpop.permute.xlu0 %785
      %787 = vrot.lane.b32.xlu0 %v721, 64
      %v788 = vpop.permute.xlu0 %787
      %789 = vrot.lane.b32.xlu0 %v722, 64
      %v790 = vpop.permute.xlu0 %789
      %791 = vrot.lane.b32.xlu0 %v723, 64
      %v792 = vpop.permute.xlu0 %791
      %793 = vrot.lane.b32.xlu0 %v724, 64
      %v794 = vpop.permute.xlu0 %793
      %795 = vrot.lane.b32.xlu0 %v725, 64
      %v796 = vpop.permute.xlu0 %795
      %797 = vrot.lane.b32.xlu0 %v726, 64
      %v798 = vpop.permute.xlu0 %797
      %799 = vrot.lane.b32.xlu0 %v727, 64
      %v800 = vpop.permute.xlu0 %799
      %801 = vrot.lane.b32.xlu0 %v728, 64
      %v802 = vpop.permute.xlu0 %801
      %803 = vrot.lane.b32.xlu0 %v729, 64
      %v804 = vpop.permute.xlu0 %803
      %805 = vrot.lane.b32.xlu0 %v730, 64
      %v806 = vpop.permute.xlu0 %805
      %807 = vrot.lane.b32.xlu0 %v731, 64
      %v808 = vpop.permute.xlu0 %807
      %809 = vrot.lane.b32.xlu0 %v732, 64
      %v810 = vpop.permute.xlu0 %809
      %811 = vrot.lane.b32.xlu0 %v733, 64
      %v812 = vpop.permute.xlu0 %811
      %813 = vrot.lane.b32.xlu0 %v734, 64
      %v814 = vpop.permute.xlu0 %813
      %815 = vrot.lane.b32.xlu0 %v735, 64
      %v816 = vpop.permute.xlu0 %815
      %817 = vrot.lane.b32.xlu0 %v736, 64
      %v818 = vpop.permute.xlu0 %817
      %819 = vrot.lane.b32.xlu0 %v737, 64
      %v820 = vpop.permute.xlu0 %819
      %821 = vrot.lane.b32.xlu0 %v738, 64
      %v822 = vpop.permute.xlu0 %821
      %823 = vrot.lane.b32.xlu0 %v739, 64
      %v824 = vpop.permute.xlu0 %823
      %825 = vrot.lane.b32.xlu0 %v740, 64
      %v826 = vpop.permute.xlu0 %825
      %827 = vrot.lane.b32.xlu0 %v741, 64
      %v828 = vpop.permute.xlu0 %827
      %829 = vrot.lane.b32.xlu0 %v742, 64
      %v830 = vpop.permute.xlu0 %829
      %831 = vrot.lane.b32.xlu0 %v743, 64
      %v832 = vpop.permute.xlu0 %831
      %833 = vrot.lane.b32.xlu0 %v744, 64
      %v834 = vpop.permute.xlu0 %833
      %835 = vrot.lane.b32.xlu0 %v745, 64
      %v836 = vpop.permute.xlu0 %835
      %837 = vrot.lane.b32.xlu0 %v746, 64
      %v838 = vpop.permute.xlu0 %837
      %839 = vrot.lane.b32.xlu0 %v747, 64
      %v840 = vpop.permute.xlu0 %839
      %841 = vrot.lane.b32.xlu0 %v748, 64
      %v842 = vpop.permute.xlu0 %841
      %843 = vrot.lane.b32.xlu0 %v749, 64
      %v844 = vpop.permute.xlu0 %843
      %845 = vrot.lane.b32.xlu0 %v750, 64
      %v846 = vpop.permute.xlu0 %845
      %vm879 = vcmask 785920
      %880 = vst.msk [vmem:[#allocation4] sm:$0xff] %vm879, %v784
      %881 = vst.msk [vmem:[#allocation4 + $0x18] sm:$0xff] %vm879, %v786
      %882 = vst.msk [vmem:[#allocation4 + $0x30] sm:$0xff] %vm879, %v788
      %883 = vst.msk [vmem:[#allocation4 + $0x48] sm:$0xff] %vm879, %v790
      %884 = vst.msk [vmem:[#allocation4 + $0x60] sm:$0xff] %vm879, %v792
      %885 = vst.msk [vmem:[#allocation4 + $0x78] sm:$0xff] %vm879, %v794
      %886 = vst.msk [vmem:[#allocation4 + $0x90] sm:$0xff] %vm879, %v796
      %887 = vst.msk [vmem:[#allocation4 + $0xa8] sm:$0xff] %vm879, %v798
      %888 = vst.msk [vmem:[#allocation4 + $0xc0] sm:$0xff] %vm879, %v800
      %889 = vst.msk [vmem:[#allocation4 + $0xd8] sm:$0xff] %vm879, %v802
      %890 = vst.msk [vmem:[#allocation4 + $0xf0] sm:$0xff] %vm879, %v804
      %891 = vst.msk [vmem:[#allocation4 + $0x108] sm:$0xff] %vm879, %v806
      %892 = vst.msk [vmem:[#allocation4 + $0x120] sm:$0xff] %vm879, %v808
      %893 = vst.msk [vmem:[#allocation4 + $0x138] sm:$0xff] %vm879, %v810
      %894 = vst.msk [vmem:[#allocation4 + $0x150] sm:$0xff] %vm879, %v812
      %895 = vst.msk [vmem:[#allocation4 + $0x168] sm:$0xff] %vm879, %v814
      %896 = vst.msk [vmem:[#allocation4 + $0x180] sm:$0xff] %vm879, %v816
      %897 = vst.msk [vmem:[#allocation4 + $0x198] sm:$0xff] %vm879, %v818
      %898 = vst.msk [vmem:[#allocation4 + $0x1b0] sm:$0xff] %vm879, %v820
      %899 = vst.msk [vmem:[#allocation4 + $0x1c8] sm:$0xff] %vm879, %v822
      %900 = vst.msk [vmem:[#allocation4 + $0x1e0] sm:$0xff] %vm879, %v824
      %901 = vst.msk [vmem:[#allocation4 + $0x1f8] sm:$0xff] %vm879, %v826
      %902 = vst.msk [vmem:[#allocation4 + $0x210] sm:$0xff] %vm879, %v828
      %903 = vst.msk [vmem:[#allocation4 + $0x228] sm:$0xff] %vm879, %v830
      %904 = vst.msk [vmem:[#allocation4 + $0x240] sm:$0xff] %vm879, %v832
      %905 = vst.msk [vmem:[#allocation4 + $0x258] sm:$0xff] %vm879, %v834
      %906 = vst.msk [vmem:[#allocation4 + $0x270] sm:$0xff] %vm879, %v836
      %907 = vst.msk [vmem:[#allocation4 + $0x288] sm:$0xff] %vm879, %v838
      %908 = vst.msk [vmem:[#allocation4 + $0x2a0] sm:$0xff] %vm879, %v840
      %909 = vst.msk [vmem:[#allocation4 + $0x2b8] sm:$0xff] %vm879, %v842
      %910 = vst.msk [vmem:[#allocation4 + $0x2d0] sm:$0xff] %vm879, %v844
      %911 = vst.msk [vmem:[#allocation4 + $0x2e8] sm:$0xff] %vm879, %v846
      %v912 = vld [vmem:[%s321] sm:$0xff]
      %v913 = vld [vmem:[%s321 + $0x8] sm:$0xff]
      %v914 = vld [vmem:[%s321 + $0x18] sm:$0xff]
      %v915 = vld [vmem:[%s321 + $0x20] sm:$0xff]
      %v916 = vld [vmem:[%s321 + $0x30] sm:$0xff]
      %v917 = vld [vmem:[%s321 + $0x38] sm:$0xff]
      %v918 = vld [vmem:[%s321 + $0x48] sm:$0xff]
      %v919 = vld [vmem:[%s321 + $0x50] sm:$0xff]
      %v920 = vld [vmem:[%s321 + $0x60] sm:$0xff]
      %v921 = vld [vmem:[%s321 + $0x68] sm:$0xff]
      %v922 = vld [vmem:[%s321 + $0x78] sm:$0xff]
      %v923 = vld [vmem:[%s321 + $0x80] sm:$0xff]
      %v924 = vld [vmem:[%s321 + $0x90] sm:$0xff]
      %v925 = vld [vmem:[%s321 + $0x98] sm:$0xff]
      %v926 = vld [vmem:[%s321 + $0xa8] sm:$0xff]
      %v927 = vld [vmem:[%s321 + $0xb0] sm:$0xff]
      %v928 = vld [vmem:[%s321 + $0xc0] sm:$0xff]
      %v929 = vld [vmem:[%s321 + $0xc8] sm:$0xff]
      %v930 = vld [vmem:[%s321 + $0xd8] sm:$0xff]
      %v931 = vld [vmem:[%s321 + $0xe0] sm:$0xff]
      %v932 = vld [vmem:[%s321 + $0xf0] sm:$0xff]
      %v933 = vld [vmem:[%s321 + $0xf8] sm:$0xff]
      %v934 = vld [vmem:[%s321 + $0x108] sm:$0xff]
      %v935 = vld [vmem:[%s321 + $0x110] sm:$0xff]
      %v936 = vld [vmem:[%s321 + $0x120] sm:$0xff]
      %v937 = vld [vmem:[%s321 + $0x128] sm:$0xff]
      %v938 = vld [vmem:[%s321 + $0x138] sm:$0xff]
      %v939 = vld [vmem:[%s321 + $0x140] sm:$0xff]
      %v940 = vld [vmem:[%s321 + $0x150] sm:$0xff]
      %v941 = vld [vmem:[%s321 + $0x158] sm:$0xff]
      %v942 = vld [vmem:[%s321 + $0x168] sm:$0xff]
      %v943 = vld [vmem:[%s321 + $0x170] sm:$0xff]
      %976 = vrot.lane.b32.xlu0 %v912, 96
      %v977 = vpop.permute.xlu0 %976
      %978 = vrot.lane.b32.xlu0 %v913, 96
      %v979 = vpop.permute.xlu0 %978
      %980 = vrot.lane.b32.xlu0 %v914, 96
      %v981 = vpop.permute.xlu0 %980
      %982 = vrot.lane.b32.xlu0 %v915, 96
      %v983 = vpop.permute.xlu0 %982
      %984 = vrot.lane.b32.xlu0 %v916, 96
      %v985 = vpop.permute.xlu0 %984
      %986 = vrot.lane.b32.xlu0 %v917, 96
      %v987 = vpop.permute.xlu0 %986
      %988 = vrot.lane.b32.xlu0 %v918, 96
      %v989 = vpop.permute.xlu0 %988
      %990 = vrot.lane.b32.xlu0 %v919, 96
      %v991 = vpop.permute.xlu0 %990
      %992 = vrot.lane.b32.xlu0 %v920, 96
      %v993 = vpop.permute.xlu0 %992
      %994 = vrot.lane.b32.xlu0 %v921, 96
      %v995 = vpop.permute.xlu0 %994
      %996 = vrot.lane.b32.xlu0 %v922, 96
      %v997 = vpop.permute.xlu0 %996
      %998 = vrot.lane.b32.xlu0 %v923, 96
      %v999 = vpop.permute.xlu0 %998
      %1000 = vrot.lane.b32.xlu0 %v924, 96
      %v1001 = vpop.permute.xlu0 %1000
      %1002 = vrot.lane.b32.xlu0 %v925, 96
      %v1003 = vpop.permute.xlu0 %1002
      %1004 = vrot.lane.b32.xlu0 %v926, 96
      %v1005 = vpop.permute.xlu0 %1004
      %1006 = vrot.lane.b32.xlu0 %v927, 96
      %v1007 = vpop.permute.xlu0 %1006
      %1008 = vrot.lane.b32.xlu0 %v928, 96
      %v1009 = vpop.permute.xlu0 %1008
      %1010 = vrot.lane.b32.xlu0 %v929, 96
      %v1011 = vpop.permute.xlu0 %1010
      %1012 = vrot.lane.b32.xlu0 %v930, 96
      %v1013 = vpop.permute.xlu0 %1012
      %1014 = vrot.lane.b32.xlu0 %v931, 96
      %v1015 = vpop.permute.xlu0 %1014
      %1016 = vrot.lane.b32.xlu0 %v932, 96
      %v1017 = vpop.permute.xlu0 %1016
      %1018 = vrot.lane.b32.xlu0 %v933, 96
      %v1019 = vpop.permute.xlu0 %1018
      %1020 = vrot.lane.b32.xlu0 %v934, 96
      %v1021 = vpop.permute.xlu0 %1020
      %1022 = vrot.lane.b32.xlu0 %v935, 96
      %v1023 = vpop.permute.xlu0 %1022
      %1024 = vrot.lane.b32.xlu0 %v936, 96
      %v1025 = vpop.permute.xlu0 %1024
      %1026 = vrot.lane.b32.xlu0 %v937, 96
      %v1027 = vpop.permute.xlu0 %1026
      %1028 = vrot.lane.b32.xlu0 %v938, 96
      %v1029 = vpop.permute.xlu0 %1028
      %1030 = vrot.lane.b32.xlu0 %v939, 96
      %v1031 = vpop.permute.xlu0 %1030
      %1032 = vrot.lane.b32.xlu0 %v940, 96
      %v1033 = vpop.permute.xlu0 %1032
      %1034 = vrot.lane.b32.xlu0 %v941, 96
      %v1035 = vpop.permute.xlu0 %1034
      %1036 = vrot.lane.b32.xlu0 %v942, 96
      %v1037 = vpop.permute.xlu0 %1036
      %1038 = vrot.lane.b32.xlu0 %v943, 96
      %v1039 = vpop.permute.xlu0 %1038
      %vm1072 = vcmask 1048320
      %1073 = vst.msk [vmem:[#allocation4] sm:$0xff] %vm1072, %v977
      %1074 = vst.msk [vmem:[#allocation4 + $0x18] sm:$0xff] %vm1072, %v979
      %1075 = vst.msk [vmem:[#allocation4 + $0x30] sm:$0xff] %vm1072, %v981
      %1076 = vst.msk [vmem:[#allocation4 + $0x48] sm:$0xff] %vm1072, %v983
      %1077 = vst.msk [vmem:[#allocation4 + $0x60] sm:$0xff] %vm1072, %v985
      %1078 = vst.msk [vmem:[#allocation4 + $0x78] sm:$0xff] %vm1072, %v987
      %1079 = vst.msk [vmem:[#allocation4 + $0x90] sm:$0xff] %vm1072, %v989
      %1080 = vst.msk [vmem:[#allocation4 + $0xa8] sm:$0xff] %vm1072, %v991
      %1081 = vst.msk [vmem:[#allocation4 + $0xc0] sm:$0xff] %vm1072, %v993
      %1082 = vst.msk [vmem:[#allocation4 + $0xd8] sm:$0xff] %vm1072, %v995
      %1083 = vst.msk [vmem:[#allocation4 + $0xf0] sm:$0xff] %vm1072, %v997
      %1084 = vst.msk [vmem:[#allocation4 + $0x108] sm:$0xff] %vm1072, %v999
      %1085 = vst.msk [vmem:[#allocation4 + $0x120] sm:$0xff] %vm1072, %v1001
      %1086 = vst.msk [vmem:[#allocation4 + $0x138] sm:$0xff] %vm1072, %v1003
      %1087 = vst.msk [vmem:[#allocation4 + $0x150] sm:$0xff] %vm1072, %v1005
      %1088 = vst.msk [vmem:[#allocation4 + $0x168] sm:$0xff] %vm1072, %v1007
      %1089 = vst.msk [vmem:[#allocation4 + $0x180] sm:$0xff] %vm1072, %v1009
      %1090 = vst.msk [vmem:[#allocation4 + $0x198] sm:$0xff] %vm1072, %v1011
      %1091 = vst.msk [vmem:[#allocation4 + $0x1b0] sm:$0xff] %vm1072, %v1013
      %1092 = vst.msk [vmem:[#allocation4 + $0x1c8] sm:$0xff] %vm1072, %v1015
      %1093 = vst.msk [vmem:[#allocation4 + $0x1e0] sm:$0xff] %vm1072, %v1017
      %1094 = vst.msk [vmem:[#allocation4 + $0x1f8] sm:$0xff] %vm1072, %v1019
      %1095 = vst.msk [vmem:[#allocation4 + $0x210] sm:$0xff] %vm1072, %v1021
      %1096 = vst.msk [vmem:[#allocation4 + $0x228] sm:$0xff] %vm1072, %v1023
      %1097 = vst.msk [vmem:[#allocation4 + $0x240] sm:$0xff] %vm1072, %v1025
      %1098 = vst.msk [vmem:[#allocation4 + $0x258] sm:$0xff] %vm1072, %v1027
      %1099 = vst.msk [vmem:[#allocation4 + $0x270] sm:$0xff] %vm1072, %v1029
      %1100 = vst.msk [vmem:[#allocation4 + $0x288] sm:$0xff] %vm1072, %v1031
      %1101 = vst.msk [vmem:[#allocation4 + $0x2a0] sm:$0xff] %vm1072, %v1033
      %1102 = vst.msk [vmem:[#allocation4 + $0x2b8] sm:$0xff] %vm1072, %v1035
      %1103 = vst.msk [vmem:[#allocation4 + $0x2d0] sm:$0xff] %vm1072, %v1037
      %1104 = vst.msk [vmem:[#allocation4 + $0x2e8] sm:$0xff] %vm1072, %v1039
      %v1105 = vld [vmem:[%s321 + $0x1] sm:$0xff]
      %v1106 = vld [vmem:[%s321 + $0x9] sm:$0xff]
      %v1107 = vld [vmem:[%s321 + $0x19] sm:$0xff]
      %v1108 = vld [vmem:[%s321 + $0x21] sm:$0xff]
      %v1109 = vld [vmem:[%s321 + $0x31] sm:$0xff]
      %v1110 = vld [vmem:[%s321 + $0x39] sm:$0xff]
      %v1111 = vld [vmem:[%s321 + $0x49] sm:$0xff]
      %v1112 = vld [vmem:[%s321 + $0x51] sm:$0xff]
      %v1113 = vld [vmem:[%s321 + $0x61] sm:$0xff]
      %v1114 = vld [vmem:[%s321 + $0x69] sm:$0xff]
      %v1115 = vld [vmem:[%s321 + $0x79] sm:$0xff]
      %v1116 = vld [vmem:[%s321 + $0x81] sm:$0xff]
      %v1117 = vld [vmem:[%s321 + $0x91] sm:$0xff]
      %v1118 = vld [vmem:[%s321 + $0x99] sm:$0xff]
      %v1119 = vld [vmem:[%s321 + $0xa9] sm:$0xff]
      %v1120 = vld [vmem:[%s321 + $0xb1] sm:$0xff]
      %v1121 = vld [vmem:[%s321 + $0xc1] sm:$0xff]
      %v1122 = vld [vmem:[%s321 + $0xc9] sm:$0xff]
      %v1123 = vld [vmem:[%s321 + $0xd9] sm:$0xff]
      %v1124 = vld [vmem:[%s321 + $0xe1] sm:$0xff]
      %v1125 = vld [vmem:[%s321 + $0xf1] sm:$0xff]
      %v1126 = vld [vmem:[%s321 + $0xf9] sm:$0xff]
      %v1127 = vld [vmem:[%s321 + $0x109] sm:$0xff]
      %v1128 = vld [vmem:[%s321 + $0x111] sm:$0xff]
      %v1129 = vld [vmem:[%s321 + $0x121] sm:$0xff]
      %v1130 = vld [vmem:[%s321 + $0x129] sm:$0xff]
      %v1131 = vld [vmem:[%s321 + $0x139] sm:$0xff]
      %v1132 = vld [vmem:[%s321 + $0x141] sm:$0xff]
      %v1133 = vld [vmem:[%s321 + $0x151] sm:$0xff]
      %v1134 = vld [vmem:[%s321 + $0x159] sm:$0xff]
      %v1135 = vld [vmem:[%s321 + $0x169] sm:$0xff]
      %v1136 = vld [vmem:[%s321 + $0x171] sm:$0xff]
      %1137 = vst.msk [vmem:[#allocation4 + $0x8] sm:$0xff] %vm312, %v1105
      %1138 = vst.msk [vmem:[#allocation4 + $0x20] sm:$0xff] %vm312, %v1106
      %1139 = vst.msk [vmem:[#allocation4 + $0x38] sm:$0xff] %vm312, %v1107
      %1140 = vst.msk [vmem:[#allocation4 + $0x50] sm:$0xff] %vm312, %v1108
      %1141 = vst.msk [vmem:[#allocation4 + $0x68] sm:$0xff] %vm312, %v1109
      %1142 = vst.msk [vmem:[#allocation4 + $0x80] sm:$0xff] %vm312, %v1110
      %1143 = vst.msk [vmem:[#allocation4 + $0x98] sm:$0xff] %vm312, %v1111
      %1144 = vst.msk [vmem:[#allocation4 + $0xb0] sm:$0xff] %vm312, %v1112
      %1145 = vst.msk [vmem:[#allocation4 + $0xc8] sm:$0xff] %vm312, %v1113
      %1146 = vst.msk [vmem:[#allocation4 + $0xe0] sm:$0xff] %vm312, %v1114
      %1147 = vst.msk [vmem:[#allocation4 + $0xf8] sm:$0xff] %vm312, %v1115
      %1148 = vst.msk [vmem:[#allocation4 + $0x110] sm:$0xff] %vm312, %v1116
      %1149 = vst.msk [vmem:[#allocation4 + $0x128] sm:$0xff] %vm312, %v1117
      %1150 = vst.msk [vmem:[#allocation4 + $0x140] sm:$0xff] %vm312, %v1118
      %1151 = vst.msk [vmem:[#allocation4 + $0x158] sm:$0xff] %vm312, %v1119
      %1152 = vst.msk [vmem:[#allocation4 + $0x170] sm:$0xff] %vm312, %v1120
      %1153 = vst.msk [vmem:[#allocation4 + $0x188] sm:$0xff] %vm312, %v1121
      %1154 = vst.msk [vmem:[#allocation4 + $0x1a0] sm:$0xff] %vm312, %v1122
      %1155 = vst.msk [vmem:[#allocation4 + $0x1b8] sm:$0xff] %vm312, %v1123
      %1156 = vst.msk [vmem:[#allocation4 + $0x1d0] sm:$0xff] %vm312, %v1124
      %1157 = vst.msk [vmem:[#allocation4 + $0x1e8] sm:$0xff] %vm312, %v1125
      %1158 = vst.msk [vmem:[#allocation4 + $0x200] sm:$0xff] %vm312, %v1126
      %1159 = vst.msk [vmem:[#allocation4 + $0x218] sm:$0xff] %vm312, %v1127
      %1160 = vst.msk [vmem:[#allocation4 + $0x230] sm:$0xff] %vm312, %v1128
      %1161 = vst.msk [vmem:[#allocation4 + $0x248] sm:$0xff] %vm312, %v1129
      %1162 = vst.msk [vmem:[#allocation4 + $0x260] sm:$0xff] %vm312, %v1130
      %1163 = vst.msk [vmem:[#allocation4 + $0x278] sm:$0xff] %vm312, %v1131
      %1164 = vst.msk [vmem:[#allocation4 + $0x290] sm:$0xff] %vm312, %v1132
      %1165 = vst.msk [vmem:[#allocation4 + $0x2a8] sm:$0xff] %vm312, %v1133
      %1166 = vst.msk [vmem:[#allocation4 + $0x2c0] sm:$0xff] %vm312, %v1134
      %1167 = vst.msk [vmem:[#allocation4 + $0x2d8] sm:$0xff] %vm312, %v1135
      %1168 = vst.msk [vmem:[#allocation4 + $0x2f0] sm:$0xff] %vm312, %v1136
      %v1169 = vld [vmem:[%s321 + $0x2] sm:$0xff]
      %v1170 = vld [vmem:[%s321 + $0xa] sm:$0xff]
      %v1171 = vld [vmem:[%s321 + $0x1a] sm:$0xff]
      %v1172 = vld [vmem:[%s321 + $0x22] sm:$0xff]
      %v1173 = vld [vmem:[%s321 + $0x32] sm:$0xff]
      %v1174 = vld [vmem:[%s321 + $0x3a] sm:$0xff]
      %v1175 = vld [vmem:[%s321 + $0x4a] sm:$0xff]
      %v1176 = vld [vmem:[%s321 + $0x52] sm:$0xff]
      %v1177 = vld [vmem:[%s321 + $0x62] sm:$0xff]
      %v1178 = vld [vmem:[%s321 + $0x6a] sm:$0xff]
      %v1179 = vld [vmem:[%s321 + $0x7a] sm:$0xff]
      %v1180 = vld [vmem:[%s321 + $0x82] sm:$0xff]
      %v1181 = vld [vmem:[%s321 + $0x92] sm:$0xff]
      %v1182 = vld [vmem:[%s321 + $0x9a] sm:$0xff]
      %v1183 = vld [vmem:[%s321 + $0xaa] sm:$0xff]
      %v1184 = vld [vmem:[%s321 + $0xb2] sm:$0xff]
      %v1185 = vld [vmem:[%s321 + $0xc2] sm:$0xff]
      %v1186 = vld [vmem:[%s321 + $0xca] sm:$0xff]
      %v1187 = vld [vmem:[%s321 + $0xda] sm:$0xff]
      %v1188 = vld [vmem:[%s321 + $0xe2] sm:$0xff]
      %v1189 = vld [vmem:[%s321 + $0xf2] sm:$0xff]
      %v1190 = vld [vmem:[%s321 + $0xfa] sm:$0xff]
      %v1191 = vld [vmem:[%s321 + $0x10a] sm:$0xff]
      %v1192 = vld [vmem:[%s321 + $0x112] sm:$0xff]
      %v1193 = vld [vmem:[%s321 + $0x122] sm:$0xff]
      %v1194 = vld [vmem:[%s321 + $0x12a] sm:$0xff]
      %v1195 = vld [vmem:[%s321 + $0x13a] sm:$0xff]
      %v1196 = vld [vmem:[%s321 + $0x142] sm:$0xff]
      %v1197 = vld [vmem:[%s321 + $0x152] sm:$0xff]
      %v1198 = vld [vmem:[%s321 + $0x15a] sm:$0xff]
      %v1199 = vld [vmem:[%s321 + $0x16a] sm:$0xff]
      %v1200 = vld [vmem:[%s321 + $0x172] sm:$0xff]
      %1233 = vrot.lane.b32.xlu0 %v1169, 32
      %v1234 = vpop.permute.xlu0 %1233
      %1235 = vrot.lane.b32.xlu0 %v1170, 32
      %v1236 = vpop.permute.xlu0 %1235
      %1237 = vrot.lane.b32.xlu0 %v1171, 32
      %v1238 = vpop.permute.xlu0 %1237
      %1239 = vrot.lane.b32.xlu0 %v1172, 32
      %v1240 = vpop.permute.xlu0 %1239
      %1241 = vrot.lane.b32.xlu0 %v1173, 32
      %v1242 = vpop.permute.xlu0 %1241
      %1243 = vrot.lane.b32.xlu0 %v1174, 32
      %v1244 = vpop.permute.xlu0 %1243
      %1245 = vrot.lane.b32.xlu0 %v1175, 32
      %v1246 = vpop.permute.xlu0 %1245
      %1247 = vrot.lane.b32.xlu0 %v1176, 32
      %v1248 = vpop.permute.xlu0 %1247
      %1249 = vrot.lane.b32.xlu0 %v1177, 32
      %v1250 = vpop.permute.xlu0 %1249
      %1251 = vrot.lane.b32.xlu0 %v1178, 32
      %v1252 = vpop.permute.xlu0 %1251
      %1253 = vrot.lane.b32.xlu0 %v1179, 32
      %v1254 = vpop.permute.xlu0 %1253
      %1255 = vrot.lane.b32.xlu0 %v1180, 32
      %v1256 = vpop.permute.xlu0 %1255
      %1257 = vrot.lane.b32.xlu0 %v1181, 32
      %v1258 = vpop.permute.xlu0 %1257
      %1259 = vrot.lane.b32.xlu0 %v1182, 32
      %v1260 = vpop.permute.xlu0 %1259
      %1261 = vrot.lane.b32.xlu0 %v1183, 32
      %v1262 = vpop.permute.xlu0 %1261
      %1263 = vrot.lane.b32.xlu0 %v1184, 32
      %v1264 = vpop.permute.xlu0 %1263
      %1265 = vrot.lane.b32.xlu0 %v1185, 32
      %v1266 = vpop.permute.xlu0 %1265
      %1267 = vrot.lane.b32.xlu0 %v1186, 32
      %v1268 = vpop.permute.xlu0 %1267
      %1269 = vrot.lane.b32.xlu0 %v1187, 32
      %v1270 = vpop.permute.xlu0 %1269
      %1271 = vrot.lane.b32.xlu0 %v1188, 32
      %v1272 = vpop.permute.xlu0 %1271
      %1273 = vrot.lane.b32.xlu0 %v1189, 32
      %v1274 = vpop.permute.xlu0 %1273
      %1275 = vrot.lane.b32.xlu0 %v1190, 32
      %v1276 = vpop.permute.xlu0 %1275
      %1277 = vrot.lane.b32.xlu0 %v1191, 32
      %v1278 = vpop.permute.xlu0 %1277
      %1279 = vrot.lane.b32.xlu0 %v1192, 32
      %v1280 = vpop.permute.xlu0 %1279
      %1281 = vrot.lane.b32.xlu0 %v1193, 32
      %v1282 = vpop.permute.xlu0 %1281
      %1283 = vrot.lane.b32.xlu0 %v1194, 32
      %v1284 = vpop.permute.xlu0 %1283
      %1285 = vrot.lane.b32.xlu0 %v1195, 32
      %v1286 = vpop.permute.xlu0 %1285
      %1287 = vrot.lane.b32.xlu0 %v1196, 32
      %v1288 = vpop.permute.xlu0 %1287
      %1289 = vrot.lane.b32.xlu0 %v1197, 32
      %v1290 = vpop.permute.xlu0 %1289
      %1291 = vrot.lane.b32.xlu0 %v1198, 32
      %v1292 = vpop.permute.xlu0 %1291
      %1293 = vrot.lane.b32.xlu0 %v1199, 32
      %v1294 = vpop.permute.xlu0 %1293
      %1295 = vrot.lane.b32.xlu0 %v1200, 32
      %v1296 = vpop.permute.xlu0 %1295
      %1329 = vst.msk [vmem:[#allocation4 + $0x8] sm:$0xff] %vm686, %v1234
      %1330 = vst.msk [vmem:[#allocation4 + $0x20] sm:$0xff] %vm686, %v1236
      %1331 = vst.msk [vmem:[#allocation4 + $0x38] sm:$0xff] %vm686, %v1238
      %1332 = vst.msk [vmem:[#allocation4 + $0x50] sm:$0xff] %vm686, %v1240
      %1333 = vst.msk [vmem:[#allocation4 + $0x68] sm:$0xff] %vm686, %v1242
      %1334 = vst.msk [vmem:[#allocation4 + $0x80] sm:$0xff] %vm686, %v1244
      %1335 = vst.msk [vmem:[#allocation4 + $0x98] sm:$0xff] %vm686, %v1246
      %1336 = vst.msk [vmem:[#allocation4 + $0xb0] sm:$0xff] %vm686, %v1248
      %1337 = vst.msk [vmem:[#allocation4 + $0xc8] sm:$0xff] %vm686, %v1250
      %1338 = vst.msk [vmem:[#allocation4 + $0xe0] sm:$0xff] %vm686, %v1252
      %1339 = vst.msk [vmem:[#allocation4 + $0xf8] sm:$0xff] %vm686, %v1254
      %1340 = vst.msk [vmem:[#allocation4 + $0x110] sm:$0xff] %vm686, %v1256
      %1341 = vst.msk [vmem:[#allocation4 + $0x128] sm:$0xff] %vm686, %v1258
      %1342 = vst.msk [vmem:[#allocation4 + $0x140] sm:$0xff] %vm686, %v1260
      %1343 = vst.msk [vmem:[#allocation4 + $0x158] sm:$0xff] %vm686, %v1262
      %1344 = vst.msk [vmem:[#allocation4 + $0x170] sm:$0xff] %vm686, %v1264
      %1345 = vst.msk [vmem:[#allocation4 + $0x188] sm:$0xff] %vm686, %v1266
      %1346 = vst.msk [vmem:[#allocation4 + $0x1a0] sm:$0xff] %vm686, %v1268
      %1347 = vst.msk [vmem:[#allocation4 + $0x1b8] sm:$0xff] %vm686, %v1270
      %1348 = vst.msk [vmem:[#allocation4 + $0x1d0] sm:$0xff] %vm686, %v1272
      %1349 = vst.msk [vmem:[#allocation4 + $0x1e8] sm:$0xff] %vm686, %v1274
      %1350 = vst.msk [vmem:[#allocation4 + $0x200] sm:$0xff] %vm686, %v1276
      %1351 = vst.msk [vmem:[#allocation4 + $0x218] sm:$0xff] %vm686, %v1278
      %1352 = vst.msk [vmem:[#allocation4 + $0x230] sm:$0xff] %vm686, %v1280
      %1353 = vst.msk [vmem:[#allocation4 + $0x248] sm:$0xff] %vm686, %v1282
      %1354 = vst.msk [vmem:[#allocation4 + $0x260] sm:$0xff] %vm686, %v1284
      %1355 = vst.msk [vmem:[#allocation4 + $0x278] sm:$0xff] %vm686, %v1286
      %1356 = vst.msk [vmem:[#allocation4 + $0x290] sm:$0xff] %vm686, %v1288
      %1357 = vst.msk [vmem:[#allocation4 + $0x2a8] sm:$0xff] %vm686, %v1290
      %1358 = vst.msk [vmem:[#allocation4 + $0x2c0] sm:$0xff] %vm686, %v1292
      %1359 = vst.msk [vmem:[#allocation4 + $0x2d8] sm:$0xff] %vm686, %v1294
      %1360 = vst.msk [vmem:[#allocation4 + $0x2f0] sm:$0xff] %vm686, %v1296
      %s1361 = scalar_lea.vmem [#allocation2], 48
      %v1362 = vld [vmem:[%s1361] sm:$0xff]
      %v1363 = vld [vmem:[%s1361 + $0x8] sm:$0xff]
      %v1364 = vld [vmem:[%s1361 + $0x18] sm:$0xff]
      %v1365 = vld [vmem:[%s1361 + $0x20] sm:$0xff]
      %v1366 = vld [vmem:[%s1361 + $0x30] sm:$0xff]
      %v1367 = vld [vmem:[%s1361 + $0x38] sm:$0xff]
      %v1368 = vld [vmem:[%s1361 + $0x48] sm:$0xff]
      %v1369 = vld [vmem:[%s1361 + $0x50] sm:$0xff]
      %v1370 = vld [vmem:[%s1361 + $0x60] sm:$0xff]
      %v1371 = vld [vmem:[%s1361 + $0x68] sm:$0xff]
      %v1372 = vld [vmem:[%s1361 + $0x78] sm:$0xff]
      %v1373 = vld [vmem:[%s1361 + $0x80] sm:$0xff]
      %v1374 = vld [vmem:[%s1361 + $0x90] sm:$0xff]
      %v1375 = vld [vmem:[%s1361 + $0x98] sm:$0xff]
      %v1376 = vld [vmem:[%s1361 + $0xa8] sm:$0xff]
      %v1377 = vld [vmem:[%s1361 + $0xb0] sm:$0xff]
      %v1378 = vld [vmem:[%s1361 + $0xc0] sm:$0xff]
      %v1379 = vld [vmem:[%s1361 + $0xc8] sm:$0xff]
      %v1380 = vld [vmem:[%s1361 + $0xd8] sm:$0xff]
      %v1381 = vld [vmem:[%s1361 + $0xe0] sm:$0xff]
      %v1382 = vld [vmem:[%s1361 + $0xf0] sm:$0xff]
      %v1383 = vld [vmem:[%s1361 + $0xf8] sm:$0xff]
      %v1384 = vld [vmem:[%s1361 + $0x108] sm:$0xff]
      %v1385 = vld [vmem:[%s1361 + $0x110] sm:$0xff]
      %v1386 = vld [vmem:[%s1361 + $0x120] sm:$0xff]
      %v1387 = vld [vmem:[%s1361 + $0x128] sm:$0xff]
      %v1388 = vld [vmem:[%s1361 + $0x138] sm:$0xff]
      %v1389 = vld [vmem:[%s1361 + $0x140] sm:$0xff]
      %v1390 = vld [vmem:[%s1361 + $0x150] sm:$0xff]
      %v1391 = vld [vmem:[%s1361 + $0x158] sm:$0xff]
      %v1392 = vld [vmem:[%s1361 + $0x168] sm:$0xff]
      %v1393 = vld [vmem:[%s1361 + $0x170] sm:$0xff]
      %1426 = vrot.lane.b32.xlu0 %v1362, 64
      %v1427 = vpop.permute.xlu0 %1426
      %1428 = vrot.lane.b32.xlu0 %v1363, 64
      %v1429 = vpop.permute.xlu0 %1428
      %1430 = vrot.lane.b32.xlu0 %v1364, 64
      %v1431 = vpop.permute.xlu0 %1430
      %1432 = vrot.lane.b32.xlu0 %v1365, 64
      %v1433 = vpop.permute.xlu0 %1432
      %1434 = vrot.lane.b32.xlu0 %v1366, 64
      %v1435 = vpop.permute.xlu0 %1434
      %1436 = vrot.lane.b32.xlu0 %v1367, 64
      %v1437 = vpop.permute.xlu0 %1436
      %1438 = vrot.lane.b32.xlu0 %v1368, 64
      %v1439 = vpop.permute.xlu0 %1438
      %1440 = vrot.lane.b32.xlu0 %v1369, 64
      %v1441 = vpop.permute.xlu0 %1440
      %1442 = vrot.lane.b32.xlu0 %v1370, 64
      %v1443 = vpop.permute.xlu0 %1442
      %1444 = vrot.lane.b32.xlu0 %v1371, 64
      %v1445 = vpop.permute.xlu0 %1444
      %1446 = vrot.lane.b32.xlu0 %v1372, 64
      %v1447 = vpop.permute.xlu0 %1446
      %1448 = vrot.lane.b32.xlu0 %v1373, 64
      %v1449 = vpop.permute.xlu0 %1448
      %1450 = vrot.lane.b32.xlu0 %v1374, 64
      %v1451 = vpop.permute.xlu0 %1450
      %1452 = vrot.lane.b32.xlu0 %v1375, 64
      %v1453 = vpop.permute.xlu0 %1452
      %1454 = vrot.lane.b32.xlu0 %v1376, 64
      %v1455 = vpop.permute.xlu0 %1454
      %1456 = vrot.lane.b32.xlu0 %v1377, 64
      %v1457 = vpop.permute.xlu0 %1456
      %1458 = vrot.lane.b32.xlu0 %v1378, 64
      %v1459 = vpop.permute.xlu0 %1458
      %1460 = vrot.lane.b32.xlu0 %v1379, 64
      %v1461 = vpop.permute.xlu0 %1460
      %1462 = vrot.lane.b32.xlu0 %v1380, 64
      %v1463 = vpop.permute.xlu0 %1462
      %1464 = vrot.lane.b32.xlu0 %v1381, 64
      %v1465 = vpop.permute.xlu0 %1464
      %1466 = vrot.lane.b32.xlu0 %v1382, 64
      %v1467 = vpop.permute.xlu0 %1466
      %1468 = vrot.lane.b32.xlu0 %v1383, 64
      %v1469 = vpop.permute.xlu0 %1468
      %1470 = vrot.lane.b32.xlu0 %v1384, 64
      %v1471 = vpop.permute.xlu0 %1470
      %1472 = vrot.lane.b32.xlu0 %v1385, 64
      %v1473 = vpop.permute.xlu0 %1472
      %1474 = vrot.lane.b32.xlu0 %v1386, 64
      %v1475 = vpop.permute.xlu0 %1474
      %1476 = vrot.lane.b32.xlu0 %v1387, 64
      %v1477 = vpop.permute.xlu0 %1476
      %1478 = vrot.lane.b32.xlu0 %v1388, 64
      %v1479 = vpop.permute.xlu0 %1478
      %1480 = vrot.lane.b32.xlu0 %v1389, 64
      %v1481 = vpop.permute.xlu0 %1480
      %1482 = vrot.lane.b32.xlu0 %v1390, 64
      %v1483 = vpop.permute.xlu0 %1482
      %1484 = vrot.lane.b32.xlu0 %v1391, 64
      %v1485 = vpop.permute.xlu0 %1484
      %1486 = vrot.lane.b32.xlu0 %v1392, 64
      %v1487 = vpop.permute.xlu0 %1486
      %1488 = vrot.lane.b32.xlu0 %v1393, 64
      %v1489 = vpop.permute.xlu0 %1488
      %1522 = vst.msk [vmem:[#allocation4 + $0x8] sm:$0xff] %vm879, %v1427
      %1523 = vst.msk [vmem:[#allocation4 + $0x20] sm:$0xff] %vm879, %v1429
      %1524 = vst.msk [vmem:[#allocation4 + $0x38] sm:$0xff] %vm879, %v1431
      %1525 = vst.msk [vmem:[#allocation4 + $0x50] sm:$0xff] %vm879, %v1433
      %1526 = vst.msk [vmem:[#allocation4 + $0x68] sm:$0xff] %vm879, %v1435
      %1527 = vst.msk [vmem:[#allocation4 + $0x80] sm:$0xff] %vm879, %v1437
      %1528 = vst.msk [vmem:[#allocation4 + $0x98] sm:$0xff] %vm879, %v1439
      %1529 = vst.msk [vmem:[#allocation4 + $0xb0] sm:$0xff] %vm879, %v1441
      %1530 = vst.msk [vmem:[#allocation4 + $0xc8] sm:$0xff] %vm879, %v1443
      %1531 = vst.msk [vmem:[#allocation4 + $0xe0] sm:$0xff] %vm879, %v1445
      %1532 = vst.msk [vmem:[#allocation4 + $0xf8] sm:$0xff] %vm879, %v1447
      %1533 = vst.msk [vmem:[#allocation4 + $0x110] sm:$0xff] %vm879, %v1449
      %1534 = vst.msk [vmem:[#allocation4 + $0x128] sm:$0xff] %vm879, %v1451
      %1535 = vst.msk [vmem:[#allocation4 + $0x140] sm:$0xff] %vm879, %v1453
      %1536 = vst.msk [vmem:[#allocation4 + $0x158] sm:$0xff] %vm879, %v1455
      %1537 = vst.msk [vmem:[#allocation4 + $0x170] sm:$0xff] %vm879, %v1457
      %1538 = vst.msk [vmem:[#allocation4 + $0x188] sm:$0xff] %vm879, %v1459
      %1539 = vst.msk [vmem:[#allocation4 + $0x1a0] sm:$0xff] %vm879, %v1461
      %1540 = vst.msk [vmem:[#allocation4 + $0x1b8] sm:$0xff] %vm879, %v1463
      %1541 = vst.msk [vmem:[#allocation4 + $0x1d0] sm:$0xff] %vm879, %v1465
      %1542 = vst.msk [vmem:[#allocation4 + $0x1e8] sm:$0xff] %vm879, %v1467
      %1543 = vst.msk [vmem:[#allocation4 + $0x200] sm:$0xff] %vm879, %v1469
      %1544 = vst.msk [vmem:[#allocation4 + $0x218] sm:$0xff] %vm879, %v1471
      %1545 = vst.msk [vmem:[#allocation4 + $0x230] sm:$0xff] %vm879, %v1473
      %1546 = vst.msk [vmem:[#allocation4 + $0x248] sm:$0xff] %vm879, %v1475
      %1547 = vst.msk [vmem:[#allocation4 + $0x260] sm:$0xff] %vm879, %v1477
      %1548 = vst.msk [vmem:[#allocation4 + $0x278] sm:$0xff] %vm879, %v1479
      %1549 = vst.msk [vmem:[#allocation4 + $0x290] sm:$0xff] %vm879, %v1481
      %1550 = vst.msk [vmem:[#allocation4 + $0x2a8] sm:$0xff] %vm879, %v1483
      %1551 = vst.msk [vmem:[#allocation4 + $0x2c0] sm:$0xff] %vm879, %v1485
      %1552 = vst.msk [vmem:[#allocation4 + $0x2d8] sm:$0xff] %vm879, %v1487
      %1553 = vst.msk [vmem:[#allocation4 + $0x2f0] sm:$0xff] %vm879, %v1489
      %v1554 = vld [vmem:[%s1361 + $0x1] sm:$0xff]
      %v1555 = vld [vmem:[%s1361 + $0x9] sm:$0xff]
      %v1556 = vld [vmem:[%s1361 + $0x19] sm:$0xff]
      %v1557 = vld [vmem:[%s1361 + $0x21] sm:$0xff]
      %v1558 = vld [vmem:[%s1361 + $0x31] sm:$0xff]
      %v1559 = vld [vmem:[%s1361 + $0x39] sm:$0xff]
      %v1560 = vld [vmem:[%s1361 + $0x49] sm:$0xff]
      %v1561 = vld [vmem:[%s1361 + $0x51] sm:$0xff]
      %v1562 = vld [vmem:[%s1361 + $0x61] sm:$0xff]
      %v1563 = vld [vmem:[%s1361 + $0x69] sm:$0xff]
      %v1564 = vld [vmem:[%s1361 + $0x79] sm:$0xff]
      %v1565 = vld [vmem:[%s1361 + $0x81] sm:$0xff]
      %v1566 = vld [vmem:[%s1361 + $0x91] sm:$0xff]
      %v1567 = vld [vmem:[%s1361 + $0x99] sm:$0xff]
      %v1568 = vld [vmem:[%s1361 + $0xa9] sm:$0xff]
      %v1569 = vld [vmem:[%s1361 + $0xb1] sm:$0xff]
      %v1570 = vld [vmem:[%s1361 + $0xc1] sm:$0xff]
      %v1571 = vld [vmem:[%s1361 + $0xc9] sm:$0xff]
      %v1572 = vld [vmem:[%s1361 + $0xd9] sm:$0xff]
      %v1573 = vld [vmem:[%s1361 + $0xe1] sm:$0xff]
      %v1574 = vld [vmem:[%s1361 + $0xf1] sm:$0xff]
      %v1575 = vld [vmem:[%s1361 + $0xf9] sm:$0xff]
      %v1576 = vld [vmem:[%s1361 + $0x109] sm:$0xff]
      %v1577 = vld [vmem:[%s1361 + $0x111] sm:$0xff]
      %v1578 = vld [vmem:[%s1361 + $0x121] sm:$0xff]
      %v1579 = vld [vmem:[%s1361 + $0x129] sm:$0xff]
      %v1580 = vld [vmem:[%s1361 + $0x139] sm:$0xff]
      %v1581 = vld [vmem:[%s1361 + $0x141] sm:$0xff]
      %v1582 = vld [vmem:[%s1361 + $0x151] sm:$0xff]
      %v1583 = vld [vmem:[%s1361 + $0x159] sm:$0xff]
      %v1584 = vld [vmem:[%s1361 + $0x169] sm:$0xff]
      %v1585 = vld [vmem:[%s1361 + $0x171] sm:$0xff]
      %1618 = vrot.lane.b32.xlu0 %v1554, 96
      %v1619 = vpop.permute.xlu0 %1618
      %1620 = vrot.lane.b32.xlu0 %v1555, 96
      %v1621 = vpop.permute.xlu0 %1620
      %1622 = vrot.lane.b32.xlu0 %v1556, 96
      %v1623 = vpop.permute.xlu0 %1622
      %1624 = vrot.lane.b32.xlu0 %v1557, 96
      %v1625 = vpop.permute.xlu0 %1624
      %1626 = vrot.lane.b32.xlu0 %v1558, 96
      %v1627 = vpop.permute.xlu0 %1626
      %1628 = vrot.lane.b32.xlu0 %v1559, 96
      %v1629 = vpop.permute.xlu0 %1628
      %1630 = vrot.lane.b32.xlu0 %v1560, 96
      %v1631 = vpop.permute.xlu0 %1630
      %1632 = vrot.lane.b32.xlu0 %v1561, 96
      %v1633 = vpop.permute.xlu0 %1632
      %1634 = vrot.lane.b32.xlu0 %v1562, 96
      %v1635 = vpop.permute.xlu0 %1634
      %1636 = vrot.lane.b32.xlu0 %v1563, 96
      %v1637 = vpop.permute.xlu0 %1636
      %1638 = vrot.lane.b32.xlu0 %v1564, 96
      %v1639 = vpop.permute.xlu0 %1638
      %1640 = vrot.lane.b32.xlu0 %v1565, 96
      %v1641 = vpop.permute.xlu0 %1640
      %1642 = vrot.lane.b32.xlu0 %v1566, 96
      %v1643 = vpop.permute.xlu0 %1642
      %1644 = vrot.lane.b32.xlu0 %v1567, 96
      %v1645 = vpop.permute.xlu0 %1644
      %1646 = vrot.lane.b32.xlu0 %v1568, 96
      %v1647 = vpop.permute.xlu0 %1646
      %1648 = vrot.lane.b32.xlu0 %v1569, 96
      %v1649 = vpop.permute.xlu0 %1648
      %1650 = vrot.lane.b32.xlu0 %v1570, 96
      %v1651 = vpop.permute.xlu0 %1650
      %1652 = vrot.lane.b32.xlu0 %v1571, 96
      %v1653 = vpop.permute.xlu0 %1652
      %1654 = vrot.lane.b32.xlu0 %v1572, 96
      %v1655 = vpop.permute.xlu0 %1654
      %1656 = vrot.lane.b32.xlu0 %v1573, 96
      %v1657 = vpop.permute.xlu0 %1656
      %1658 = vrot.lane.b32.xlu0 %v1574, 96
      %v1659 = vpop.permute.xlu0 %1658
      %1660 = vrot.lane.b32.xlu0 %v1575, 96
      %v1661 = vpop.permute.xlu0 %1660
      %1662 = vrot.lane.b32.xlu0 %v1576, 96
      %v1663 = vpop.permute.xlu0 %1662
      %1664 = vrot.lane.b32.xlu0 %v1577, 96
      %v1665 = vpop.permute.xlu0 %1664
      %1666 = vrot.lane.b32.xlu0 %v1578, 96
      %v1667 = vpop.permute.xlu0 %1666
      %1668 = vrot.lane.b32.xlu0 %v1579, 96
      %v1669 = vpop.permute.xlu0 %1668
      %1670 = vrot.lane.b32.xlu0 %v1580, 96
      %v1671 = vpop.permute.xlu0 %1670
      %1672 = vrot.lane.b32.xlu0 %v1581, 96
      %v1673 = vpop.permute.xlu0 %1672
      %1674 = vrot.lane.b32.xlu0 %v1582, 96
      %v1675 = vpop.permute.xlu0 %1674
      %1676 = vrot.lane.b32.xlu0 %v1583, 96
      %v1677 = vpop.permute.xlu0 %1676
      %1678 = vrot.lane.b32.xlu0 %v1584, 96
      %v1679 = vpop.permute.xlu0 %1678
      %1680 = vrot.lane.b32.xlu0 %v1585, 96
      %v1681 = vpop.permute.xlu0 %1680
      %1714 = vst.msk [vmem:[#allocation4 + $0x8] sm:$0xff] %vm1072, %v1619
      %1715 = vst.msk [vmem:[#allocation4 + $0x20] sm:$0xff] %vm1072, %v1621
      %1716 = vst.msk [vmem:[#allocation4 + $0x38] sm:$0xff] %vm1072, %v1623
      %1717 = vst.msk [vmem:[#allocation4 + $0x50] sm:$0xff] %vm1072, %v1625
      %1718 = vst.msk [vmem:[#allocation4 + $0x68] sm:$0xff] %vm1072, %v1627
      %1719 = vst.msk [vmem:[#allocation4 + $0x80] sm:$0xff] %vm1072, %v1629
      %1720 = vst.msk [vmem:[#allocation4 + $0x98] sm:$0xff] %vm1072, %v1631
      %1721 = vst.msk [vmem:[#allocation4 + $0xb0] sm:$0xff] %vm1072, %v1633
      %1722 = vst.msk [vmem:[#allocation4 + $0xc8] sm:$0xff] %vm1072, %v1635
      %1723 = vst.msk [vmem:[#allocation4 + $0xe0] sm:$0xff] %vm1072, %v1637
      %1724 = vst.msk [vmem:[#allocation4 + $0xf8] sm:$0xff] %vm1072, %v1639
      %1725 = vst.msk [vmem:[#allocation4 + $0x110] sm:$0xff] %vm1072, %v1641
      %1726 = vst.msk [vmem:[#allocation4 + $0x128] sm:$0xff] %vm1072, %v1643
      %1727 = vst.msk [vmem:[#allocation4 + $0x140] sm:$0xff] %vm1072, %v1645
      %1728 = vst.msk [vmem:[#allocation4 + $0x158] sm:$0xff] %vm1072, %v1647
      %1729 = vst.msk [vmem:[#allocation4 + $0x170] sm:$0xff] %vm1072, %v1649
      %1730 = vst.msk [vmem:[#allocation4 + $0x188] sm:$0xff] %vm1072, %v1651
      %1731 = vst.msk [vmem:[#allocation4 + $0x1a0] sm:$0xff] %vm1072, %v1653
      %1732 = vst.msk [vmem:[#allocation4 + $0x1b8] sm:$0xff] %vm1072, %v1655
      %1733 = vst.msk [vmem:[#allocation4 + $0x1d0] sm:$0xff] %vm1072, %v1657
      %1734 = vst.msk [vmem:[#allocation4 + $0x1e8] sm:$0xff] %vm1072, %v1659
      %1735 = vst.msk [vmem:[#allocation4 + $0x200] sm:$0xff] %vm1072, %v1661
      %1736 = vst.msk [vmem:[#allocation4 + $0x218] sm:$0xff] %vm1072, %v1663
      %1737 = vst.msk [vmem:[#allocation4 + $0x230] sm:$0xff] %vm1072, %v1665
      %1738 = vst.msk [vmem:[#allocation4 + $0x248] sm:$0xff] %vm1072, %v1667
      %1739 = vst.msk [vmem:[#allocation4 + $0x260] sm:$0xff] %vm1072, %v1669
      %1740 = vst.msk [vmem:[#allocation4 + $0x278] sm:$0xff] %vm1072, %v1671
      %1741 = vst.msk [vmem:[#allocation4 + $0x290] sm:$0xff] %vm1072, %v1673
      %1742 = vst.msk [vmem:[#allocation4 + $0x2a8] sm:$0xff] %vm1072, %v1675
      %1743 = vst.msk [vmem:[#allocation4 + $0x2c0] sm:$0xff] %vm1072, %v1677
      %1744 = vst.msk [vmem:[#allocation4 + $0x2d8] sm:$0xff] %vm1072, %v1679
      %1745 = vst.msk [vmem:[#allocation4 + $0x2f0] sm:$0xff] %vm1072, %v1681
      %v1746 = vld [vmem:[%s1361 + $0x2] sm:$0xff]
      %v1747 = vld [vmem:[%s1361 + $0xa] sm:$0xff]
      %v1748 = vld [vmem:[%s1361 + $0x1a] sm:$0xff]
      %v1749 = vld [vmem:[%s1361 + $0x22] sm:$0xff]
      %v1750 = vld [vmem:[%s1361 + $0x32] sm:$0xff]
      %v1751 = vld [vmem:[%s1361 + $0x3a] sm:$0xff]
      %v1752 = vld [vmem:[%s1361 + $0x4a] sm:$0xff]
      %v1753 = vld [vmem:[%s1361 + $0x52] sm:$0xff]
      %v1754 = vld [vmem:[%s1361 + $0x62] sm:$0xff]
      %v1755 = vld [vmem:[%s1361 + $0x6a] sm:$0xff]
      %v1756 = vld [vmem:[%s1361 + $0x7a] sm:$0xff]
      %v1757 = vld [vmem:[%s1361 + $0x82] sm:$0xff]
      %v1758 = vld [vmem:[%s1361 + $0x92] sm:$0xff]
      %v1759 = vld [vmem:[%s1361 + $0x9a] sm:$0xff]
      %v1760 = vld [vmem:[%s1361 + $0xaa] sm:$0xff]
      %v1761 = vld [vmem:[%s1361 + $0xb2] sm:$0xff]
      %v1762 = vld [vmem:[%s1361 + $0xc2] sm:$0xff]
      %v1763 = vld [vmem:[%s1361 + $0xca] sm:$0xff]
      %v1764 = vld [vmem:[%s1361 + $0xda] sm:$0xff]
      %v1765 = vld [vmem:[%s1361 + $0xe2] sm:$0xff]
      %v1766 = vld [vmem:[%s1361 + $0xf2] sm:$0xff]
      %v1767 = vld [vmem:[%s1361 + $0xfa] sm:$0xff]
      %v1768 = vld [vmem:[%s1361 + $0x10a] sm:$0xff]
      %v1769 = vld [vmem:[%s1361 + $0x112] sm:$0xff]
      %v1770 = vld [vmem:[%s1361 + $0x122] sm:$0xff]
      %v1771 = vld [vmem:[%s1361 + $0x12a] sm:$0xff]
      %v1772 = vld [vmem:[%s1361 + $0x13a] sm:$0xff]
      %v1773 = vld [vmem:[%s1361 + $0x142] sm:$0xff]
      %v1774 = vld [vmem:[%s1361 + $0x152] sm:$0xff]
      %v1775 = vld [vmem:[%s1361 + $0x15a] sm:$0xff]
      %v1776 = vld [vmem:[%s1361 + $0x16a] sm:$0xff]
      %v1777 = vld [vmem:[%s1361 + $0x172] sm:$0xff]
      %1778 = vst.msk [vmem:[#allocation4 + $0x10] sm:$0xff] %vm312, %v1746
      %1779 = vst.msk [vmem:[#allocation4 + $0x28] sm:$0xff] %vm312, %v1747
      %1780 = vst.msk [vmem:[#allocation4 + $0x40] sm:$0xff] %vm312, %v1748
      %1781 = vst.msk [vmem:[#allocation4 + $0x58] sm:$0xff] %vm312, %v1749
      %1782 = vst.msk [vmem:[#allocation4 + $0x70] sm:$0xff] %vm312, %v1750
      %1783 = vst.msk [vmem:[#allocation4 + $0x88] sm:$0xff] %vm312, %v1751
      %1784 = vst.msk [vmem:[#allocation4 + $0xa0] sm:$0xff] %vm312, %v1752
      %1785 = vst.msk [vmem:[#allocation4 + $0xb8] sm:$0xff] %vm312, %v1753
      %1786 = vst.msk [vmem:[#allocation4 + $0xd0] sm:$0xff] %vm312, %v1754
      %1787 = vst.msk [vmem:[#allocation4 + $0xe8] sm:$0xff] %vm312, %v1755
      %1788 = vst.msk [vmem:[#allocation4 + $0x100] sm:$0xff] %vm312, %v1756
      %1789 = vst.msk [vmem:[#allocation4 + $0x118] sm:$0xff] %vm312, %v1757
      %1790 = vst.msk [vmem:[#allocation4 + $0x130] sm:$0xff] %vm312, %v1758
      %1791 = vst.msk [vmem:[#allocation4 + $0x148] sm:$0xff] %vm312, %v1759
      %1792 = vst.msk [vmem:[#allocation4 + $0x160] sm:$0xff] %vm312, %v1760
      %1793 = vst.msk [vmem:[#allocation4 + $0x178] sm:$0xff] %vm312, %v1761
      %1794 = vst.msk [vmem:[#allocation4 + $0x190] sm:$0xff] %vm312, %v1762
      %1795 = vst.msk [vmem:[#allocation4 + $0x1a8] sm:$0xff] %vm312, %v1763
      %1796 = vst.msk [vmem:[#allocation4 + $0x1c0] sm:$0xff] %vm312, %v1764
      %1797 = vst.msk [vmem:[#allocation4 + $0x1d8] sm:$0xff] %vm312, %v1765
      %1798 = vst.msk [vmem:[#allocation4 + $0x1f0] sm:$0xff] %vm312, %v1766
      %1799 = vst.msk [vmem:[#allocation4 + $0x208] sm:$0xff] %vm312, %v1767
      %1800 = vst.msk [vmem:[#allocation4 + $0x220] sm:$0xff] %vm312, %v1768
      %1801 = vst.msk [vmem:[#allocation4 + $0x238] sm:$0xff] %vm312, %v1769
      %1802 = vst.msk [vmem:[#allocation4 + $0x250] sm:$0xff] %vm312, %v1770
      %1803 = vst.msk [vmem:[#allocation4 + $0x268] sm:$0xff] %vm312, %v1771
      %1804 = vst.msk [vmem:[#allocation4 + $0x280] sm:$0xff] %vm312, %v1772
      %1805 = vst.msk [vmem:[#allocation4 + $0x298] sm:$0xff] %vm312, %v1773
      %1806 = vst.msk [vmem:[#allocation4 + $0x2b0] sm:$0xff] %vm312, %v1774
      %1807 = vst.msk [vmem:[#allocation4 + $0x2c8] sm:$0xff] %vm312, %v1775
      %1808 = vst.msk [vmem:[#allocation4 + $0x2e0] sm:$0xff] %vm312, %v1776
      %1809 = vst.msk [vmem:[#allocation4 + $0x2f8] sm:$0xff] %vm312, %v1777
      %v1810 = vld [vmem:[#allocation4] sm:$0xff]
      %v1811 = vld [vmem:[#allocation4 + $0x8] sm:$0xff]
      %v1812 = vld [vmem:[#allocation4 + $0x10] sm:$0xff]
      %v1813 = vld [vmem:[#allocation4 + $0x18] sm:$0xff]
      %v1814 = vld [vmem:[#allocation4 + $0x20] sm:$0xff]
      %v1815 = vld [vmem:[#allocation4 + $0x28] sm:$0xff]
      %v1816 = vld [vmem:[#allocation4 + $0x30] sm:$0xff]
      %v1817 = vld [vmem:[#allocation4 + $0x38] sm:$0xff]
      %v1818 = vld [vmem:[#allocation4 + $0x40] sm:$0xff]
      %v1819 = vld [vmem:[#allocation4 + $0x48] sm:$0xff]
      %v1820 = vld [vmem:[#allocation4 + $0x50] sm:$0xff]
      %v1821 = vld [vmem:[#allocation4 + $0x58] sm:$0xff]
      %v1822 = vld [vmem:[#allocation4 + $0x60] sm:$0xff]
      %v1823 = vld [vmem:[#allocation4 + $0x68] sm:$0xff]
      %v1824 = vld [vmem:[#allocation4 + $0x70] sm:$0xff]
      %v1825 = vld [vmem:[#allocation4 + $0x78] sm:$0xff]
      %v1826 = vld [vmem:[#allocation4 + $0x80] sm:$0xff]
      %v1827 = vld [vmem:[#allocation4 + $0x88] sm:$0xff]
      %v1828 = vld [vmem:[#allocation4 + $0x90] sm:$0xff]
      %v1829 = vld [vmem:[#allocation4 + $0x98] sm:$0xff]
      %v1830 = vld [vmem:[#allocation4 + $0xa0] sm:$0xff]
      %v1831 = vld [vmem:[#allocation4 + $0xa8] sm:$0xff]
      %v1832 = vld [vmem:[#allocation4 + $0xb0] sm:$0xff]
      %v1833 = vld [vmem:[#allocation4 + $0xb8] sm:$0xff]
      %v1834 = vld [vmem:[#allocation4 + $0xc0] sm:$0xff]
      %v1835 = vld [vmem:[#allocation4 + $0xc8] sm:$0xff]
      %v1836 = vld [vmem:[#allocation4 + $0xd0] sm:$0xff]
      %v1837 = vld [vmem:[#allocation4 + $0xd8] sm:$0xff]
      %v1838 = vld [vmem:[#allocation4 + $0xe0] sm:$0xff]
      %v1839 = vld [vmem:[#allocation4 + $0xe8] sm:$0xff]
      %v1840 = vld [vmem:[#allocation4 + $0xf0] sm:$0xff]
      %v1841 = vld [vmem:[#allocation4 + $0xf8] sm:$0xff]
      %v1842 = vld [vmem:[#allocation4 + $0x100] sm:$0xff]
      %v1843 = vld [vmem:[#allocation4 + $0x108] sm:$0xff]
      %v1844 = vld [vmem:[#allocation4 + $0x110] sm:$0xff]
      %v1845 = vld [vmem:[#allocation4 + $0x118] sm:$0xff]
      %v1846 = vld [vmem:[#allocation4 + $0x120] sm:$0xff]
      %v1847 = vld [vmem:[#allocation4 + $0x128] sm:$0xff]
      %v1848 = vld [vmem:[#allocation4 + $0x130] sm:$0xff]
      %v1849 = vld [vmem:[#allocation4 + $0x138] sm:$0xff]
      %v1850 = vld [vmem:[#allocation4 + $0x140] sm:$0xff]
      %v1851 = vld [vmem:[#allocation4 + $0x148] sm:$0xff]
      %v1852 = vld [vmem:[#allocation4 + $0x150] sm:$0xff]
      %v1853 = vld [vmem:[#allocation4 + $0x158] sm:$0xff]
      %v1854 = vld [vmem:[#allocation4 + $0x160] sm:$0xff]
      %v1855 = vld [vmem:[#allocation4 + $0x168] sm:$0xff]
      %v1856 = vld [vmem:[#allocation4 + $0x170] sm:$0xff]
      %v1857 = vld [vmem:[#allocation4 + $0x178] sm:$0xff]
      %v1858 = vld [vmem:[#allocation4 + $0x180] sm:$0xff]
      %v1859 = vld [vmem:[#allocation4 + $0x188] sm:$0xff]
      %v1860 = vld [vmem:[#allocation4 + $0x190] sm:$0xff]
      %v1861 = vld [vmem:[#allocation4 + $0x198] sm:$0xff]
      %v1862 = vld [vmem:[#allocation4 + $0x1a0] sm:$0xff]
      %v1863 = vld [vmem:[#allocation4 + $0x1a8] sm:$0xff]
      %v1864 = vld [vmem:[#allocation4 + $0x1b0] sm:$0xff]
      %v1865 = vld [vmem:[#allocation4 + $0x1b8] sm:$0xff]
      %v1866 = vld [vmem:[#allocation4 + $0x1c0] sm:$0xff]
      %v1867 = vld [vmem:[#allocation4 + $0x1c8] sm:$0xff]
      %v1868 = vld [vmem:[#allocation4 + $0x1d0] sm:$0xff]
      %v1869 = vld [vmem:[#allocation4 + $0x1d8] sm:$0xff]
      %v1870 = vld [vmem:[#allocation4 + $0x1e0] sm:$0xff]
      %v1871 = vld [vmem:[#allocation4 + $0x1e8] sm:$0xff]
      %v1872 = vld [vmem:[#allocation4 + $0x1f0] sm:$0xff]
      %v1873 = vld [vmem:[#allocation4 + $0x1f8] sm:$0xff]
      %v1874 = vld [vmem:[#allocation4 + $0x200] sm:$0xff]
      %v1875 = vld [vmem:[#allocation4 + $0x208] sm:$0xff]
      %v1876 = vld [vmem:[#allocation4 + $0x210] sm:$0xff]
      %v1877 = vld [vmem:[#allocation4 + $0x218] sm:$0xff]
      %v1878 = vld [vmem:[#allocation4 + $0x220] sm:$0xff]
      %v1879 = vld [vmem:[#allocation4 + $0x228] sm:$0xff]
      %v1880 = vld [vmem:[#allocation4 + $0x230] sm:$0xff]
      %v1881 = vld [vmem:[#allocation4 + $0x238] sm:$0xff]
      %v1882 = vld [vmem:[#allocation4 + $0x240] sm:$0xff]
      %v1883 = vld [vmem:[#allocation4 + $0x248] sm:$0xff]
      %v1884 = vld [vmem:[#allocation4 + $0x250] sm:$0xff]
      %v1885 = vld [vmem:[#allocation4 + $0x258] sm:$0xff]
      %v1886 = vld [vmem:[#allocation4 + $0x260] sm:$0xff]
      %v1887 = vld [vmem:[#allocation4 + $0x268] sm:$0xff]
      %v1888 = vld [vmem:[#allocation4 + $0x270] sm:$0xff]
      %v1889 = vld [vmem:[#allocation4 + $0x278] sm:$0xff]
      %v1890 = vld [vmem:[#allocation4 + $0x280] sm:$0xff]
      %v1891 = vld [vmem:[#allocation4 + $0x288] sm:$0xff]
      %v1892 = vld [vmem:[#allocation4 + $0x290] sm:$0xff]
      %v1893 = vld [vmem:[#allocation4 + $0x298] sm:$0xff]
      %v1894 = vld [vmem:[#allocation4 + $0x2a0] sm:$0xff]
      %v1895 = vld [vmem:[#allocation4 + $0x2a8] sm:$0xff]
      %v1896 = vld [vmem:[#allocation4 + $0x2b0] sm:$0xff]
      %v1897 = vld [vmem:[#allocation4 + $0x2b8] sm:$0xff]
      %v1898 = vld [vmem:[#allocation4 + $0x2c0] sm:$0xff]
      %v1899 = vld [vmem:[#allocation4 + $0x2c8] sm:$0xff]
      %v1900 = vld [vmem:[#allocation4 + $0x2d0] sm:$0xff]
      %v1901 = vld [vmem:[#allocation4 + $0x2d8] sm:$0xff]
      %v1902 = vld [vmem:[#allocation4 + $0x2e0] sm:$0xff]
      %v1903 = vld [vmem:[#allocation4 + $0x2e8] sm:$0xff]
      %v1904 = vld [vmem:[#allocation4 + $0x2f0] sm:$0xff]
      %v1905 = vld [vmem:[#allocation4 + $0x2f8] sm:$0xff]
      %v1906 = vld [vmem:[%s2] sm:$0xff]
      %v1907 = vld [vmem:[%s2 + $0x8] sm:$0xff]
      %v1908 = vld [vmem:[%s2 + $0x10] sm:$0xff]
      %v1909 = vld [vmem:[%s2 + $0x18] sm:$0xff]
      %v1910 = vld [vmem:[%s2 + $0x20] sm:$0xff]
      %v1911 = vld [vmem:[%s2 + $0x28] sm:$0xff]
      %v1912 = vld [vmem:[%s2 + $0x30] sm:$0xff]
      %v1913 = vld [vmem:[%s2 + $0x38] sm:$0xff]
      %v1914 = vld [vmem:[%s2 + $0x40] sm:$0xff]
      %v1915 = vld [vmem:[%s2 + $0x48] sm:$0xff]
      %v1916 = vld [vmem:[%s2 + $0x50] sm:$0xff]
      %v1917 = vld [vmem:[%s2 + $0x58] sm:$0xff]
      %v1918 = vld [vmem:[%s2 + $0x60] sm:$0xff]
      %v1919 = vld [vmem:[%s2 + $0x68] sm:$0xff]
      %v1920 = vld [vmem:[%s2 + $0x70] sm:$0xff]
      %v1921 = vld [vmem:[%s2 + $0x78] sm:$0xff]
      %v1922 = vld [vmem:[%s2 + $0x80] sm:$0xff]
      %v1923 = vld [vmem:[%s2 + $0x88] sm:$0xff]
      %v1924 = vld [vmem:[%s2 + $0x90] sm:$0xff]
      %v1925 = vld [vmem:[%s2 + $0x98] sm:$0xff]
      %v1926 = vld [vmem:[%s2 + $0xa0] sm:$0xff]
      %v1927 = vld [vmem:[%s2 + $0xa8] sm:$0xff]
      %v1928 = vld [vmem:[%s2 + $0xb0] sm:$0xff]
      %v1929 = vld [vmem:[%s2 + $0xb8] sm:$0xff]
      %v1930 = vld [vmem:[%s2 + $0xc0] sm:$0xff]
      %v1931 = vld [vmem:[%s2 + $0xc8] sm:$0xff]
      %v1932 = vld [vmem:[%s2 + $0xd0] sm:$0xff]
      %v1933 = vld [vmem:[%s2 + $0xd8] sm:$0xff]
      %v1934 = vld [vmem:[%s2 + $0xe0] sm:$0xff]
      %v1935 = vld [vmem:[%s2 + $0xe8] sm:$0xff]
      %v1936 = vld [vmem:[%s2 + $0xf0] sm:$0xff]
      %v1937 = vld [vmem:[%s2 + $0xf8] sm:$0xff]
      %v1938 = vld [vmem:[%s2 + $0x100] sm:$0xff]
      %v1939 = vld [vmem:[%s2 + $0x108] sm:$0xff]
      %v1940 = vld [vmem:[%s2 + $0x110] sm:$0xff]
      %v1941 = vld [vmem:[%s2 + $0x118] sm:$0xff]
      %v1942 = vld [vmem:[%s3] sm:$0x1]
      %v1944 = vperm.slane %v1942, 0
      %v1947 = vsel %vm312, %v1812, 0
      %v1950 = vsel %vm312, %v1815, 0
      %v1953 = vsel %vm312, %v1818, 0
      %v1956 = vsel %vm312, %v1821, 0
      %v1959 = vsel %vm312, %v1824, 0
      %v1962 = vsel %vm312, %v1827, 0
      %v1965 = vsel %vm312, %v1830, 0
      %v1968 = vsel %vm312, %v1833, 0
      %v1971 = vsel %vm312, %v1836, 0
      %v1974 = vsel %vm312, %v1839, 0
      %v1977 = vsel %vm312, %v1842, 0
      %v1980 = vsel %vm312, %v1845, 0
      %v1983 = vsel %vm312, %v1848, 0
      %v1986 = vsel %vm312, %v1851, 0
      %v1989 = vsel %vm312, %v1854, 0
      %v1992 = vsel %vm312, %v1857, 0
      %v1995 = vsel %vm312, %v1860, 0
      %v1998 = vsel %vm312, %v1863, 0
      %v2001 = vsel %vm312, %v1866, 0
      %v2004 = vsel %vm312, %v1869, 0
      %v2007 = vsel %vm312, %v1872, 0
      %v2010 = vsel %vm312, %v1875, 0
      %v2013 = vsel %vm312, %v1878, 0
      %v2016 = vsel %vm312, %v1881, 0
      %v2019 = vsel %vm312, %v1884, 0
      %v2022 = vsel %vm312, %v1887, 0
      %v2025 = vsel %vm312, %v1890, 0
      %v2028 = vsel %vm312, %v1893, 0
      %v2031 = vsel %vm312, %v1896, 0
      %v2034 = vsel %vm312, %v1899, 0
      %v2037 = vsel %vm312, %v1902, 0
      %v2040 = vsel %vm312, %v1905, 0
      %2042 = vmatpush.msra.mxu0 %v1921
      %2043 = vmatpush.msra.mxu0 %v1920
      %2044 = vmatpush.msra.mxu0 %v1919
      %2045 = vmatpush.msra.mxu0 %v1918
      %2046 = vmatpush.msra.mxu0 %v1917
      %2047 = vmatpush.msra.mxu0 %v1916
      %2048 = vmatpush.msra.mxu0 %v1915
      %2049 = vmatpush.msra.mxu0 %v1914
      %2050 = vmatpush.msra.mxu0 %v1913
      %2051 = vmatpush.msra.mxu0 %v1912
      %2052 = vmatpush.msra.mxu0 %v1911
      %2053 = vmatpush.msra.mxu0 %v1910
      %2054 = vmatpush.msra.mxu0 %v1909
      %2055 = vmatpush.msra.mxu0 %v1908
      %2056 = vmatpush.msra.mxu0 %v1907
      %2057 = vmatpush.msra.mxu0 %v1906
      %2058 = vmatmul.f32.gmra.mxu0 %v1810
      %v2059 = vpop.f32.mrf.mxu0
      %v2060 = vadd.f32 %v1944, %v2059
      %2061 = vmatmul.f32.gmra.mxu0 %v1813
      %v2062 = vpop.f32.mrf.mxu0
      %v2063 = vadd.f32 %v1944, %v2062
      %2064 = vmatmul.f32.gmra.mxu0 %v1816
      %v2065 = vpop.f32.mrf.mxu0
      %v2066 = vadd.f32 %v1944, %v2065
      %2067 = vmatmul.f32.gmra.mxu0 %v1819
      %v2068 = vpop.f32.mrf.mxu0
      %v2069 = vadd.f32 %v1944, %v2068
      %2070 = vmatmul.f32.gmra.mxu0 %v1822
      %v2071 = vpop.f32.mrf.mxu0
      %v2072 = vadd.f32 %v1944, %v2071
      %2073 = vmatmul.f32.gmra.mxu0 %v1825
      %v2074 = vpop.f32.mrf.mxu0
      %v2075 = vadd.f32 %v1944, %v2074
      %2076 = vmatmul.f32.gmra.mxu0 %v1828
      %v2077 = vpop.f32.mrf.mxu0
      %v2078 = vadd.f32 %v1944, %v2077
      %2079 = vmatmul.f32.gmra.mxu0 %v1831
      %v2080 = vpop.f32.mrf.mxu0
      %v2081 = vadd.f32 %v1944, %v2080
      %2082 = vmatmul.f32.gmra.mxu0 %v1834
      %v2083 = vpop.f32.mrf.mxu0
      %v2084 = vadd.f32 %v1944, %v2083
      %2085 = vmatmul.f32.gmra.mxu0 %v1837
      %v2086 = vpop.f32.mrf.mxu0
      %v2087 = vadd.f32 %v1944, %v2086
      %2088 = vmatmul.f32.gmra.mxu0 %v1840
      %v2089 = vpop.f32.mrf.mxu0
      %v2090 = vadd.f32 %v1944, %v2089
      %2091 = vmatmul.f32.gmra.mxu0 %v1843
      %v2092 = vpop.f32.mrf.mxu0
      %v2093 = vadd.f32 %v1944, %v2092
      %2094 = vmatmul.f32.gmra.mxu0 %v1846
      %v2095 = vpop.f32.mrf.mxu0
      %v2096 = vadd.f32 %v1944, %v2095
      %2097 = vmatmul.f32.gmra.mxu0 %v1849
      %v2098 = vpop.f32.mrf.mxu0
      %v2099 = vadd.f32 %v1944, %v2098
      %2100 = vmatmul.f32.gmra.mxu0 %v1852
      %v2101 = vpop.f32.mrf.mxu0
      %v2102 = vadd.f32 %v1944, %v2101
      %2103 = vmatmul.f32.gmra.mxu0 %v1855
      %v2104 = vpop.f32.mrf.mxu0
      %v2105 = vadd.f32 %v1944, %v2104
      %2106 = vmatmul.f32.gmra.mxu0 %v1858
      %v2107 = vpop.f32.mrf.mxu0
      %v2108 = vadd.f32 %v1944, %v2107
      %2109 = vmatmul.f32.gmra.mxu0 %v1861
      %v2110 = vpop.f32.mrf.mxu0
      %v2111 = vadd.f32 %v1944, %v2110
      %2112 = vmatmul.f32.gmra.mxu0 %v1864
      %v2113 = vpop.f32.mrf.mxu0
      %v2114 = vadd.f32 %v1944, %v2113
      %2115 = vmatmul.f32.gmra.mxu0 %v1867
      %v2116 = vpop.f32.mrf.mxu0
      %v2117 = vadd.f32 %v1944, %v2116
      %2118 = vmatmul.f32.gmra.mxu0 %v1870
      %v2119 = vpop.f32.mrf.mxu0
      %v2120 = vadd.f32 %v1944, %v2119
      %2121 = vmatmul.f32.gmra.mxu0 %v1873
      %v2122 = vpop.f32.mrf.mxu0
      %v2123 = vadd.f32 %v1944, %v2122
      %2124 = vmatmul.f32.gmra.mxu0 %v1876
      %v2125 = vpop.f32.mrf.mxu0
      %v2126 = vadd.f32 %v1944, %v2125
      %2127 = vmatmul.f32.gmra.mxu0 %v1879
      %v2128 = vpop.f32.mrf.mxu0
      %v2129 = vadd.f32 %v1944, %v2128
      %2130 = vmatmul.f32.gmra.mxu0 %v1882
      %v2131 = vpop.f32.mrf.mxu0
      %v2132 = vadd.f32 %v1944, %v2131
      %2133 = vmatmul.f32.gmra.mxu0 %v1885
      %v2134 = vpop.f32.mrf.mxu0
      %v2135 = vadd.f32 %v1944, %v2134
      %2136 = vmatmul.f32.gmra.mxu0 %v1888
      %v2137 = vpop.f32.mrf.mxu0
      %v2138 = vadd.f32 %v1944, %v2137
      %2139 = vmatmul.f32.gmra.mxu0 %v1891
      %v2140 = vpop.f32.mrf.mxu0
      %v2141 = vadd.f32 %v1944, %v2140
      %2142 = vmatmul.f32.gmra.mxu0 %v1894
      %v2143 = vpop.f32.mrf.mxu0
      %v2144 = vadd.f32 %v1944, %v2143
      %2145 = vmatmul.f32.gmra.mxu0 %v1897
      %v2146 = vpop.f32.mrf.mxu0
      %v2147 = vadd.f32 %v1944, %v2146
      %2148 = vmatmul.f32.gmra.mxu0 %v1900
      %v2149 = vpop.f32.mrf.mxu0
      %v2150 = vadd.f32 %v1944, %v2149
      %2151 = vmatmul.f32.gmra.mxu0 %v1903
      %v2152 = vpop.f32.mrf.mxu0
      %v2153 = vadd.f32 %v1944, %v2152
      %2154 = vdwg.mxu0
      %2155 = vmatpush.msra.mxu0 %v1937
      %2156 = vmatpush.msra.mxu0 %v1936
      %2157 = vmatpush.msra.mxu0 %v1935
      %2158 = vmatpush.msra.mxu0 %v1934
      %2159 = vmatpush.msra.mxu0 %v1933
      %2160 = vmatpush.msra.mxu0 %v1932
      %2161 = vmatpush.msra.mxu0 %v1931
      %2162 = vmatpush.msra.mxu0 %v1930
      %2163 = vmatpush.msra.mxu0 %v1929
      %2164 = vmatpush.msra.mxu0 %v1928
      %2165 = vmatpush.msra.mxu0 %v1927
      %2166 = vmatpush.msra.mxu0 %v1926
      %2167 = vmatpush.msra.mxu0 %v1925
      %2168 = vmatpush.msra.mxu0 %v1924
      %2169 = vmatpush.msra.mxu0 %v1923
      %2170 = vmatpush.msra.mxu0 %v1922
      %2171 = vmatmul.f32.gmra.mxu0 %v1811
      %v2172 = vpop.f32.mrf.mxu0
      %v2173 = vadd.f32 %v2060, %v2172
      %2174 = vmatmul.f32.gmra.mxu0 %v1814
      %v2175 = vpop.f32.mrf.mxu0
      %v2176 = vadd.f32 %v2063, %v2175
      %2177 = vmatmul.f32.gmra.mxu0 %v1817
      %v2178 = vpop.f32.mrf.mxu0
      %v2179 = vadd.f32 %v2066, %v2178
      %2180 = vmatmul.f32.gmra.mxu0 %v1820
      %v2181 = vpop.f32.mrf.mxu0
      %v2182 = vadd.f32 %v2069, %v2181
      %2183 = vmatmul.f32.gmra.mxu0 %v1823
      %v2184 = vpop.f32.mrf.mxu0
      %v2185 = vadd.f32 %v2072, %v2184
      %2186 = vmatmul.f32.gmra.mxu0 %v1826
      %v2187 = vpop.f32.mrf.mxu0
      %v2188 = vadd.f32 %v2075, %v2187
      %2189 = vmatmul.f32.gmra.mxu0 %v1829
      %v2190 = vpop.f32.mrf.mxu0
      %v2191 = vadd.f32 %v2078, %v2190
      %2192 = vmatmul.f32.gmra.mxu0 %v1832
      %v2193 = vpop.f32.mrf.mxu0
      %v2194 = vadd.f32 %v2081, %v2193
      %2195 = vmatmul.f32.gmra.mxu0 %v1835
      %v2196 = vpop.f32.mrf.mxu0
      %v2197 = vadd.f32 %v2084, %v2196
      %2198 = vmatmul.f32.gmra.mxu0 %v1838
      %v2199 = vpop.f32.mrf.mxu0
      %v2200 = vadd.f32 %v2087, %v2199
      %2201 = vmatmul.f32.gmra.mxu0 %v1841
      %v2202 = vpop.f32.mrf.mxu0
      %v2203 = vadd.f32 %v2090, %v2202
      %2204 = vmatmul.f32.gmra.mxu0 %v1844
      %v2205 = vpop.f32.mrf.mxu0
      %v2206 = vadd.f32 %v2093, %v2205
      %2207 = vmatmul.f32.gmra.mxu0 %v1847
      %v2208 = vpop.f32.mrf.mxu0
      %v2209 = vadd.f32 %v2096, %v2208
      %2210 = vmatmul.f32.gmra.mxu0 %v1850
      %v2211 = vpop.f32.mrf.mxu0
      %v2212 = vadd.f32 %v2099, %v2211
      %2213 = vmatmul.f32.gmra.mxu0 %v1853
      %v2214 = vpop.f32.mrf.mxu0
      %v2215 = vadd.f32 %v2102, %v2214
      %2216 = vmatmul.f32.gmra.mxu0 %v1856
      %v2217 = vpop.f32.mrf.mxu0
      %v2218 = vadd.f32 %v2105, %v2217
      %2219 = vmatmul.f32.gmra.mxu0 %v1859
      %v2220 = vpop.f32.mrf.mxu0
      %v2221 = vadd.f32 %v2108, %v2220
      %2222 = vmatmul.f32.gmra.mxu0 %v1862
      %v2223 = vpop.f32.mrf.mxu0
      %v2224 = vadd.f32 %v2111, %v2223
      %2225 = vmatmul.f32.gmra.mxu0 %v1865
      %v2226 = vpop.f32.mrf.mxu0
      %v2227 = vadd.f32 %v2114, %v2226
      %2228 = vmatmul.f32.gmra.mxu0 %v1868
      %v2229 = vpop.f32.mrf.mxu0
      %v2230 = vadd.f32 %v2117, %v2229
      %2231 = vmatmul.f32.gmra.mxu0 %v1871
      %v2232 = vpop.f32.mrf.mxu0
      %v2233 = vadd.f32 %v2120, %v2232
      %2234 = vmatmul.f32.gmra.mxu0 %v1874
      %v2235 = vpop.f32.mrf.mxu0
      %v2236 = vadd.f32 %v2123, %v2235
      %2237 = vmatmul.f32.gmra.mxu0 %v1877
      %v2238 = vpop.f32.mrf.mxu0
      %v2239 = vadd.f32 %v2126, %v2238
      %2240 = vmatmul.f32.gmra.mxu0 %v1880
      %v2241 = vpop.f32.mrf.mxu0
      %v2242 = vadd.f32 %v2129, %v2241
      %2243 = vmatmul.f32.gmra.mxu0 %v1883
      %v2244 = vpop.f32.mrf.mxu0
      %v2245 = vadd.f32 %v2132, %v2244
      %2246 = vmatmul.f32.gmra.mxu0 %v1886
      %v2247 = vpop.f32.mrf.mxu0
      %v2248 = vadd.f32 %v2135, %v2247
      %2249 = vmatmul.f32.gmra.mxu0 %v1889
      %v2250 = vpop.f32.mrf.mxu0
      %v2251 = vadd.f32 %v2138, %v2250
      %2252 = vmatmul.f32.gmra.mxu0 %v1892
      %v2253 = vpop.f32.mrf.mxu0
      %v2254 = vadd.f32 %v2141, %v2253
      %2255 = vmatmul.f32.gmra.mxu0 %v1895
      %v2256 = vpop.f32.mrf.mxu0
      %v2257 = vadd.f32 %v2144, %v2256
      %2258 = vmatmul.f32.gmra.mxu0 %v1898
      %v2259 = vpop.f32.mrf.mxu0
      %v2260 = vadd.f32 %v2147, %v2259
      %2261 = vmatmul.f32.gmra.mxu0 %v1901
      %v2262 = vpop.f32.mrf.mxu0
      %v2263 = vadd.f32 %v2150, %v2262
      %2264 = vmatmul.f32.gmra.mxu0 %v1904
      %v2265 = vpop.f32.mrf.mxu0
      %v2266 = vadd.f32 %v2153, %v2265
      %2267 = vdwg.mxu0
      %2268 = vmatpush.msra.mxu0 0.0
      %2269 = vmatpush.msra.mxu0 0.0
      %2270 = vmatpush.msra.mxu0 0.0
      %2271 = vmatpush.msra.mxu0 0.0
      %2272 = vmatpush.msra.mxu0 0.0
      %2273 = vmatpush.msra.mxu0 0.0
      %2274 = vmatpush.msra.mxu0 0.0
      %2275 = vmatpush.msra.mxu0 0.0
      %2276 = vmatpush.msra.mxu0 0.0
      %2277 = vmatpush.msra.mxu0 0.0
      %2278 = vmatpush.msra.mxu0 0.0
      %2279 = vmatpush.msra.mxu0 0.0
      %2280 = vmatpush.msra.mxu0 %v1941
      %2281 = vmatpush.msra.mxu0 %v1940
      %2282 = vmatpush.msra.mxu0 %v1939
      %2283 = vmatpush.msra.mxu0 %v1938
      %2284 = vmatmul.f32.gmra.mxu0 %v1947
      %v2285 = vpop.f32.mrf.mxu0
      %v2286 = vadd.f32 %v2173, %v2285
      %2287 = vmatmul.f32.gmra.mxu0 %v1950
      %v2288 = vpop.f32.mrf.mxu0
      %v2289 = vadd.f32 %v2176, %v2288
      %2290 = vmatmul.f32.gmra.mxu0 %v1953
      %v2291 = vpop.f32.mrf.mxu0
      %v2292 = vadd.f32 %v2179, %v2291
      %2293 = vmatmul.f32.gmra.mxu0 %v1956
      %v2294 = vpop.f32.mrf.mxu0
      %v2295 = vadd.f32 %v2182, %v2294
      %2296 = vmatmul.f32.gmra.mxu0 %v1959
      %v2297 = vpop.f32.mrf.mxu0
      %v2298 = vadd.f32 %v2185, %v2297
      %2299 = vmatmul.f32.gmra.mxu0 %v1962
      %v2300 = vpop.f32.mrf.mxu0
      %v2301 = vadd.f32 %v2188, %v2300
      %2302 = vmatmul.f32.gmra.mxu0 %v1965
      %v2303 = vpop.f32.mrf.mxu0
      %v2304 = vadd.f32 %v2191, %v2303
      %2305 = vmatmul.f32.gmra.mxu0 %v1968
      %v2306 = vpop.f32.mrf.mxu0
      %v2307 = vadd.f32 %v2194, %v2306
      %2308 = vmatmul.f32.gmra.mxu0 %v1971
      %v2309 = vpop.f32.mrf.mxu0
      %v2310 = vadd.f32 %v2197, %v2309
      %2311 = vmatmul.f32.gmra.mxu0 %v1974
      %v2312 = vpop.f32.mrf.mxu0
      %v2313 = vadd.f32 %v2200, %v2312
      %2314 = vmatmul.f32.gmra.mxu0 %v1977
      %v2315 = vpop.f32.mrf.mxu0
      %v2316 = vadd.f32 %v2203, %v2315
      %2317 = vmatmul.f32.gmra.mxu0 %v1980
      %v2318 = vpop.f32.mrf.mxu0
      %v2319 = vadd.f32 %v2206, %v2318
      %2320 = vmatmul.f32.gmra.mxu0 %v1983
      %v2321 = vpop.f32.mrf.mxu0
      %v2322 = vadd.f32 %v2209, %v2321
      %2323 = vmatmul.f32.gmra.mxu0 %v1986
      %v2324 = vpop.f32.mrf.mxu0
      %v2325 = vadd.f32 %v2212, %v2324
      %2326 = vmatmul.f32.gmra.mxu0 %v1989
      %v2327 = vpop.f32.mrf.mxu0
      %v2328 = vadd.f32 %v2215, %v2327
      %2329 = vmatmul.f32.gmra.mxu0 %v1992
      %v2330 = vpop.f32.mrf.mxu0
      %v2331 = vadd.f32 %v2218, %v2330
      %2332 = vmatmul.f32.gmra.mxu0 %v1995
      %v2333 = vpop.f32.mrf.mxu0
      %v2334 = vadd.f32 %v2221, %v2333
      %2335 = vmatmul.f32.gmra.mxu0 %v1998
      %v2336 = vpop.f32.mrf.mxu0
      %v2337 = vadd.f32 %v2224, %v2336
      %2338 = vmatmul.f32.gmra.mxu0 %v2001
      %v2339 = vpop.f32.mrf.mxu0
      %v2340 = vadd.f32 %v2227, %v2339
      %2341 = vmatmul.f32.gmra.mxu0 %v2004
      %v2342 = vpop.f32.mrf.mxu0
      %v2343 = vadd.f32 %v2230, %v2342
      %2344 = vmatmul.f32.gmra.mxu0 %v2007
      %v2345 = vpop.f32.mrf.mxu0
      %v2346 = vadd.f32 %v2233, %v2345
      %2347 = vmatmul.f32.gmra.mxu0 %v2010
      %v2348 = vpop.f32.mrf.mxu0
      %v2349 = vadd.f32 %v2236, %v2348
      %2350 = vmatmul.f32.gmra.mxu0 %v2013
      %v2351 = vpop.f32.mrf.mxu0
      %v2352 = vadd.f32 %v2239, %v2351
      %2353 = vmatmul.f32.gmra.mxu0 %v2016
      %v2354 = vpop.f32.mrf.mxu0
      %v2355 = vadd.f32 %v2242, %v2354
      %2356 = vmatmul.f32.gmra.mxu0 %v2019
      %v2357 = vpop.f32.mrf.mxu0
      %v2358 = vadd.f32 %v2245, %v2357
      %2359 = vmatmul.f32.gmra.mxu0 %v2022
      %v2360 = vpop.f32.mrf.mxu0
      %v2361 = vadd.f32 %v2248, %v2360
      %2362 = vmatmul.f32.gmra.mxu0 %v2025
      %v2363 = vpop.f32.mrf.mxu0
      %v2364 = vadd.f32 %v2251, %v2363
      %2365 = vmatmul.f32.gmra.mxu0 %v2028
      %v2366 = vpop.f32.mrf.mxu0
      %v2367 = vadd.f32 %v2254, %v2366
      %2368 = vmatmul.f32.gmra.mxu0 %v2031
      %v2369 = vpop.f32.mrf.mxu0
      %v2370 = vadd.f32 %v2257, %v2369
      %2371 = vmatmul.f32.gmra.mxu0 %v2034
      %v2372 = vpop.f32.mrf.mxu0
      %v2373 = vadd.f32 %v2260, %v2372
      %2374 = vmatmul.f32.gmra.mxu0 %v2037
      %v2375 = vpop.f32.mrf.mxu0
      %v2376 = vadd.f32 %v2263, %v2375
      %2377 = vmatmul.f32.gmra.mxu0 %v2040
      %v2378 = vpop.f32.mrf.mxu0
      %v2379 = vadd.f32 %v2266, %v2378
      %2380 = vdwg.mxu0
      %v2381 = vld [vmem:[%s301] sm:$0xff]
      %v2382 = vld [vmem:[%s301 + $0x8] sm:$0xff]
      %v2383 = vld [vmem:[%s301 + $0x10] sm:$0xff]
      %v2384 = vld [vmem:[%s301 + $0x18] sm:$0xff]
      %v2385 = vld [vmem:[%s301 + $0x20] sm:$0xff]
      %v2386 = vld [vmem:[%s301 + $0x28] sm:$0xff]
      %v2387 = vld [vmem:[%s301 + $0x30] sm:$0xff]
      %v2388 = vld [vmem:[%s301 + $0x38] sm:$0xff]
      %v2389 = vld [vmem:[%s301 + $0x40] sm:$0xff]
      %v2390 = vld [vmem:[%s301 + $0x48] sm:$0xff]
      %v2391 = vld [vmem:[%s301 + $0x50] sm:$0xff]
      %v2392 = vld [vmem:[%s301 + $0x58] sm:$0xff]
      %v2393 = vld [vmem:[%s301 + $0x60] sm:$0xff]
      %v2394 = vld [vmem:[%s301 + $0x68] sm:$0xff]
      %v2395 = vld [vmem:[%s301 + $0x70] sm:$0xff]
      %v2396 = vld [vmem:[%s301 + $0x78] sm:$0xff]
      %v2397 = vld [vmem:[%s301 + $0x80] sm:$0xff]
      %v2398 = vld [vmem:[%s301 + $0x88] sm:$0xff]
      %v2399 = vld [vmem:[%s301 + $0x90] sm:$0xff]
      %v2400 = vld [vmem:[%s301 + $0x98] sm:$0xff]
      %v2401 = vld [vmem:[%s301 + $0xa0] sm:$0xff]
      %v2402 = vld [vmem:[%s301 + $0xa8] sm:$0xff]
      %v2403 = vld [vmem:[%s301 + $0xb0] sm:$0xff]
      %v2404 = vld [vmem:[%s301 + $0xb8] sm:$0xff]
      %v2405 = vld [vmem:[%s301 + $0xc0] sm:$0xff]
      %v2406 = vld [vmem:[%s301 + $0xc8] sm:$0xff]
      %v2407 = vld [vmem:[%s301 + $0xd0] sm:$0xff]
      %v2408 = vld [vmem:[%s301 + $0xd8] sm:$0xff]
      %v2409 = vld [vmem:[%s301 + $0xe0] sm:$0xff]
      %v2410 = vld [vmem:[%s301 + $0xe8] sm:$0xff]
      %v2411 = vld [vmem:[%s301 + $0xf0] sm:$0xff]
      %v2412 = vld [vmem:[%s301 + $0xf8] sm:$0xff]
      %2445 = vrot.lane.b32.xlu0 %v2381, 32
      %v2446 = vpop.permute.xlu0 %2445
      %2447 = vrot.lane.b32.xlu0 %v2382, 32
      %v2448 = vpop.permute.xlu0 %2447
      %2449 = vrot.lane.b32.xlu0 %v2383, 32
      %v2450 = vpop.permute.xlu0 %2449
      %2451 = vrot.lane.b32.xlu0 %v2384, 32
      %v2452 = vpop.permute.xlu0 %2451
      %2453 = vrot.lane.b32.xlu0 %v2385, 32
      %v2454 = vpop.permute.xlu0 %2453
      %2455 = vrot.lane.b32.xlu0 %v2386, 32
      %v2456 = vpop.permute.xlu0 %2455
      %2457 = vrot.lane.b32.xlu0 %v2387, 32
      %v2458 = vpop.permute.xlu0 %2457
      %2459 = vrot.lane.b32.xlu0 %v2388, 32
      %v2460 = vpop.permute.xlu0 %2459
      %2461 = vrot.lane.b32.xlu0 %v2389, 32
      %v2462 = vpop.permute.xlu0 %2461
      %2463 = vrot.lane.b32.xlu0 %v2390, 32
      %v2464 = vpop.permute.xlu0 %2463
      %2465 = vrot.lane.b32.xlu0 %v2391, 32
      %v2466 = vpop.permute.xlu0 %2465
      %2467 = vrot.lane.b32.xlu0 %v2392, 32
      %v2468 = vpop.permute.xlu0 %2467
      %2469 = vrot.lane.b32.xlu0 %v2393, 32
      %v2470 = vpop.permute.xlu0 %2469
      %2471 = vrot.lane.b32.xlu0 %v2394, 32
      %v2472 = vpop.permute.xlu0 %2471
      %2473 = vrot.lane.b32.xlu0 %v2395, 32
      %v2474 = vpop.permute.xlu0 %2473
      %2475 = vrot.lane.b32.xlu0 %v2396, 32
      %v2476 = vpop.permute.xlu0 %2475
      %2477 = vrot.lane.b32.xlu0 %v2397, 32
      %v2478 = vpop.permute.xlu0 %2477
      %2479 = vrot.lane.b32.xlu0 %v2398, 32
      %v2480 = vpop.permute.xlu0 %2479
      %2481 = vrot.lane.b32.xlu0 %v2399, 32
      %v2482 = vpop.permute.xlu0 %2481
      %2483 = vrot.lane.b32.xlu0 %v2400, 32
      %v2484 = vpop.permute.xlu0 %2483
      %2485 = vrot.lane.b32.xlu0 %v2401, 32
      %v2486 = vpop.permute.xlu0 %2485
      %2487 = vrot.lane.b32.xlu0 %v2402, 32
      %v2488 = vpop.permute.xlu0 %2487
      %2489 = vrot.lane.b32.xlu0 %v2403, 32
      %v2490 = vpop.permute.xlu0 %2489
      %2491 = vrot.lane.b32.xlu0 %v2404, 32
      %v2492 = vpop.permute.xlu0 %2491
      %2493 = vrot.lane.b32.xlu0 %v2405, 32
      %v2494 = vpop.permute.xlu0 %2493
      %2495 = vrot.lane.b32.xlu0 %v2406, 32
      %v2496 = vpop.permute.xlu0 %2495
      %2497 = vrot.lane.b32.xlu0 %v2407, 32
      %v2498 = vpop.permute.xlu0 %2497
      %2499 = vrot.lane.b32.xlu0 %v2408, 32
      %v2500 = vpop.permute.xlu0 %2499
      %2501 = vrot.lane.b32.xlu0 %v2409, 32
      %v2502 = vpop.permute.xlu0 %2501
      %2503 = vrot.lane.b32.xlu0 %v2410, 32
      %v2504 = vpop.permute.xlu0 %2503
      %2505 = vrot.lane.b32.xlu0 %v2411, 32
      %v2506 = vpop.permute.xlu0 %2505
      %2507 = vrot.lane.b32.xlu0 %v2412, 32
      %v2508 = vpop.permute.xlu0 %2507
      %v2541 = vadd.f32 %v2286, %v2446
      %v2542 = vadd.f32 %v2289, %v2448
      %v2543 = vadd.f32 %v2292, %v2450
      %v2544 = vadd.f32 %v2295, %v2452
      %v2545 = vadd.f32 %v2298, %v2454
      %v2546 = vadd.f32 %v2301, %v2456
      %v2547 = vadd.f32 %v2304, %v2458
      %v2548 = vadd.f32 %v2307, %v2460
      %v2549 = vadd.f32 %v2310, %v2462
      %v2550 = vadd.f32 %v2313, %v2464
      %v2551 = vadd.f32 %v2316, %v2466
      %v2552 = vadd.f32 %v2319, %v2468
      %v2553 = vadd.f32 %v2322, %v2470
      %v2554 = vadd.f32 %v2325, %v2472
      %v2555 = vadd.f32 %v2328, %v2474
      %v2556 = vadd.f32 %v2331, %v2476
      %v2557 = vadd.f32 %v2334, %v2478
      %v2558 = vadd.f32 %v2337, %v2480
      %v2559 = vadd.f32 %v2340, %v2482
      %v2560 = vadd.f32 %v2343, %v2484
      %v2561 = vadd.f32 %v2346, %v2486
      %v2562 = vadd.f32 %v2349, %v2488
      %v2563 = vadd.f32 %v2352, %v2490
      %v2564 = vadd.f32 %v2355, %v2492
      %v2565 = vadd.f32 %v2358, %v2494
      %v2566 = vadd.f32 %v2361, %v2496
      %v2567 = vadd.f32 %v2364, %v2498
      %v2568 = vadd.f32 %v2367, %v2500
      %v2569 = vadd.f32 %v2370, %v2502
      %v2570 = vadd.f32 %v2373, %v2504
      %v2571 = vadd.f32 %v2376, %v2506
      %v2572 = vadd.f32 %v2379, %v2508
      %2605 = vrot.lane.b32.xlu0 %v2541, 96
      %v2606 = vpop.permute.xlu0 %2605
      %2607 = vrot.lane.b32.xlu0 %v2542, 96
      %v2608 = vpop.permute.xlu0 %2607
      %2609 = vrot.lane.b32.xlu0 %v2543, 96
      %v2610 = vpop.permute.xlu0 %2609
      %2611 = vrot.lane.b32.xlu0 %v2544, 96
      %v2612 = vpop.permute.xlu0 %2611
      %2613 = vrot.lane.b32.xlu0 %v2545, 96
      %v2614 = vpop.permute.xlu0 %2613
      %2615 = vrot.lane.b32.xlu0 %v2546, 96
      %v2616 = vpop.permute.xlu0 %2615
      %2617 = vrot.lane.b32.xlu0 %v2547, 96
      %v2618 = vpop.permute.xlu0 %2617
      %2619 = vrot.lane.b32.xlu0 %v2548, 96
      %v2620 = vpop.permute.xlu0 %2619
      %2621 = vrot.lane.b32.xlu0 %v2549, 96
      %v2622 = vpop.permute.xlu0 %2621
      %2623 = vrot.lane.b32.xlu0 %v2550, 96
      %v2624 = vpop.permute.xlu0 %2623
      %2625 = vrot.lane.b32.xlu0 %v2551, 96
      %v2626 = vpop.permute.xlu0 %2625
      %2627 = vrot.lane.b32.xlu0 %v2552, 96
      %v2628 = vpop.permute.xlu0 %2627
      %2629 = vrot.lane.b32.xlu0 %v2553, 96
      %v2630 = vpop.permute.xlu0 %2629
      %2631 = vrot.lane.b32.xlu0 %v2554, 96
      %v2632 = vpop.permute.xlu0 %2631
      %2633 = vrot.lane.b32.xlu0 %v2555, 96
      %v2634 = vpop.permute.xlu0 %2633
      %2635 = vrot.lane.b32.xlu0 %v2556, 96
      %v2636 = vpop.permute.xlu0 %2635
      %2637 = vrot.lane.b32.xlu0 %v2557, 96
      %v2638 = vpop.permute.xlu0 %2637
      %2639 = vrot.lane.b32.xlu0 %v2558, 96
      %v2640 = vpop.permute.xlu0 %2639
      %2641 = vrot.lane.b32.xlu0 %v2559, 96
      %v2642 = vpop.permute.xlu0 %2641
      %2643 = vrot.lane.b32.xlu0 %v2560, 96
      %v2644 = vpop.permute.xlu0 %2643
      %2645 = vrot.lane.b32.xlu0 %v2561, 96
      %v2646 = vpop.permute.xlu0 %2645
      %2647 = vrot.lane.b32.xlu0 %v2562, 96
      %v2648 = vpop.permute.xlu0 %2647
      %2649 = vrot.lane.b32.xlu0 %v2563, 96
      %v2650 = vpop.permute.xlu0 %2649
      %2651 = vrot.lane.b32.xlu0 %v2564, 96
      %v2652 = vpop.permute.xlu0 %2651
      %2653 = vrot.lane.b32.xlu0 %v2565, 96
      %v2654 = vpop.permute.xlu0 %2653
      %2655 = vrot.lane.b32.xlu0 %v2566, 96
      %v2656 = vpop.permute.xlu0 %2655
      %2657 = vrot.lane.b32.xlu0 %v2567, 96
      %v2658 = vpop.permute.xlu0 %2657
      %2659 = vrot.lane.b32.xlu0 %v2568, 96
      %v2660 = vpop.permute.xlu0 %2659
      %2661 = vrot.lane.b32.xlu0 %v2569, 96
      %v2662 = vpop.permute.xlu0 %2661
      %2663 = vrot.lane.b32.xlu0 %v2570, 96
      %v2664 = vpop.permute.xlu0 %2663
      %2665 = vrot.lane.b32.xlu0 %v2571, 96
      %v2666 = vpop.permute.xlu0 %2665
      %2667 = vrot.lane.b32.xlu0 %v2572, 96
      %v2668 = vpop.permute.xlu0 %2667
      %2701 = vst.msk [vmem:[%s311] sm:$0xff] %vm355, %v2606
      %2702 = vst.msk [vmem:[%s311 + $0x8] sm:$0xff] %vm355, %v2608
      %2703 = vst.msk [vmem:[%s311 + $0x10] sm:$0xff] %vm355, %v2610
      %2704 = vst.msk [vmem:[%s311 + $0x18] sm:$0xff] %vm355, %v2612
      %2705 = vst.msk [vmem:[%s311 + $0x20] sm:$0xff] %vm355, %v2614
      %2706 = vst.msk [vmem:[%s311 + $0x28] sm:$0xff] %vm355, %v2616
      %2707 = vst.msk [vmem:[%s311 + $0x30] sm:$0xff] %vm355, %v2618
      %2708 = vst.msk [vmem:[%s311 + $0x38] sm:$0xff] %vm355, %v2620
      %2709 = vst.msk [vmem:[%s311 + $0x40] sm:$0xff] %vm355, %v2622
      %2710 = vst.msk [vmem:[%s311 + $0x48] sm:$0xff] %vm355, %v2624
      %2711 = vst.msk [vmem:[%s311 + $0x50] sm:$0xff] %vm355, %v2626
      %2712 = vst.msk [vmem:[%s311 + $0x58] sm:$0xff] %vm355, %v2628
      %2713 = vst.msk [vmem:[%s311 + $0x60] sm:$0xff] %vm355, %v2630
      %2714 = vst.msk [vmem:[%s311 + $0x68] sm:$0xff] %vm355, %v2632
      %2715 = vst.msk [vmem:[%s311 + $0x70] sm:$0xff] %vm355, %v2634
      %2716 = vst.msk [vmem:[%s311 + $0x78] sm:$0xff] %vm355, %v2636
      %2717 = vst.msk [vmem:[%s311 + $0x80] sm:$0xff] %vm355, %v2638
      %2718 = vst.msk [vmem:[%s311 + $0x88] sm:$0xff] %vm355, %v2640
      %2719 = vst.msk [vmem:[%s311 + $0x90] sm:$0xff] %vm355, %v2642
      %2720 = vst.msk [vmem:[%s311 + $0x98] sm:$0xff] %vm355, %v2644
      %2721 = vst.msk [vmem:[%s311 + $0xa0] sm:$0xff] %vm355, %v2646
      %2722 = vst.msk [vmem:[%s311 + $0xa8] sm:$0xff] %vm355, %v2648
      %2723 = vst.msk [vmem:[%s311 + $0xb0] sm:$0xff] %vm355, %v2650
      %2724 = vst.msk [vmem:[%s311 + $0xb8] sm:$0xff] %vm355, %v2652
      %2725 = vst.msk [vmem:[%s311 + $0xc0] sm:$0xff] %vm355, %v2654
      %2726 = vst.msk [vmem:[%s311 + $0xc8] sm:$0xff] %vm355, %v2656
      %2727 = vst.msk [vmem:[%s311 + $0xd0] sm:$0xff] %vm355, %v2658
      %2728 = vst.msk [vmem:[%s311 + $0xd8] sm:$0xff] %vm355, %v2660
      %2729 = vst.msk [vmem:[%s311 + $0xe0] sm:$0xff] %vm355, %v2662
      %2730 = vst.msk [vmem:[%s311 + $0xe8] sm:$0xff] %vm355, %v2664
      %2731 = vst.msk [vmem:[%s311 + $0xf0] sm:$0xff] %vm355, %v2666
      %2732 = vst.msk [vmem:[%s311 + $0xf8] sm:$0xff] %vm355, %v2668
      %2733 = vst.msk [vmem:[%s364 + $0x1] sm:$0xff] %vm355, %v2606
      %2734 = vst.msk [vmem:[%s364 + $0x9] sm:$0xff] %vm355, %v2608
      %2735 = vst.msk [vmem:[%s364 + $0x19] sm:$0xff] %vm355, %v2610
      %2736 = vst.msk [vmem:[%s364 + $0x21] sm:$0xff] %vm355, %v2612
      %2737 = vst.msk [vmem:[%s364 + $0x31] sm:$0xff] %vm355, %v2614
      %2738 = vst.msk [vmem:[%s364 + $0x39] sm:$0xff] %vm355, %v2616
      %2739 = vst.msk [vmem:[%s364 + $0x49] sm:$0xff] %vm355, %v2618
      %2740 = vst.msk [vmem:[%s364 + $0x51] sm:$0xff] %vm355, %v2620
      %2741 = vst.msk [vmem:[%s364 + $0x61] sm:$0xff] %vm355, %v2622
      %2742 = vst.msk [vmem:[%s364 + $0x69] sm:$0xff] %vm355, %v2624
      %2743 = vst.msk [vmem:[%s364 + $0x79] sm:$0xff] %vm355, %v2626
      %2744 = vst.msk [vmem:[%s364 + $0x81] sm:$0xff] %vm355, %v2628
      %2745 = vst.msk [vmem:[%s364 + $0x91] sm:$0xff] %vm355, %v2630
      %2746 = vst.msk [vmem:[%s364 + $0x99] sm:$0xff] %vm355, %v2632
      %2747 = vst.msk [vmem:[%s364 + $0xa9] sm:$0xff] %vm355, %v2634
      %2748 = vst.msk [vmem:[%s364 + $0xb1] sm:$0xff] %vm355, %v2636
      %2749 = vst.msk [vmem:[%s364 + $0xc1] sm:$0xff] %vm355, %v2638
      %2750 = vst.msk [vmem:[%s364 + $0xc9] sm:$0xff] %vm355, %v2640
      %2751 = vst.msk [vmem:[%s364 + $0xd9] sm:$0xff] %vm355, %v2642
      %2752 = vst.msk [vmem:[%s364 + $0xe1] sm:$0xff] %vm355, %v2644
      %2753 = vst.msk [vmem:[%s364 + $0xf1] sm:$0xff] %vm355, %v2646
      %2754 = vst.msk [vmem:[%s364 + $0xf9] sm:$0xff] %vm355, %v2648
      %2755 = vst.msk [vmem:[%s364 + $0x109] sm:$0xff] %vm355, %v2650
      %2756 = vst.msk [vmem:[%s364 + $0x111] sm:$0xff] %vm355, %v2652
      %2757 = vst.msk [vmem:[%s364 + $0x121] sm:$0xff] %vm355, %v2654
      %2758 = vst.msk [vmem:[%s364 + $0x129] sm:$0xff] %vm355, %v2656
      %2759 = vst.msk [vmem:[%s364 + $0x139] sm:$0xff] %vm355, %v2658
      %2760 = vst.msk [vmem:[%s364 + $0x141] sm:$0xff] %vm355, %v2660
      %2761 = vst.msk [vmem:[%s364 + $0x151] sm:$0xff] %vm355, %v2662
      %2762 = vst.msk [vmem:[%s364 + $0x159] sm:$0xff] %vm355, %v2664
      %2763 = vst.msk [vmem:[%s364 + $0x169] sm:$0xff] %vm355, %v2666
      %2764 = vst.msk [vmem:[%s364 + $0x171] sm:$0xff] %vm355, %v2668
      %v2765 = vld [vmem:[#allocation3] sm:$0xff]
      %v2766 = vld [vmem:[#allocation3 + $0x8] sm:$0xff]
      %v2767 = vld [vmem:[#allocation3 + $0x18] sm:$0xff]
      %v2768 = vld [vmem:[#allocation3 + $0x20] sm:$0xff]
      %v2769 = vld [vmem:[#allocation3 + $0x30] sm:$0xff]
      %v2770 = vld [vmem:[#allocation3 + $0x38] sm:$0xff]
      %v2771 = vld [vmem:[#allocation3 + $0x48] sm:$0xff]
      %v2772 = vld [vmem:[#allocation3 + $0x50] sm:$0xff]
      %v2773 = vld [vmem:[#allocation3 + $0x60] sm:$0xff]
      %v2774 = vld [vmem:[#allocation3 + $0x68] sm:$0xff]
      %v2775 = vld [vmem:[#allocation3 + $0x78] sm:$0xff]
      %v2776 = vld [vmem:[#allocation3 + $0x80] sm:$0xff]
      %v2777 = vld [vmem:[#allocation3 + $0x90] sm:$0xff]
      %v2778 = vld [vmem:[#allocation3 + $0x98] sm:$0xff]
      %v2779 = vld [vmem:[#allocation3 + $0xa8] sm:$0xff]
      %v2780 = vld [vmem:[#allocation3 + $0xb0] sm:$0xff]
      %v2781 = vld [vmem:[#allocation3 + $0xc0] sm:$0xff]
      %v2782 = vld [vmem:[#allocation3 + $0xc8] sm:$0xff]
      %v2783 = vld [vmem:[#allocation3 + $0xd8] sm:$0xff]
      %v2784 = vld [vmem:[#allocation3 + $0xe0] sm:$0xff]
      %v2785 = vld [vmem:[#allocation3 + $0xf0] sm:$0xff]
      %v2786 = vld [vmem:[#allocation3 + $0xf8] sm:$0xff]
      %v2787 = vld [vmem:[#allocation3 + $0x108] sm:$0xff]
      %v2788 = vld [vmem:[#allocation3 + $0x110] sm:$0xff]
      %v2789 = vld [vmem:[#allocation3 + $0x120] sm:$0xff]
      %v2790 = vld [vmem:[#allocation3 + $0x128] sm:$0xff]
      %v2791 = vld [vmem:[#allocation3 + $0x138] sm:$0xff]
      %v2792 = vld [vmem:[#allocation3 + $0x140] sm:$0xff]
      %v2793 = vld [vmem:[#allocation3 + $0x150] sm:$0xff]
      %v2794 = vld [vmem:[#allocation3 + $0x158] sm:$0xff]
      %v2795 = vld [vmem:[#allocation3 + $0x168] sm:$0xff]
      %v2796 = vld [vmem:[#allocation3 + $0x170] sm:$0xff]
      %2797 = vst.msk [vmem:[#allocation5] sm:$0xff] %vm355, %v2765
      %2798 = vst.msk [vmem:[#allocation5 + $0x8] sm:$0xff] %vm355, %v2766
      %2799 = vst.msk [vmem:[#allocation5 + $0x10] sm:$0xff] %vm355, %v2767
      %2800 = vst.msk [vmem:[#allocation5 + $0x18] sm:$0xff] %vm355, %v2768
      %2801 = vst.msk [vmem:[#allocation5 + $0x20] sm:$0xff] %vm355, %v2769
      %2802 = vst.msk [vmem:[#allocation5 + $0x28] sm:$0xff] %vm355, %v2770
      %2803 = vst.msk [vmem:[#allocation5 + $0x30] sm:$0xff] %vm355, %v2771
      %2804 = vst.msk [vmem:[#allocation5 + $0x38] sm:$0xff] %vm355, %v2772
      %2805 = vst.msk [vmem:[#allocation5 + $0x40] sm:$0xff] %vm355, %v2773
      %2806 = vst.msk [vmem:[#allocation5 + $0x48] sm:$0xff] %vm355, %v2774
      %2807 = vst.msk [vmem:[#allocation5 + $0x50] sm:$0xff] %vm355, %v2775
      %2808 = vst.msk [vmem:[#allocation5 + $0x58] sm:$0xff] %vm355, %v2776
      %2809 = vst.msk [vmem:[#allocation5 + $0x60] sm:$0xff] %vm355, %v2777
      %2810 = vst.msk [vmem:[#allocation5 + $0x68] sm:$0xff] %vm355, %v2778
      %2811 = vst.msk [vmem:[#allocation5 + $0x70] sm:$0xff] %vm355, %v2779
      %2812 = vst.msk [vmem:[#allocation5 + $0x78] sm:$0xff] %vm355, %v2780
      %2813 = vst.msk [vmem:[#allocation5 + $0x80] sm:$0xff] %vm355, %v2781
      %2814 = vst.msk [vmem:[#allocation5 + $0x88] sm:$0xff] %vm355, %v2782
      %2815 = vst.msk [vmem:[#allocation5 + $0x90] sm:$0xff] %vm355, %v2783
      %2816 = vst.msk [vmem:[#allocation5 + $0x98] sm:$0xff] %vm355, %v2784
      %2817 = vst.msk [vmem:[#allocation5 + $0xa0] sm:$0xff] %vm355, %v2785
      %2818 = vst.msk [vmem:[#allocation5 + $0xa8] sm:$0xff] %vm355, %v2786
      %2819 = vst.msk [vmem:[#allocation5 + $0xb0] sm:$0xff] %vm355, %v2787
      %2820 = vst.msk [vmem:[#allocation5 + $0xb8] sm:$0xff] %vm355, %v2788
      %2821 = vst.msk [vmem:[#allocation5 + $0xc0] sm:$0xff] %vm355, %v2789
      %2822 = vst.msk [vmem:[#allocation5 + $0xc8] sm:$0xff] %vm355, %v2790
      %2823 = vst.msk [vmem:[#allocation5 + $0xd0] sm:$0xff] %vm355, %v2791
      %2824 = vst.msk [vmem:[#allocation5 + $0xd8] sm:$0xff] %vm355, %v2792
      %2825 = vst.msk [vmem:[#allocation5 + $0xe0] sm:$0xff] %vm355, %v2793
      %2826 = vst.msk [vmem:[#allocation5 + $0xe8] sm:$0xff] %vm355, %v2794
      %2827 = vst.msk [vmem:[#allocation5 + $0xf0] sm:$0xff] %vm355, %v2795
      %2828 = vst.msk [vmem:[#allocation5 + $0xf8] sm:$0xff] %vm355, %v2796
      %v2829 = vld [vmem:[#allocation3 + $0x1] sm:$0xff]
      %v2830 = vld [vmem:[#allocation3 + $0x9] sm:$0xff]
      %v2831 = vld [vmem:[#allocation3 + $0x19] sm:$0xff]
      %v2832 = vld [vmem:[#allocation3 + $0x21] sm:$0xff]
      %v2833 = vld [vmem:[#allocation3 + $0x31] sm:$0xff]
      %v2834 = vld [vmem:[#allocation3 + $0x39] sm:$0xff]
      %v2835 = vld [vmem:[#allocation3 + $0x49] sm:$0xff]
      %v2836 = vld [vmem:[#allocation3 + $0x51] sm:$0xff]
      %v2837 = vld [vmem:[#allocation3 + $0x61] sm:$0xff]
      %v2838 = vld [vmem:[#allocation3 + $0x69] sm:$0xff]
      %v2839 = vld [vmem:[#allocation3 + $0x79] sm:$0xff]
      %v2840 = vld [vmem:[#allocation3 + $0x81] sm:$0xff]
      %v2841 = vld [vmem:[#allocation3 + $0x91] sm:$0xff]
      %v2842 = vld [vmem:[#allocation3 + $0x99] sm:$0xff]
      %v2843 = vld [vmem:[#allocation3 + $0xa9] sm:$0xff]
      %v2844 = vld [vmem:[#allocation3 + $0xb1] sm:$0xff]
      %v2845 = vld [vmem:[#allocation3 + $0xc1] sm:$0xff]
      %v2846 = vld [vmem:[#allocation3 + $0xc9] sm:$0xff]
      %v2847 = vld [vmem:[#allocation3 + $0xd9] sm:$0xff]
      %v2848 = vld [vmem:[#allocation3 + $0xe1] sm:$0xff]
      %v2849 = vld [vmem:[#allocation3 + $0xf1] sm:$0xff]
      %v2850 = vld [vmem:[#allocation3 + $0xf9] sm:$0xff]
      %v2851 = vld [vmem:[#allocation3 + $0x109] sm:$0xff]
      %v2852 = vld [vmem:[#allocation3 + $0x111] sm:$0xff]
      %v2853 = vld [vmem:[#allocation3 + $0x121] sm:$0xff]
      %v2854 = vld [vmem:[#allocation3 + $0x129] sm:$0xff]
      %v2855 = vld [vmem:[#allocation3 + $0x139] sm:$0xff]
      %v2856 = vld [vmem:[#allocation3 + $0x141] sm:$0xff]
      %v2857 = vld [vmem:[#allocation3 + $0x151] sm:$0xff]
      %v2858 = vld [vmem:[#allocation3 + $0x159] sm:$0xff]
      %v2859 = vld [vmem:[#allocation3 + $0x169] sm:$0xff]
      %v2860 = vld [vmem:[#allocation3 + $0x171] sm:$0xff]
      %2893 = vrot.lane.b32.xlu0 %v2829, 3
      %v2894 = vpop.permute.xlu0 %2893
      %2895 = vrot.lane.b32.xlu0 %v2830, 3
      %v2896 = vpop.permute.xlu0 %2895
      %2897 = vrot.lane.b32.xlu0 %v2831, 3
      %v2898 = vpop.permute.xlu0 %2897
      %2899 = vrot.lane.b32.xlu0 %v2832, 3
      %v2900 = vpop.permute.xlu0 %2899
      %2901 = vrot.lane.b32.xlu0 %v2833, 3
      %v2902 = vpop.permute.xlu0 %2901
      %2903 = vrot.lane.b32.xlu0 %v2834, 3
      %v2904 = vpop.permute.xlu0 %2903
      %2905 = vrot.lane.b32.xlu0 %v2835, 3
      %v2906 = vpop.permute.xlu0 %2905
      %2907 = vrot.lane.b32.xlu0 %v2836, 3
      %v2908 = vpop.permute.xlu0 %2907
      %2909 = vrot.lane.b32.xlu0 %v2837, 3
      %v2910 = vpop.permute.xlu0 %2909
      %2911 = vrot.lane.b32.xlu0 %v2838, 3
      %v2912 = vpop.permute.xlu0 %2911
      %2913 = vrot.lane.b32.xlu0 %v2839, 3
      %v2914 = vpop.permute.xlu0 %2913
      %2915 = vrot.lane.b32.xlu0 %v2840, 3
      %v2916 = vpop.permute.xlu0 %2915
      %2917 = vrot.lane.b32.xlu0 %v2841, 3
      %v2918 = vpop.permute.xlu0 %2917
      %2919 = vrot.lane.b32.xlu0 %v2842, 3
      %v2920 = vpop.permute.xlu0 %2919
      %2921 = vrot.lane.b32.xlu0 %v2843, 3
      %v2922 = vpop.permute.xlu0 %2921
      %2923 = vrot.lane.b32.xlu0 %v2844, 3
      %v2924 = vpop.permute.xlu0 %2923
      %2925 = vrot.lane.b32.xlu0 %v2845, 3
      %v2926 = vpop.permute.xlu0 %2925
      %2927 = vrot.lane.b32.xlu0 %v2846, 3
      %v2928 = vpop.permute.xlu0 %2927
      %2929 = vrot.lane.b32.xlu0 %v2847, 3
      %v2930 = vpop.permute.xlu0 %2929
      %2931 = vrot.lane.b32.xlu0 %v2848, 3
      %v2932 = vpop.permute.xlu0 %2931
      %2933 = vrot.lane.b32.xlu0 %v2849, 3
      %v2934 = vpop.permute.xlu0 %2933
      %2935 = vrot.lane.b32.xlu0 %v2850, 3
      %v2936 = vpop.permute.xlu0 %2935
      %2937 = vrot.lane.b32.xlu0 %v2851, 3
      %v2938 = vpop.permute.xlu0 %2937
      %2939 = vrot.lane.b32.xlu0 %v2852, 3
      %v2940 = vpop.permute.xlu0 %2939
      %2941 = vrot.lane.b32.xlu0 %v2853, 3
      %v2942 = vpop.permute.xlu0 %2941
      %2943 = vrot.lane.b32.xlu0 %v2854, 3
      %v2944 = vpop.permute.xlu0 %2943
      %2945 = vrot.lane.b32.xlu0 %v2855, 3
      %v2946 = vpop.permute.xlu0 %2945
      %2947 = vrot.lane.b32.xlu0 %v2856, 3
      %v2948 = vpop.permute.xlu0 %2947
      %2949 = vrot.lane.b32.xlu0 %v2857, 3
      %v2950 = vpop.permute.xlu0 %2949
      %2951 = vrot.lane.b32.xlu0 %v2858, 3
      %v2952 = vpop.permute.xlu0 %2951
      %2953 = vrot.lane.b32.xlu0 %v2859, 3
      %v2954 = vpop.permute.xlu0 %2953
      %2955 = vrot.lane.b32.xlu0 %v2860, 3
      %v2956 = vpop.permute.xlu0 %2955
      %vm2989 = vcmask 48152
      %2990 = vst.msk [vmem:[#allocation5] sm:$0xff] %vm2989, %v2894
      %2991 = vst.msk [vmem:[#allocation5 + $0x8] sm:$0xff] %vm2989, %v2896
      %2992 = vst.msk [vmem:[#allocation5 + $0x10] sm:$0xff] %vm2989, %v2898
      %2993 = vst.msk [vmem:[#allocation5 + $0x18] sm:$0xff] %vm2989, %v2900
      %2994 = vst.msk [vmem:[#allocation5 + $0x20] sm:$0xff] %vm2989, %v2902
      %2995 = vst.msk [vmem:[#allocation5 + $0x28] sm:$0xff] %vm2989, %v2904
      %2996 = vst.msk [vmem:[#allocation5 + $0x30] sm:$0xff] %vm2989, %v2906
      %2997 = vst.msk [vmem:[#allocation5 + $0x38] sm:$0xff] %vm2989, %v2908
      %2998 = vst.msk [vmem:[#allocation5 + $0x40] sm:$0xff] %vm2989, %v2910
      %2999 = vst.msk [vmem:[#allocation5 + $0x48] sm:$0xff] %vm2989, %v2912
      %3000 = vst.msk [vmem:[#allocation5 + $0x50] sm:$0xff] %vm2989, %v2914
      %3001 = vst.msk [vmem:[#allocation5 + $0x58] sm:$0xff] %vm2989, %v2916
      %3002 = vst.msk [vmem:[#allocation5 + $0x60] sm:$0xff] %vm2989, %v2918
      %3003 = vst.msk [vmem:[#allocation5 + $0x68] sm:$0xff] %vm2989, %v2920
      %3004 = vst.msk [vmem:[#allocation5 + $0x70] sm:$0xff] %vm2989, %v2922
      %3005 = vst.msk [vmem:[#allocation5 + $0x78] sm:$0xff] %vm2989, %v2924
      %3006 = vst.msk [vmem:[#allocation5 + $0x80] sm:$0xff] %vm2989, %v2926
      %3007 = vst.msk [vmem:[#allocation5 + $0x88] sm:$0xff] %vm2989, %v2928
      %3008 = vst.msk [vmem:[#allocation5 + $0x90] sm:$0xff] %vm2989, %v2930
      %3009 = vst.msk [vmem:[#allocation5 + $0x98] sm:$0xff] %vm2989, %v2932
      %3010 = vst.msk [vmem:[#allocation5 + $0xa0] sm:$0xff] %vm2989, %v2934
      %3011 = vst.msk [vmem:[#allocation5 + $0xa8] sm:$0xff] %vm2989, %v2936
      %3012 = vst.msk [vmem:[#allocation5 + $0xb0] sm:$0xff] %vm2989, %v2938
      %3013 = vst.msk [vmem:[#allocation5 + $0xb8] sm:$0xff] %vm2989, %v2940
      %3014 = vst.msk [vmem:[#allocation5 + $0xc0] sm:$0xff] %vm2989, %v2942
      %3015 = vst.msk [vmem:[#allocation5 + $0xc8] sm:$0xff] %vm2989, %v2944
      %3016 = vst.msk [vmem:[#allocation5 + $0xd0] sm:$0xff] %vm2989, %v2946
      %3017 = vst.msk [vmem:[#allocation5 + $0xd8] sm:$0xff] %vm2989, %v2948
      %3018 = vst.msk [vmem:[#allocation5 + $0xe0] sm:$0xff] %vm2989, %v2950
      %3019 = vst.msk [vmem:[#allocation5 + $0xe8] sm:$0xff] %vm2989, %v2952
      %3020 = vst.msk [vmem:[#allocation5 + $0xf0] sm:$0xff] %vm2989, %v2954
      %3021 = vst.msk [vmem:[#allocation5 + $0xf8] sm:$0xff] %vm2989, %v2956
      %v3022 = vld [vmem:[#allocation3 + $0x2] sm:$0xff]
      %v3023 = vld [vmem:[#allocation3 + $0xa] sm:$0xff]
      %v3024 = vld [vmem:[#allocation3 + $0x1a] sm:$0xff]
      %v3025 = vld [vmem:[#allocation3 + $0x22] sm:$0xff]
      %v3026 = vld [vmem:[#allocation3 + $0x32] sm:$0xff]
      %v3027 = vld [vmem:[#allocation3 + $0x3a] sm:$0xff]
      %v3028 = vld [vmem:[#allocation3 + $0x4a] sm:$0xff]
      %v3029 = vld [vmem:[#allocation3 + $0x52] sm:$0xff]
      %v3030 = vld [vmem:[#allocation3 + $0x62] sm:$0xff]
      %v3031 = vld [vmem:[#allocation3 + $0x6a] sm:$0xff]
      %v3032 = vld [vmem:[#allocation3 + $0x7a] sm:$0xff]
      %v3033 = vld [vmem:[#allocation3 + $0x82] sm:$0xff]
      %v3034 = vld [vmem:[#allocation3 + $0x92] sm:$0xff]
      %v3035 = vld [vmem:[#allocation3 + $0x9a] sm:$0xff]
      %v3036 = vld [vmem:[#allocation3 + $0xaa] sm:$0xff]
      %v3037 = vld [vmem:[#allocation3 + $0xb2] sm:$0xff]
      %v3038 = vld [vmem:[#allocation3 + $0xc2] sm:$0xff]
      %v3039 = vld [vmem:[#allocation3 + $0xca] sm:$0xff]
      %v3040 = vld [vmem:[#allocation3 + $0xda] sm:$0xff]
      %v3041 = vld [vmem:[#allocation3 + $0xe2] sm:$0xff]
      %v3042 = vld [vmem:[#allocation3 + $0xf2] sm:$0xff]
      %v3043 = vld [vmem:[#allocation3 + $0xfa] sm:$0xff]
      %v3044 = vld [vmem:[#allocation3 + $0x10a] sm:$0xff]
      %v3045 = vld [vmem:[#allocation3 + $0x112] sm:$0xff]
      %v3046 = vld [vmem:[#allocation3 + $0x122] sm:$0xff]
      %v3047 = vld [vmem:[#allocation3 + $0x12a] sm:$0xff]
      %v3048 = vld [vmem:[#allocation3 + $0x13a] sm:$0xff]
      %v3049 = vld [vmem:[#allocation3 + $0x142] sm:$0xff]
      %v3050 = vld [vmem:[#allocation3 + $0x152] sm:$0xff]
      %v3051 = vld [vmem:[#allocation3 + $0x15a] sm:$0xff]
      %v3052 = vld [vmem:[#allocation3 + $0x16a] sm:$0xff]
      %v3053 = vld [vmem:[#allocation3 + $0x172] sm:$0xff]
      %3086 = vrot.lane.b32.xlu0 %v3022, 6
      %v3087 = vpop.permute.xlu0 %3086
      %3088 = vrot.lane.b32.xlu0 %v3023, 6
      %v3089 = vpop.permute.xlu0 %3088
      %3090 = vrot.lane.b32.xlu0 %v3024, 6
      %v3091 = vpop.permute.xlu0 %3090
      %3092 = vrot.lane.b32.xlu0 %v3025, 6
      %v3093 = vpop.permute.xlu0 %3092
      %3094 = vrot.lane.b32.xlu0 %v3026, 6
      %v3095 = vpop.permute.xlu0 %3094
      %3096 = vrot.lane.b32.xlu0 %v3027, 6
      %v3097 = vpop.permute.xlu0 %3096
      %3098 = vrot.lane.b32.xlu0 %v3028, 6
      %v3099 = vpop.permute.xlu0 %3098
      %3100 = vrot.lane.b32.xlu0 %v3029, 6
      %v3101 = vpop.permute.xlu0 %3100
      %3102 = vrot.lane.b32.xlu0 %v3030, 6
      %v3103 = vpop.permute.xlu0 %3102
      %3104 = vrot.lane.b32.xlu0 %v3031, 6
      %v3105 = vpop.permute.xlu0 %3104
      %3106 = vrot.lane.b32.xlu0 %v3032, 6
      %v3107 = vpop.permute.xlu0 %3106
      %3108 = vrot.lane.b32.xlu0 %v3033, 6
      %v3109 = vpop.permute.xlu0 %3108
      %3110 = vrot.lane.b32.xlu0 %v3034, 6
      %v3111 = vpop.permute.xlu0 %3110
      %3112 = vrot.lane.b32.xlu0 %v3035, 6
      %v3113 = vpop.permute.xlu0 %3112
      %3114 = vrot.lane.b32.xlu0 %v3036, 6
      %v3115 = vpop.permute.xlu0 %3114
      %3116 = vrot.lane.b32.xlu0 %v3037, 6
      %v3117 = vpop.permute.xlu0 %3116
      %3118 = vrot.lane.b32.xlu0 %v3038, 6
      %v3119 = vpop.permute.xlu0 %3118
      %3120 = vrot.lane.b32.xlu0 %v3039, 6
      %v3121 = vpop.permute.xlu0 %3120
      %3122 = vrot.lane.b32.xlu0 %v3040, 6
      %v3123 = vpop.permute.xlu0 %3122
      %3124 = vrot.lane.b32.xlu0 %v3041, 6
      %v3125 = vpop.permute.xlu0 %3124
      %3126 = vrot.lane.b32.xlu0 %v3042, 6
      %v3127 = vpop.permute.xlu0 %3126
      %3128 = vrot.lane.b32.xlu0 %v3043, 6
      %v3129 = vpop.permute.xlu0 %3128
      %3130 = vrot.lane.b32.xlu0 %v3044, 6
      %v3131 = vpop.permute.xlu0 %3130
      %3132 = vrot.lane.b32.xlu0 %v3045, 6
      %v3133 = vpop.permute.xlu0 %3132
      %3134 = vrot.lane.b32.xlu0 %v3046, 6
      %v3135 = vpop.permute.xlu0 %3134
      %3136 = vrot.lane.b32.xlu0 %v3047, 6
      %v3137 = vpop.permute.xlu0 %3136
      %3138 = vrot.lane.b32.xlu0 %v3048, 6
      %v3139 = vpop.permute.xlu0 %3138
      %3140 = vrot.lane.b32.xlu0 %v3049, 6
      %v3141 = vpop.permute.xlu0 %3140
      %3142 = vrot.lane.b32.xlu0 %v3050, 6
      %v3143 = vpop.permute.xlu0 %3142
      %3144 = vrot.lane.b32.xlu0 %v3051, 6
      %v3145 = vpop.permute.xlu0 %3144
      %3146 = vrot.lane.b32.xlu0 %v3052, 6
      %v3147 = vpop.permute.xlu0 %3146
      %3148 = vrot.lane.b32.xlu0 %v3053, 6
      %v3149 = vpop.permute.xlu0 %3148
      %vm3182 = vcmask 72752
      %3183 = vst.msk [vmem:[#allocation5] sm:$0xff] %vm3182, %v3087
      %3184 = vst.msk [vmem:[#allocation5 + $0x8] sm:$0xff] %vm3182, %v3089
      %3185 = vst.msk [vmem:[#allocation5 + $0x10] sm:$0xff] %vm3182, %v3091
      %3186 = vst.msk [vmem:[#allocation5 + $0x18] sm:$0xff] %vm3182, %v3093
      %3187 = vst.msk [vmem:[#allocation5 + $0x20] sm:$0xff] %vm3182, %v3095
      %3188 = vst.msk [vmem:[#allocation5 + $0x28] sm:$0xff] %vm3182, %v3097
      %3189 = vst.msk [vmem:[#allocation5 + $0x30] sm:$0xff] %vm3182, %v3099
      %3190 = vst.msk [vmem:[#allocation5 + $0x38] sm:$0xff] %vm3182, %v3101
      %3191 = vst.msk [vmem:[#allocation5 + $0x40] sm:$0xff] %vm3182, %v3103
      %3192 = vst.msk [vmem:[#allocation5 + $0x48] sm:$0xff] %vm3182, %v3105
      %3193 = vst.msk [vmem:[#allocation5 + $0x50] sm:$0xff] %vm3182, %v3107
      %3194 = vst.msk [vmem:[#allocation5 + $0x58] sm:$0xff] %vm3182, %v3109
      %3195 = vst.msk [vmem:[#allocation5 + $0x60] sm:$0xff] %vm3182, %v3111
      %3196 = vst.msk [vmem:[#allocation5 + $0x68] sm:$0xff] %vm3182, %v3113
      %3197 = vst.msk [vmem:[#allocation5 + $0x70] sm:$0xff] %vm3182, %v3115
      %3198 = vst.msk [vmem:[#allocation5 + $0x78] sm:$0xff] %vm3182, %v3117
      %3199 = vst.msk [vmem:[#allocation5 + $0x80] sm:$0xff] %vm3182, %v3119
      %3200 = vst.msk [vmem:[#allocation5 + $0x88] sm:$0xff] %vm3182, %v3121
      %3201 = vst.msk [vmem:[#allocation5 + $0x90] sm:$0xff] %vm3182, %v3123
      %3202 = vst.msk [vmem:[#allocation5 + $0x98] sm:$0xff] %vm3182, %v3125
      %3203 = vst.msk [vmem:[#allocation5 + $0xa0] sm:$0xff] %vm3182, %v3127
      %3204 = vst.msk [vmem:[#allocation5 + $0xa8] sm:$0xff] %vm3182, %v3129
      %3205 = vst.msk [vmem:[#allocation5 + $0xb0] sm:$0xff] %vm3182, %v3131
      %3206 = vst.msk [vmem:[#allocation5 + $0xb8] sm:$0xff] %vm3182, %v3133
      %3207 = vst.msk [vmem:[#allocation5 + $0xc0] sm:$0xff] %vm3182, %v3135
      %3208 = vst.msk [vmem:[#allocation5 + $0xc8] sm:$0xff] %vm3182, %v3137
      %3209 = vst.msk [vmem:[#allocation5 + $0xd0] sm:$0xff] %vm3182, %v3139
      %3210 = vst.msk [vmem:[#allocation5 + $0xd8] sm:$0xff] %vm3182, %v3141
      %3211 = vst.msk [vmem:[#allocation5 + $0xe0] sm:$0xff] %vm3182, %v3143
      %3212 = vst.msk [vmem:[#allocation5 + $0xe8] sm:$0xff] %vm3182, %v3145
      %3213 = vst.msk [vmem:[#allocation5 + $0xf0] sm:$0xff] %vm3182, %v3147
      %3214 = vst.msk [vmem:[#allocation5 + $0xf8] sm:$0xff] %vm3182, %v3149
      %v3215 = vld [vmem:[%s364] sm:$0xff]
      %v3216 = vld [vmem:[%s364 + $0x8] sm:$0xff]
      %v3217 = vld [vmem:[%s364 + $0x18] sm:$0xff]
      %v3218 = vld [vmem:[%s364 + $0x20] sm:$0xff]
      %v3219 = vld [vmem:[%s364 + $0x30] sm:$0xff]
      %v3220 = vld [vmem:[%s364 + $0x38] sm:$0xff]
      %v3221 = vld [vmem:[%s364 + $0x48] sm:$0xff]
      %v3222 = vld [vmem:[%s364 + $0x50] sm:$0xff]
      %v3223 = vld [vmem:[%s364 + $0x60] sm:$0xff]
      %v3224 = vld [vmem:[%s364 + $0x68] sm:$0xff]
      %v3225 = vld [vmem:[%s364 + $0x78] sm:$0xff]
      %v3226 = vld [vmem:[%s364 + $0x80] sm:$0xff]
      %v3227 = vld [vmem:[%s364 + $0x90] sm:$0xff]
      %v3228 = vld [vmem:[%s364 + $0x98] sm:$0xff]
      %v3229 = vld [vmem:[%s364 + $0xa8] sm:$0xff]
      %v3230 = vld [vmem:[%s364 + $0xb0] sm:$0xff]
      %v3231 = vld [vmem:[%s364 + $0xc0] sm:$0xff]
      %v3232 = vld [vmem:[%s364 + $0xc8] sm:$0xff]
      %v3233 = vld [vmem:[%s364 + $0xd8] sm:$0xff]
      %v3234 = vld [vmem:[%s364 + $0xe0] sm:$0xff]
      %v3235 = vld [vmem:[%s364 + $0xf0] sm:$0xff]
      %v3236 = vld [vmem:[%s364 + $0xf8] sm:$0xff]
      %v3237 = vld [vmem:[%s364 + $0x108] sm:$0xff]
      %v3238 = vld [vmem:[%s364 + $0x110] sm:$0xff]
      %v3239 = vld [vmem:[%s364 + $0x120] sm:$0xff]
      %v3240 = vld [vmem:[%s364 + $0x128] sm:$0xff]
      %v3241 = vld [vmem:[%s364 + $0x138] sm:$0xff]
      %v3242 = vld [vmem:[%s364 + $0x140] sm:$0xff]
      %v3243 = vld [vmem:[%s364 + $0x150] sm:$0xff]
      %v3244 = vld [vmem:[%s364 + $0x158] sm:$0xff]
      %v3245 = vld [vmem:[%s364 + $0x168] sm:$0xff]
      %v3246 = vld [vmem:[%s364 + $0x170] sm:$0xff]
      %3279 = vrot.lane.b32.xlu0 %v3215, 9
      %v3280 = vpop.permute.xlu0 %3279
      %3281 = vrot.lane.b32.xlu0 %v3216, 9
      %v3282 = vpop.permute.xlu0 %3281
      %3283 = vrot.lane.b32.xlu0 %v3217, 9
      %v3284 = vpop.permute.xlu0 %3283
      %3285 = vrot.lane.b32.xlu0 %v3218, 9
      %v3286 = vpop.permute.xlu0 %3285
      %3287 = vrot.lane.b32.xlu0 %v3219, 9
      %v3288 = vpop.permute.xlu0 %3287
      %3289 = vrot.lane.b32.xlu0 %v3220, 9
      %v3290 = vpop.permute.xlu0 %3289
      %3291 = vrot.lane.b32.xlu0 %v3221, 9
      %v3292 = vpop.permute.xlu0 %3291
      %3293 = vrot.lane.b32.xlu0 %v3222, 9
      %v3294 = vpop.permute.xlu0 %3293
      %3295 = vrot.lane.b32.xlu0 %v3223, 9
      %v3296 = vpop.permute.xlu0 %3295
      %3297 = vrot.lane.b32.xlu0 %v3224, 9
      %v3298 = vpop.permute.xlu0 %3297
      %3299 = vrot.lane.b32.xlu0 %v3225, 9
      %v3300 = vpop.permute.xlu0 %3299
      %3301 = vrot.lane.b32.xlu0 %v3226, 9
      %v3302 = vpop.permute.xlu0 %3301
      %3303 = vrot.lane.b32.xlu0 %v3227, 9
      %v3304 = vpop.permute.xlu0 %3303
      %3305 = vrot.lane.b32.xlu0 %v3228, 9
      %v3306 = vpop.permute.xlu0 %3305
      %3307 = vrot.lane.b32.xlu0 %v3229, 9
      %v3308 = vpop.permute.xlu0 %3307
      %3309 = vrot.lane.b32.xlu0 %v3230, 9
      %v3310 = vpop.permute.xlu0 %3309
      %3311 = vrot.lane.b32.xlu0 %v3231, 9
      %v3312 = vpop.permute.xlu0 %3311
      %3313 = vrot.lane.b32.xlu0 %v3232, 9
      %v3314 = vpop.permute.xlu0 %3313
      %3315 = vrot.lane.b32.xlu0 %v3233, 9
      %v3316 = vpop.permute.xlu0 %3315
      %3317 = vrot.lane.b32.xlu0 %v3234, 9
      %v3318 = vpop.permute.xlu0 %3317
      %3319 = vrot.lane.b32.xlu0 %v3235, 9
      %v3320 = vpop.permute.xlu0 %3319
      %3321 = vrot.lane.b32.xlu0 %v3236, 9
      %v3322 = vpop.permute.xlu0 %3321
      %3323 = vrot.lane.b32.xlu0 %v3237, 9
      %v3324 = vpop.permute.xlu0 %3323
      %3325 = vrot.lane.b32.xlu0 %v3238, 9
      %v3326 = vpop.permute.xlu0 %3325
      %3327 = vrot.lane.b32.xlu0 %v3239, 9
      %v3328 = vpop.permute.xlu0 %3327
      %3329 = vrot.lane.b32.xlu0 %v3240, 9
      %v3330 = vpop.permute.xlu0 %3329
      %3331 = vrot.lane.b32.xlu0 %v3241, 9
      %v3332 = vpop.permute.xlu0 %3331
      %3333 = vrot.lane.b32.xlu0 %v3242, 9
      %v3334 = vpop.permute.xlu0 %3333
      %3335 = vrot.lane.b32.xlu0 %v3243, 9
      %v3336 = vpop.permute.xlu0 %3335
      %3337 = vrot.lane.b32.xlu0 %v3244, 9
      %v3338 = vpop.permute.xlu0 %3337
      %3339 = vrot.lane.b32.xlu0 %v3245, 9
      %v3340 = vpop.permute.xlu0 %3339
      %3341 = vrot.lane.b32.xlu0 %v3246, 9
      %v3342 = vpop.permute.xlu0 %3341
      %vm3375 = vcmask 97352
      %3376 = vst.msk [vmem:[#allocation5] sm:$0xff] %vm3375, %v3280
      %3377 = vst.msk [vmem:[#allocation5 + $0x8] sm:$0xff] %vm3375, %v3282
      %3378 = vst.msk [vmem:[#allocation5 + $0x10] sm:$0xff] %vm3375, %v3284
      %3379 = vst.msk [vmem:[#allocation5 + $0x18] sm:$0xff] %vm3375, %v3286
      %3380 = vst.msk [vmem:[#allocation5 + $0x20] sm:$0xff] %vm3375, %v3288
      %3381 = vst.msk [vmem:[#allocation5 + $0x28] sm:$0xff] %vm3375, %v3290
      %3382 = vst.msk [vmem:[#allocation5 + $0x30] sm:$0xff] %vm3375, %v3292
      %3383 = vst.msk [vmem:[#allocation5 + $0x38] sm:$0xff] %vm3375, %v3294
      %3384 = vst.msk [vmem:[#allocation5 + $0x40] sm:$0xff] %vm3375, %v3296
      %3385 = vst.msk [vmem:[#allocation5 + $0x48] sm:$0xff] %vm3375, %v3298
      %3386 = vst.msk [vmem:[#allocation5 + $0x50] sm:$0xff] %vm3375, %v3300
      %3387 = vst.msk [vmem:[#allocation5 + $0x58] sm:$0xff] %vm3375, %v3302
      %3388 = vst.msk [vmem:[#allocation5 + $0x60] sm:$0xff] %vm3375, %v3304
      %3389 = vst.msk [vmem:[#allocation5 + $0x68] sm:$0xff] %vm3375, %v3306
      %3390 = vst.msk [vmem:[#allocation5 + $0x70] sm:$0xff] %vm3375, %v3308
      %3391 = vst.msk [vmem:[#allocation5 + $0x78] sm:$0xff] %vm3375, %v3310
      %3392 = vst.msk [vmem:[#allocation5 + $0x80] sm:$0xff] %vm3375, %v3312
      %3393 = vst.msk [vmem:[#allocation5 + $0x88] sm:$0xff] %vm3375, %v3314
      %3394 = vst.msk [vmem:[#allocation5 + $0x90] sm:$0xff] %vm3375, %v3316
      %3395 = vst.msk [vmem:[#allocation5 + $0x98] sm:$0xff] %vm3375, %v3318
      %3396 = vst.msk [vmem:[#allocation5 + $0xa0] sm:$0xff] %vm3375, %v3320
      %3397 = vst.msk [vmem:[#allocation5 + $0xa8] sm:$0xff] %vm3375, %v3322
      %3398 = vst.msk [vmem:[#allocation5 + $0xb0] sm:$0xff] %vm3375, %v3324
      %3399 = vst.msk [vmem:[#allocation5 + $0xb8] sm:$0xff] %vm3375, %v3326
      %3400 = vst.msk [vmem:[#allocation5 + $0xc0] sm:$0xff] %vm3375, %v3328
      %3401 = vst.msk [vmem:[#allocation5 + $0xc8] sm:$0xff] %vm3375, %v3330
      %3402 = vst.msk [vmem:[#allocation5 + $0xd0] sm:$0xff] %vm3375, %v3332
      %3403 = vst.msk [vmem:[#allocation5 + $0xd8] sm:$0xff] %vm3375, %v3334
      %3404 = vst.msk [vmem:[#allocation5 + $0xe0] sm:$0xff] %vm3375, %v3336
      %3405 = vst.msk [vmem:[#allocation5 + $0xe8] sm:$0xff] %vm3375, %v3338
      %3406 = vst.msk [vmem:[#allocation5 + $0xf0] sm:$0xff] %vm3375, %v3340
      %3407 = vst.msk [vmem:[#allocation5 + $0xf8] sm:$0xff] %vm3375, %v3342
      %v3408 = vld [vmem:[%s364 + $0x1] sm:$0xff]
      %v3409 = vld [vmem:[%s364 + $0x9] sm:$0xff]
      %v3410 = vld [vmem:[%s364 + $0x19] sm:$0xff]
      %v3411 = vld [vmem:[%s364 + $0x21] sm:$0xff]
      %v3412 = vld [vmem:[%s364 + $0x31] sm:$0xff]
      %v3413 = vld [vmem:[%s364 + $0x39] sm:$0xff]
      %v3414 = vld [vmem:[%s364 + $0x49] sm:$0xff]
      %v3415 = vld [vmem:[%s364 + $0x51] sm:$0xff]
      %v3416 = vld [vmem:[%s364 + $0x61] sm:$0xff]
      %v3417 = vld [vmem:[%s364 + $0x69] sm:$0xff]
      %v3418 = vld [vmem:[%s364 + $0x79] sm:$0xff]
      %v3419 = vld [vmem:[%s364 + $0x81] sm:$0xff]
      %v3420 = vld [vmem:[%s364 + $0x91] sm:$0xff]
      %v3421 = vld [vmem:[%s364 + $0x99] sm:$0xff]
      %v3422 = vld [vmem:[%s364 + $0xa9] sm:$0xff]
      %v3423 = vld [vmem:[%s364 + $0xb1] sm:$0xff]
      %v3424 = vld [vmem:[%s364 + $0xc1] sm:$0xff]
      %v3425 = vld [vmem:[%s364 + $0xc9] sm:$0xff]
      %v3426 = vld [vmem:[%s364 + $0xd9] sm:$0xff]
      %v3427 = vld [vmem:[%s364 + $0xe1] sm:$0xff]
      %v3428 = vld [vmem:[%s364 + $0xf1] sm:$0xff]
      %v3429 = vld [vmem:[%s364 + $0xf9] sm:$0xff]
      %v3430 = vld [vmem:[%s364 + $0x109] sm:$0xff]
      %v3431 = vld [vmem:[%s364 + $0x111] sm:$0xff]
      %v3432 = vld [vmem:[%s364 + $0x121] sm:$0xff]
      %v3433 = vld [vmem:[%s364 + $0x129] sm:$0xff]
      %v3434 = vld [vmem:[%s364 + $0x139] sm:$0xff]
      %v3435 = vld [vmem:[%s364 + $0x141] sm:$0xff]
      %v3436 = vld [vmem:[%s364 + $0x151] sm:$0xff]
      %v3437 = vld [vmem:[%s364 + $0x159] sm:$0xff]
      %v3438 = vld [vmem:[%s364 + $0x169] sm:$0xff]
      %v3439 = vld [vmem:[%s364 + $0x171] sm:$0xff]
      %3472 = vrot.lane.b32.xlu0 %v3408, 12
      %v3473 = vpop.permute.xlu0 %3472
      %3474 = vrot.lane.b32.xlu0 %v3409, 12
      %v3475 = vpop.permute.xlu0 %3474
      %3476 = vrot.lane.b32.xlu0 %v3410, 12
      %v3477 = vpop.permute.xlu0 %3476
      %3478 = vrot.lane.b32.xlu0 %v3411, 12
      %v3479 = vpop.permute.xlu0 %3478
      %3480 = vrot.lane.b32.xlu0 %v3412, 12
      %v3481 = vpop.permute.xlu0 %3480
      %3482 = vrot.lane.b32.xlu0 %v3413, 12
      %v3483 = vpop.permute.xlu0 %3482
      %3484 = vrot.lane.b32.xlu0 %v3414, 12
      %v3485 = vpop.permute.xlu0 %3484
      %3486 = vrot.lane.b32.xlu0 %v3415, 12
      %v3487 = vpop.permute.xlu0 %3486
      %3488 = vrot.lane.b32.xlu0 %v3416, 12
      %v3489 = vpop.permute.xlu0 %3488
      %3490 = vrot.lane.b32.xlu0 %v3417, 12
      %v3491 = vpop.permute.xlu0 %3490
      %3492 = vrot.lane.b32.xlu0 %v3418, 12
      %v3493 = vpop.permute.xlu0 %3492
      %3494 = vrot.lane.b32.xlu0 %v3419, 12
      %v3495 = vpop.permute.xlu0 %3494
      %3496 = vrot.lane.b32.xlu0 %v3420, 12
      %v3497 = vpop.permute.xlu0 %3496
      %3498 = vrot.lane.b32.xlu0 %v3421, 12
      %v3499 = vpop.permute.xlu0 %3498
      %3500 = vrot.lane.b32.xlu0 %v3422, 12
      %v3501 = vpop.permute.xlu0 %3500
      %3502 = vrot.lane.b32.xlu0 %v3423, 12
      %v3503 = vpop.permute.xlu0 %3502
      %3504 = vrot.lane.b32.xlu0 %v3424, 12
      %v3505 = vpop.permute.xlu0 %3504
      %3506 = vrot.lane.b32.xlu0 %v3425, 12
      %v3507 = vpop.permute.xlu0 %3506
      %3508 = vrot.lane.b32.xlu0 %v3426, 12
      %v3509 = vpop.permute.xlu0 %3508
      %3510 = vrot.lane.b32.xlu0 %v3427, 12
      %v3511 = vpop.permute.xlu0 %3510
      %3512 = vrot.lane.b32.xlu0 %v3428, 12
      %v3513 = vpop.permute.xlu0 %3512
      %3514 = vrot.lane.b32.xlu0 %v3429, 12
      %v3515 = vpop.permute.xlu0 %3514
      %3516 = vrot.lane.b32.xlu0 %v3430, 12
      %v3517 = vpop.permute.xlu0 %3516
      %3518 = vrot.lane.b32.xlu0 %v3431, 12
      %v3519 = vpop.permute.xlu0 %3518
      %3520 = vrot.lane.b32.xlu0 %v3432, 12
      %v3521 = vpop.permute.xlu0 %3520
      %3522 = vrot.lane.b32.xlu0 %v3433, 12
      %v3523 = vpop.permute.xlu0 %3522
      %3524 = vrot.lane.b32.xlu0 %v3434, 12
      %v3525 = vpop.permute.xlu0 %3524
      %3526 = vrot.lane.b32.xlu0 %v3435, 12
      %v3527 = vpop.permute.xlu0 %3526
      %3528 = vrot.lane.b32.xlu0 %v3436, 12
      %v3529 = vpop.permute.xlu0 %3528
      %3530 = vrot.lane.b32.xlu0 %v3437, 12
      %v3531 = vpop.permute.xlu0 %3530
      %3532 = vrot.lane.b32.xlu0 %v3438, 12
      %v3533 = vpop.permute.xlu0 %3532
      %3534 = vrot.lane.b32.xlu0 %v3439, 12
      %v3535 = vpop.permute.xlu0 %3534
      %vm3568 = vcmask 121952
      %3569 = vst.msk [vmem:[#allocation5] sm:$0xff] %vm3568, %v3473
      %3570 = vst.msk [vmem:[#allocation5 + $0x8] sm:$0xff] %vm3568, %v3475
      %3571 = vst.msk [vmem:[#allocation5 + $0x10] sm:$0xff] %vm3568, %v3477
      %3572 = vst.msk [vmem:[#allocation5 + $0x18] sm:$0xff] %vm3568, %v3479
      %3573 = vst.msk [vmem:[#allocation5 + $0x20] sm:$0xff] %vm3568, %v3481
      %3574 = vst.msk [vmem:[#allocation5 + $0x28] sm:$0xff] %vm3568, %v3483
      %3575 = vst.msk [vmem:[#allocation5 + $0x30] sm:$0xff] %vm3568, %v3485
      %3576 = vst.msk [vmem:[#allocation5 + $0x38] sm:$0xff] %vm3568, %v3487
      %3577 = vst.msk [vmem:[#allocation5 + $0x40] sm:$0xff] %vm3568, %v3489
      %3578 = vst.msk [vmem:[#allocation5 + $0x48] sm:$0xff] %vm3568, %v3491
      %3579 = vst.msk [vmem:[#allocation5 + $0x50] sm:$0xff] %vm3568, %v3493
      %3580 = vst.msk [vmem:[#allocation5 + $0x58] sm:$0xff] %vm3568, %v3495
      %3581 = vst.msk [vmem:[#allocation5 + $0x60] sm:$0xff] %vm3568, %v3497
      %3582 = vst.msk [vmem:[#allocation5 + $0x68] sm:$0xff] %vm3568, %v3499
      %3583 = vst.msk [vmem:[#allocation5 + $0x70] sm:$0xff] %vm3568, %v3501
      %3584 = vst.msk [vmem:[#allocation5 + $0x78] sm:$0xff] %vm3568, %v3503
      %3585 = vst.msk [vmem:[#allocation5 + $0x80] sm:$0xff] %vm3568, %v3505
      %3586 = vst.msk [vmem:[#allocation5 + $0x88] sm:$0xff] %vm3568, %v3507
      %3587 = vst.msk [vmem:[#allocation5 + $0x90] sm:$0xff] %vm3568, %v3509
      %3588 = vst.msk [vmem:[#allocation5 + $0x98] sm:$0xff] %vm3568, %v3511
      %3589 = vst.msk [vmem:[#allocation5 + $0xa0] sm:$0xff] %vm3568, %v3513
      %3590 = vst.msk [vmem:[#allocation5 + $0xa8] sm:$0xff] %vm3568, %v3515
      %3591 = vst.msk [vmem:[#allocation5 + $0xb0] sm:$0xff] %vm3568, %v3517
      %3592 = vst.msk [vmem:[#allocation5 + $0xb8] sm:$0xff] %vm3568, %v3519
      %3593 = vst.msk [vmem:[#allocation5 + $0xc0] sm:$0xff] %vm3568, %v3521
      %3594 = vst.msk [vmem:[#allocation5 + $0xc8] sm:$0xff] %vm3568, %v3523
      %3595 = vst.msk [vmem:[#allocation5 + $0xd0] sm:$0xff] %vm3568, %v3525
      %3596 = vst.msk [vmem:[#allocation5 + $0xd8] sm:$0xff] %vm3568, %v3527
      %3597 = vst.msk [vmem:[#allocation5 + $0xe0] sm:$0xff] %vm3568, %v3529
      %3598 = vst.msk [vmem:[#allocation5 + $0xe8] sm:$0xff] %vm3568, %v3531
      %3599 = vst.msk [vmem:[#allocation5 + $0xf0] sm:$0xff] %vm3568, %v3533
      %3600 = vst.msk [vmem:[#allocation5 + $0xf8] sm:$0xff] %vm3568, %v3535
      %v3601 = vld [vmem:[%s364 + $0x2] sm:$0xff]
      %v3602 = vld [vmem:[%s364 + $0xa] sm:$0xff]
      %v3603 = vld [vmem:[%s364 + $0x1a] sm:$0xff]
      %v3604 = vld [vmem:[%s364 + $0x22] sm:$0xff]
      %v3605 = vld [vmem:[%s364 + $0x32] sm:$0xff]
      %v3606 = vld [vmem:[%s364 + $0x3a] sm:$0xff]
      %v3607 = vld [vmem:[%s364 + $0x4a] sm:$0xff]
      %v3608 = vld [vmem:[%s364 + $0x52] sm:$0xff]
      %v3609 = vld [vmem:[%s364 + $0x62] sm:$0xff]
      %v3610 = vld [vmem:[%s364 + $0x6a] sm:$0xff]
      %v3611 = vld [vmem:[%s364 + $0x7a] sm:$0xff]
      %v3612 = vld [vmem:[%s364 + $0x82] sm:$0xff]
      %v3613 = vld [vmem:[%s364 + $0x92] sm:$0xff]
      %v3614 = vld [vmem:[%s364 + $0x9a] sm:$0xff]
      %v3615 = vld [vmem:[%s364 + $0xaa] sm:$0xff]
      %v3616 = vld [vmem:[%s364 + $0xb2] sm:$0xff]
      %v3617 = vld [vmem:[%s364 + $0xc2] sm:$0xff]
      %v3618 = vld [vmem:[%s364 + $0xca] sm:$0xff]
      %v3619 = vld [vmem:[%s364 + $0xda] sm:$0xff]
      %v3620 = vld [vmem:[%s364 + $0xe2] sm:$0xff]
      %v3621 = vld [vmem:[%s364 + $0xf2] sm:$0xff]
      %v3622 = vld [vmem:[%s364 + $0xfa] sm:$0xff]
      %v3623 = vld [vmem:[%s364 + $0x10a] sm:$0xff]
      %v3624 = vld [vmem:[%s364 + $0x112] sm:$0xff]
      %v3625 = vld [vmem:[%s364 + $0x122] sm:$0xff]
      %v3626 = vld [vmem:[%s364 + $0x12a] sm:$0xff]
      %v3627 = vld [vmem:[%s364 + $0x13a] sm:$0xff]
      %v3628 = vld [vmem:[%s364 + $0x142] sm:$0xff]
      %v3629 = vld [vmem:[%s364 + $0x152] sm:$0xff]
      %v3630 = vld [vmem:[%s364 + $0x15a] sm:$0xff]
      %v3631 = vld [vmem:[%s364 + $0x16a] sm:$0xff]
      %v3632 = vld [vmem:[%s364 + $0x172] sm:$0xff]
      %3665 = vrot.lane.b32.xlu0 %v3601, 15
      %v3666 = vpop.permute.xlu0 %3665
      %3667 = vrot.lane.b32.xlu0 %v3602, 15
      %v3668 = vpop.permute.xlu0 %3667
      %3669 = vrot.lane.b32.xlu0 %v3603, 15
      %v3670 = vpop.permute.xlu0 %3669
      %3671 = vrot.lane.b32.xlu0 %v3604, 15
      %v3672 = vpop.permute.xlu0 %3671
      %3673 = vrot.lane.b32.xlu0 %v3605, 15
      %v3674 = vpop.permute.xlu0 %3673
      %3675 = vrot.lane.b32.xlu0 %v3606, 15
      %v3676 = vpop.permute.xlu0 %3675
      %3677 = vrot.lane.b32.xlu0 %v3607, 15
      %v3678 = vpop.permute.xlu0 %3677
      %3679 = vrot.lane.b32.xlu0 %v3608, 15
      %v3680 = vpop.permute.xlu0 %3679
      %3681 = vrot.lane.b32.xlu0 %v3609, 15
      %v3682 = vpop.permute.xlu0 %3681
      %3683 = vrot.lane.b32.xlu0 %v3610, 15
      %v3684 = vpop.permute.xlu0 %3683
      %3685 = vrot.lane.b32.xlu0 %v3611, 15
      %v3686 = vpop.permute.xlu0 %3685
      %3687 = vrot.lane.b32.xlu0 %v3612, 15
      %v3688 = vpop.permute.xlu0 %3687
      %3689 = vrot.lane.b32.xlu0 %v3613, 15
      %v3690 = vpop.permute.xlu0 %3689
      %3691 = vrot.lane.b32.xlu0 %v3614, 15
      %v3692 = vpop.permute.xlu0 %3691
      %3693 = vrot.lane.b32.xlu0 %v3615, 15
      %v3694 = vpop.permute.xlu0 %3693
      %3695 = vrot.lane.b32.xlu0 %v3616, 15
      %v3696 = vpop.permute.xlu0 %3695
      %3697 = vrot.lane.b32.xlu0 %v3617, 15
      %v3698 = vpop.permute.xlu0 %3697
      %3699 = vrot.lane.b32.xlu0 %v3618, 15
      %v3700 = vpop.permute.xlu0 %3699
      %3701 = vrot.lane.b32.xlu0 %v3619, 15
      %v3702 = vpop.permute.xlu0 %3701
      %3703 = vrot.lane.b32.xlu0 %v3620, 15
      %v3704 = vpop.permute.xlu0 %3703
      %3705 = vrot.lane.b32.xlu0 %v3621, 15
      %v3706 = vpop.permute.xlu0 %3705
      %3707 = vrot.lane.b32.xlu0 %v3622, 15
      %v3708 = vpop.permute.xlu0 %3707
      %3709 = vrot.lane.b32.xlu0 %v3623, 15
      %v3710 = vpop.permute.xlu0 %3709
      %3711 = vrot.lane.b32.xlu0 %v3624, 15
      %v3712 = vpop.permute.xlu0 %3711
      %3713 = vrot.lane.b32.xlu0 %v3625, 15
      %v3714 = vpop.permute.xlu0 %3713
      %3715 = vrot.lane.b32.xlu0 %v3626, 15
      %v3716 = vpop.permute.xlu0 %3715
      %3717 = vrot.lane.b32.xlu0 %v3627, 15
      %v3718 = vpop.permute.xlu0 %3717
      %3719 = vrot.lane.b32.xlu0 %v3628, 15
      %v3720 = vpop.permute.xlu0 %3719
      %3721 = vrot.lane.b32.xlu0 %v3629, 15
      %v3722 = vpop.permute.xlu0 %3721
      %3723 = vrot.lane.b32.xlu0 %v3630, 15
      %v3724 = vpop.permute.xlu0 %3723
      %3725 = vrot.lane.b32.xlu0 %v3631, 15
      %v3726 = vpop.permute.xlu0 %3725
      %3727 = vrot.lane.b32.xlu0 %v3632, 15
      %v3728 = vpop.permute.xlu0 %3727
      %vm3761 = vcmask 146552
      %3762 = vst.msk [vmem:[#allocation5] sm:$0xff] %vm3761, %v3666
      %3763 = vst.msk [vmem:[#allocation5 + $0x8] sm:$0xff] %vm3761, %v3668
      %3764 = vst.msk [vmem:[#allocation5 + $0x10] sm:$0xff] %vm3761, %v3670
      %3765 = vst.msk [vmem:[#allocation5 + $0x18] sm:$0xff] %vm3761, %v3672
      %3766 = vst.msk [vmem:[#allocation5 + $0x20] sm:$0xff] %vm3761, %v3674
      %3767 = vst.msk [vmem:[#allocation5 + $0x28] sm:$0xff] %vm3761, %v3676
      %3768 = vst.msk [vmem:[#allocation5 + $0x30] sm:$0xff] %vm3761, %v3678
      %3769 = vst.msk [vmem:[#allocation5 + $0x38] sm:$0xff] %vm3761, %v3680
      %3770 = vst.msk [vmem:[#allocation5 + $0x40] sm:$0xff] %vm3761, %v3682
      %3771 = vst.msk [vmem:[#allocation5 + $0x48] sm:$0xff] %vm3761, %v3684
      %3772 = vst.msk [vmem:[#allocation5 + $0x50] sm:$0xff] %vm3761, %v3686
      %3773 = vst.msk [vmem:[#allocation5 + $0x58] sm:$0xff] %vm3761, %v3688
      %3774 = vst.msk [vmem:[#allocation5 + $0x60] sm:$0xff] %vm3761, %v3690
      %3775 = vst.msk [vmem:[#allocation5 + $0x68] sm:$0xff] %vm3761, %v3692
      %3776 = vst.msk [vmem:[#allocation5 + $0x70] sm:$0xff] %vm3761, %v3694
      %3777 = vst.msk [vmem:[#allocation5 + $0x78] sm:$0xff] %vm3761, %v3696
      %3778 = vst.msk [vmem:[#allocation5 + $0x80] sm:$0xff] %vm3761, %v3698
      %3779 = vst.msk [vmem:[#allocation5 + $0x88] sm:$0xff] %vm3761, %v3700
      %3780 = vst.msk [vmem:[#allocation5 + $0x90] sm:$0xff] %vm3761, %v3702
      %3781 = vst.msk [vmem:[#allocation5 + $0x98] sm:$0xff] %vm3761, %v3704
      %3782 = vst.msk [vmem:[#allocation5 + $0xa0] sm:$0xff] %vm3761, %v3706
      %3783 = vst.msk [vmem:[#allocation5 + $0xa8] sm:$0xff] %vm3761, %v3708
      %3784 = vst.msk [vmem:[#allocation5 + $0xb0] sm:$0xff] %vm3761, %v3710
      %3785 = vst.msk [vmem:[#allocation5 + $0xb8] sm:$0xff] %vm3761, %v3712
      %3786 = vst.msk [vmem:[#allocation5 + $0xc0] sm:$0xff] %vm3761, %v3714
      %3787 = vst.msk [vmem:[#allocation5 + $0xc8] sm:$0xff] %vm3761, %v3716
      %3788 = vst.msk [vmem:[#allocation5 + $0xd0] sm:$0xff] %vm3761, %v3718
      %3789 = vst.msk [vmem:[#allocation5 + $0xd8] sm:$0xff] %vm3761, %v3720
      %3790 = vst.msk [vmem:[#allocation5 + $0xe0] sm:$0xff] %vm3761, %v3722
      %3791 = vst.msk [vmem:[#allocation5 + $0xe8] sm:$0xff] %vm3761, %v3724
      %3792 = vst.msk [vmem:[#allocation5 + $0xf0] sm:$0xff] %vm3761, %v3726
      %3793 = vst.msk [vmem:[#allocation5 + $0xf8] sm:$0xff] %vm3761, %v3728
      %s3794 = scalar_lea.vmem [#allocation3], 48
      %v3795 = vld [vmem:[%s3794] sm:$0xff]
      %v3796 = vld [vmem:[%s3794 + $0x8] sm:$0xff]
      %v3797 = vld [vmem:[%s3794 + $0x18] sm:$0xff]
      %v3798 = vld [vmem:[%s3794 + $0x20] sm:$0xff]
      %v3799 = vld [vmem:[%s3794 + $0x30] sm:$0xff]
      %v3800 = vld [vmem:[%s3794 + $0x38] sm:$0xff]
      %v3801 = vld [vmem:[%s3794 + $0x48] sm:$0xff]
      %v3802 = vld [vmem:[%s3794 + $0x50] sm:$0xff]
      %v3803 = vld [vmem:[%s3794 + $0x60] sm:$0xff]
      %v3804 = vld [vmem:[%s3794 + $0x68] sm:$0xff]
      %v3805 = vld [vmem:[%s3794 + $0x78] sm:$0xff]
      %v3806 = vld [vmem:[%s3794 + $0x80] sm:$0xff]
      %v3807 = vld [vmem:[%s3794 + $0x90] sm:$0xff]
      %v3808 = vld [vmem:[%s3794 + $0x98] sm:$0xff]
      %v3809 = vld [vmem:[%s3794 + $0xa8] sm:$0xff]
      %v3810 = vld [vmem:[%s3794 + $0xb0] sm:$0xff]
      %v3811 = vld [vmem:[%s3794 + $0xc0] sm:$0xff]
      %v3812 = vld [vmem:[%s3794 + $0xc8] sm:$0xff]
      %v3813 = vld [vmem:[%s3794 + $0xd8] sm:$0xff]
      %v3814 = vld [vmem:[%s3794 + $0xe0] sm:$0xff]
      %v3815 = vld [vmem:[%s3794 + $0xf0] sm:$0xff]
      %v3816 = vld [vmem:[%s3794 + $0xf8] sm:$0xff]
      %v3817 = vld [vmem:[%s3794 + $0x108] sm:$0xff]
      %v3818 = vld [vmem:[%s3794 + $0x110] sm:$0xff]
      %v3819 = vld [vmem:[%s3794 + $0x120] sm:$0xff]
      %v3820 = vld [vmem:[%s3794 + $0x128] sm:$0xff]
      %v3821 = vld [vmem:[%s3794 + $0x138] sm:$0xff]
      %v3822 = vld [vmem:[%s3794 + $0x140] sm:$0xff]
      %v3823 = vld [vmem:[%s3794 + $0x150] sm:$0xff]
      %v3824 = vld [vmem:[%s3794 + $0x158] sm:$0xff]
      %v3825 = vld [vmem:[%s3794 + $0x168] sm:$0xff]
      %v3826 = vld [vmem:[%s3794 + $0x170] sm:$0xff]
      %3859 = vrot.lane.b32.xlu0 %v3795, 18
      %v3860 = vpop.permute.xlu0 %3859
      %3861 = vrot.lane.b32.xlu0 %v3796, 18
      %v3862 = vpop.permute.xlu0 %3861
      %3863 = vrot.lane.b32.xlu0 %v3797, 18
      %v3864 = vpop.permute.xlu0 %3863
      %3865 = vrot.lane.b32.xlu0 %v3798, 18
      %v3866 = vpop.permute.xlu0 %3865
      %3867 = vrot.lane.b32.xlu0 %v3799, 18
      %v3868 = vpop.permute.xlu0 %3867
      %3869 = vrot.lane.b32.xlu0 %v3800, 18
      %v3870 = vpop.permute.xlu0 %3869
      %3871 = vrot.lane.b32.xlu0 %v3801, 18
      %v3872 = vpop.permute.xlu0 %3871
      %3873 = vrot.lane.b32.xlu0 %v3802, 18
      %v3874 = vpop.permute.xlu0 %3873
      %3875 = vrot.lane.b32.xlu0 %v3803, 18
      %v3876 = vpop.permute.xlu0 %3875
      %3877 = vrot.lane.b32.xlu0 %v3804, 18
      %v3878 = vpop.permute.xlu0 %3877
      %3879 = vrot.lane.b32.xlu0 %v3805, 18
      %v3880 = vpop.permute.xlu0 %3879
      %3881 = vrot.lane.b32.xlu0 %v3806, 18
      %v3882 = vpop.permute.xlu0 %3881
      %3883 = vrot.lane.b32.xlu0 %v3807, 18
      %v3884 = vpop.permute.xlu0 %3883
      %3885 = vrot.lane.b32.xlu0 %v3808, 18
      %v3886 = vpop.permute.xlu0 %3885
      %3887 = vrot.lane.b32.xlu0 %v3809, 18
      %v3888 = vpop.permute.xlu0 %3887
      %3889 = vrot.lane.b32.xlu0 %v3810, 18
      %v3890 = vpop.permute.xlu0 %3889
      %3891 = vrot.lane.b32.xlu0 %v3811, 18
      %v3892 = vpop.permute.xlu0 %3891
      %3893 = vrot.lane.b32.xlu0 %v3812, 18
      %v3894 = vpop.permute.xlu0 %3893
      %3895 = vrot.lane.b32.xlu0 %v3813, 18
      %v3896 = vpop.permute.xlu0 %3895
      %3897 = vrot.lane.b32.xlu0 %v3814, 18
      %v3898 = vpop.permute.xlu0 %3897
      %3899 = vrot.lane.b32.xlu0 %v3815, 18
      %v3900 = vpop.permute.xlu0 %3899
      %3901 = vrot.lane.b32.xlu0 %v3816, 18
      %v3902 = vpop.permute.xlu0 %3901
      %3903 = vrot.lane.b32.xlu0 %v3817, 18
      %v3904 = vpop.permute.xlu0 %3903
      %3905 = vrot.lane.b32.xlu0 %v3818, 18
      %v3906 = vpop.permute.xlu0 %3905
      %3907 = vrot.lane.b32.xlu0 %v3819, 18
      %v3908 = vpop.permute.xlu0 %3907
      %3909 = vrot.lane.b32.xlu0 %v3820, 18
      %v3910 = vpop.permute.xlu0 %3909
      %3911 = vrot.lane.b32.xlu0 %v3821, 18
      %v3912 = vpop.permute.xlu0 %3911
      %3913 = vrot.lane.b32.xlu0 %v3822, 18
      %v3914 = vpop.permute.xlu0 %3913
      %3915 = vrot.lane.b32.xlu0 %v3823, 18
      %v3916 = vpop.permute.xlu0 %3915
      %3917 = vrot.lane.b32.xlu0 %v3824, 18
      %v3918 = vpop.permute.xlu0 %3917
      %3919 = vrot.lane.b32.xlu0 %v3825, 18
      %v3920 = vpop.permute.xlu0 %3919
      %3921 = vrot.lane.b32.xlu0 %v3826, 18
      %v3922 = vpop.permute.xlu0 %3921
      %vm3955 = vcmask 171152
      %3956 = vst.msk [vmem:[#allocation5] sm:$0xff] %vm3955, %v3860
      %3957 = vst.msk [vmem:[#allocation5 + $0x8] sm:$0xff] %vm3955, %v3862
      %3958 = vst.msk [vmem:[#allocation5 + $0x10] sm:$0xff] %vm3955, %v3864
      %3959 = vst.msk [vmem:[#allocation5 + $0x18] sm:$0xff] %vm3955, %v3866
      %3960 = vst.msk [vmem:[#allocation5 + $0x20] sm:$0xff] %vm3955, %v3868
      %3961 = vst.msk [vmem:[#allocation5 + $0x28] sm:$0xff] %vm3955, %v3870
      %3962 = vst.msk [vmem:[#allocation5 + $0x30] sm:$0xff] %vm3955, %v3872
      %3963 = vst.msk [vmem:[#allocation5 + $0x38] sm:$0xff] %vm3955, %v3874
      %3964 = vst.msk [vmem:[#allocation5 + $0x40] sm:$0xff] %vm3955, %v3876
      %3965 = vst.msk [vmem:[#allocation5 + $0x48] sm:$0xff] %vm3955, %v3878
      %3966 = vst.msk [vmem:[#allocation5 + $0x50] sm:$0xff] %vm3955, %v3880
      %3967 = vst.msk [vmem:[#allocation5 + $0x58] sm:$0xff] %vm3955, %v3882
      %3968 = vst.msk [vmem:[#allocation5 + $0x60] sm:$0xff] %vm3955, %v3884
      %3969 = vst.msk [vmem:[#allocation5 + $0x68] sm:$0xff] %vm3955, %v3886
      %3970 = vst.msk [vmem:[#allocation5 + $0x70] sm:$0xff] %vm3955, %v3888
      %3971 = vst.msk [vmem:[#allocation5 + $0x78] sm:$0xff] %vm3955, %v3890
      %3972 = vst.msk [vmem:[#allocation5 + $0x80] sm:$0xff] %vm3955, %v3892
      %3973 = vst.msk [vmem:[#allocation5 + $0x88] sm:$0xff] %vm3955, %v3894
      %3974 = vst.msk [vmem:[#allocation5 + $0x90] sm:$0xff] %vm3955, %v3896
      %3975 = vst.msk [vmem:[#allocation5 + $0x98] sm:$0xff] %vm3955, %v3898
      %3976 = vst.msk [vmem:[#allocation5 + $0xa0] sm:$0xff] %vm3955, %v3900
      %3977 = vst.msk [vmem:[#allocation5 + $0xa8] sm:$0xff] %vm3955, %v3902
      %3978 = vst.msk [vmem:[#allocation5 + $0xb0] sm:$0xff] %vm3955, %v3904
      %3979 = vst.msk [vmem:[#allocation5 + $0xb8] sm:$0xff] %vm3955, %v3906
      %3980 = vst.msk [vmem:[#allocation5 + $0xc0] sm:$0xff] %vm3955, %v3908
      %3981 = vst.msk [vmem:[#allocation5 + $0xc8] sm:$0xff] %vm3955, %v3910
      %3982 = vst.msk [vmem:[#allocation5 + $0xd0] sm:$0xff] %vm3955, %v3912
      %3983 = vst.msk [vmem:[#allocation5 + $0xd8] sm:$0xff] %vm3955, %v3914
      %3984 = vst.msk [vmem:[#allocation5 + $0xe0] sm:$0xff] %vm3955, %v3916
      %3985 = vst.msk [vmem:[#allocation5 + $0xe8] sm:$0xff] %vm3955, %v3918
      %3986 = vst.msk [vmem:[#allocation5 + $0xf0] sm:$0xff] %vm3955, %v3920
      %3987 = vst.msk [vmem:[#allocation5 + $0xf8] sm:$0xff] %vm3955, %v3922
      %v3988 = vld [vmem:[%s3794 + $0x1] sm:$0xff]
      %v3989 = vld [vmem:[%s3794 + $0x9] sm:$0xff]
      %v3990 = vld [vmem:[%s3794 + $0x19] sm:$0xff]
      %v3991 = vld [vmem:[%s3794 + $0x21] sm:$0xff]
      %v3992 = vld [vmem:[%s3794 + $0x31] sm:$0xff]
      %v3993 = vld [vmem:[%s3794 + $0x39] sm:$0xff]
      %v3994 = vld [vmem:[%s3794 + $0x49] sm:$0xff]
      %v3995 = vld [vmem:[%s3794 + $0x51] sm:$0xff]
      %v3996 = vld [vmem:[%s3794 + $0x61] sm:$0xff]
      %v3997 = vld [vmem:[%s3794 + $0x69] sm:$0xff]
      %v3998 = vld [vmem:[%s3794 + $0x79] sm:$0xff]
      %v3999 = vld [vmem:[%s3794 + $0x81] sm:$0xff]
      %v4000 = vld [vmem:[%s3794 + $0x91] sm:$0xff]
      %v4001 = vld [vmem:[%s3794 + $0x99] sm:$0xff]
      %v4002 = vld [vmem:[%s3794 + $0xa9] sm:$0xff]
      %v4003 = vld [vmem:[%s3794 + $0xb1] sm:$0xff]
      %v4004 = vld [vmem:[%s3794 + $0xc1] sm:$0xff]
      %v4005 = vld [vmem:[%s3794 + $0xc9] sm:$0xff]
      %v4006 = vld [vmem:[%s3794 + $0xd9] sm:$0xff]
      %v4007 = vld [vmem:[%s3794 + $0xe1] sm:$0xff]
      %v4008 = vld [vmem:[%s3794 + $0xf1] sm:$0xff]
      %v4009 = vld [vmem:[%s3794 + $0xf9] sm:$0xff]
      %v4010 = vld [vmem:[%s3794 + $0x109] sm:$0xff]
      %v4011 = vld [vmem:[%s3794 + $0x111] sm:$0xff]
      %v4012 = vld [vmem:[%s3794 + $0x121] sm:$0xff]
      %v4013 = vld [vmem:[%s3794 + $0x129] sm:$0xff]
      %v4014 = vld [vmem:[%s3794 + $0x139] sm:$0xff]
      %v4015 = vld [vmem:[%s3794 + $0x141] sm:$0xff]
      %v4016 = vld [vmem:[%s3794 + $0x151] sm:$0xff]
      %v4017 = vld [vmem:[%s3794 + $0x159] sm:$0xff]
      %v4018 = vld [vmem:[%s3794 + $0x169] sm:$0xff]
      %v4019 = vld [vmem:[%s3794 + $0x171] sm:$0xff]
      %4052 = vrot.lane.b32.xlu0 %v3988, 21
      %v4053 = vpop.permute.xlu0 %4052
      %4054 = vrot.lane.b32.xlu0 %v3989, 21
      %v4055 = vpop.permute.xlu0 %4054
      %4056 = vrot.lane.b32.xlu0 %v3990, 21
      %v4057 = vpop.permute.xlu0 %4056
      %4058 = vrot.lane.b32.xlu0 %v3991, 21
      %v4059 = vpop.permute.xlu0 %4058
      %4060 = vrot.lane.b32.xlu0 %v3992, 21
      %v4061 = vpop.permute.xlu0 %4060
      %4062 = vrot.lane.b32.xlu0 %v3993, 21
      %v4063 = vpop.permute.xlu0 %4062
      %4064 = vrot.lane.b32.xlu0 %v3994, 21
      %v4065 = vpop.permute.xlu0 %4064
      %4066 = vrot.lane.b32.xlu0 %v3995, 21
      %v4067 = vpop.permute.xlu0 %4066
      %4068 = vrot.lane.b32.xlu0 %v3996, 21
      %v4069 = vpop.permute.xlu0 %4068
      %4070 = vrot.lane.b32.xlu0 %v3997, 21
      %v4071 = vpop.permute.xlu0 %4070
      %4072 = vrot.lane.b32.xlu0 %v3998, 21
      %v4073 = vpop.permute.xlu0 %4072
      %4074 = vrot.lane.b32.xlu0 %v3999, 21
      %v4075 = vpop.permute.xlu0 %4074
      %4076 = vrot.lane.b32.xlu0 %v4000, 21
      %v4077 = vpop.permute.xlu0 %4076
      %4078 = vrot.lane.b32.xlu0 %v4001, 21
      %v4079 = vpop.permute.xlu0 %4078
      %4080 = vrot.lane.b32.xlu0 %v4002, 21
      %v4081 = vpop.permute.xlu0 %4080
      %4082 = vrot.lane.b32.xlu0 %v4003, 21
      %v4083 = vpop.permute.xlu0 %4082
      %4084 = vrot.lane.b32.xlu0 %v4004, 21
      %v4085 = vpop.permute.xlu0 %4084
      %4086 = vrot.lane.b32.xlu0 %v4005, 21
      %v4087 = vpop.permute.xlu0 %4086
      %4088 = vrot.lane.b32.xlu0 %v4006, 21
      %v4089 = vpop.permute.xlu0 %4088
      %4090 = vrot.lane.b32.xlu0 %v4007, 21
      %v4091 = vpop.permute.xlu0 %4090
      %4092 = vrot.lane.b32.xlu0 %v4008, 21
      %v4093 = vpop.permute.xlu0 %4092
      %4094 = vrot.lane.b32.xlu0 %v4009, 21
      %v4095 = vpop.permute.xlu0 %4094
      %4096 = vrot.lane.b32.xlu0 %v4010, 21
      %v4097 = vpop.permute.xlu0 %4096
      %4098 = vrot.lane.b32.xlu0 %v4011, 21
      %v4099 = vpop.permute.xlu0 %4098
      %4100 = vrot.lane.b32.xlu0 %v4012, 21
      %v4101 = vpop.permute.xlu0 %4100
      %4102 = vrot.lane.b32.xlu0 %v4013, 21
      %v4103 = vpop.permute.xlu0 %4102
      %4104 = vrot.lane.b32.xlu0 %v4014, 21
      %v4105 = vpop.permute.xlu0 %4104
      %4106 = vrot.lane.b32.xlu0 %v4015, 21
      %v4107 = vpop.permute.xlu0 %4106
      %4108 = vrot.lane.b32.xlu0 %v4016, 21
      %v4109 = vpop.permute.xlu0 %4108
      %4110 = vrot.lane.b32.xlu0 %v4017, 21
      %v4111 = vpop.permute.xlu0 %4110
      %4112 = vrot.lane.b32.xlu0 %v4018, 21
      %v4113 = vpop.permute.xlu0 %4112
      %4114 = vrot.lane.b32.xlu0 %v4019, 21
      %v4115 = vpop.permute.xlu0 %4114
      %vm4148 = vcmask 195752
      %4149 = vst.msk [vmem:[#allocation5] sm:$0xff] %vm4148, %v4053
      %4150 = vst.msk [vmem:[#allocation5 + $0x8] sm:$0xff] %vm4148, %v4055
      %4151 = vst.msk [vmem:[#allocation5 + $0x10] sm:$0xff] %vm4148, %v4057
      %4152 = vst.msk [vmem:[#allocation5 + $0x18] sm:$0xff] %vm4148, %v4059
      %4153 = vst.msk [vmem:[#allocation5 + $0x20] sm:$0xff] %vm4148, %v4061
      %4154 = vst.msk [vmem:[#allocation5 + $0x28] sm:$0xff] %vm4148, %v4063
      %4155 = vst.msk [vmem:[#allocation5 + $0x30] sm:$0xff] %vm4148, %v4065
      %4156 = vst.msk [vmem:[#allocation5 + $0x38] sm:$0xff] %vm4148, %v4067
      %4157 = vst.msk [vmem:[#allocation5 + $0x40] sm:$0xff] %vm4148, %v4069
      %4158 = vst.msk [vmem:[#allocation5 + $0x48] sm:$0xff] %vm4148, %v4071
      %4159 = vst.msk [vmem:[#allocation5 + $0x50] sm:$0xff] %vm4148, %v4073
      %4160 = vst.msk [vmem:[#allocation5 + $0x58] sm:$0xff] %vm4148, %v4075
      %4161 = vst.msk [vmem:[#allocation5 + $0x60] sm:$0xff] %vm4148, %v4077
      %4162 = vst.msk [vmem:[#allocation5 + $0x68] sm:$0xff] %vm4148, %v4079
      %4163 = vst.msk [vmem:[#allocation5 + $0x70] sm:$0xff] %vm4148, %v4081
      %4164 = vst.msk [vmem:[#allocation5 + $0x78] sm:$0xff] %vm4148, %v4083
      %4165 = vst.msk [vmem:[#allocation5 + $0x80] sm:$0xff] %vm4148, %v4085
      %4166 = vst.msk [vmem:[#allocation5 + $0x88] sm:$0xff] %vm4148, %v4087
      %4167 = vst.msk [vmem:[#allocation5 + $0x90] sm:$0xff] %vm4148, %v4089
      %4168 = vst.msk [vmem:[#allocation5 + $0x98] sm:$0xff] %vm4148, %v4091
      %4169 = vst.msk [vmem:[#allocation5 + $0xa0] sm:$0xff] %vm4148, %v4093
      %4170 = vst.msk [vmem:[#allocation5 + $0xa8] sm:$0xff] %vm4148, %v4095
      %4171 = vst.msk [vmem:[#allocation5 + $0xb0] sm:$0xff] %vm4148, %v4097
      %4172 = vst.msk [vmem:[#allocation5 + $0xb8] sm:$0xff] %vm4148, %v4099
      %4173 = vst.msk [vmem:[#allocation5 + $0xc0] sm:$0xff] %vm4148, %v4101
      %4174 = vst.msk [vmem:[#allocation5 + $0xc8] sm:$0xff] %vm4148, %v4103
      %4175 = vst.msk [vmem:[#allocation5 + $0xd0] sm:$0xff] %vm4148, %v4105
      %4176 = vst.msk [vmem:[#allocation5 + $0xd8] sm:$0xff] %vm4148, %v4107
      %4177 = vst.msk [vmem:[#allocation5 + $0xe0] sm:$0xff] %vm4148, %v4109
      %4178 = vst.msk [vmem:[#allocation5 + $0xe8] sm:$0xff] %vm4148, %v4111
      %4179 = vst.msk [vmem:[#allocation5 + $0xf0] sm:$0xff] %vm4148, %v4113
      %4180 = vst.msk [vmem:[#allocation5 + $0xf8] sm:$0xff] %vm4148, %v4115
      %v4181 = vld [vmem:[%s3794 + $0x2] sm:$0xff]
      %v4182 = vld [vmem:[%s3794 + $0xa] sm:$0xff]
      %v4183 = vld [vmem:[%s3794 + $0x1a] sm:$0xff]
      %v4184 = vld [vmem:[%s3794 + $0x22] sm:$0xff]
      %v4185 = vld [vmem:[%s3794 + $0x32] sm:$0xff]
      %v4186 = vld [vmem:[%s3794 + $0x3a] sm:$0xff]
      %v4187 = vld [vmem:[%s3794 + $0x4a] sm:$0xff]
      %v4188 = vld [vmem:[%s3794 + $0x52] sm:$0xff]
      %v4189 = vld [vmem:[%s3794 + $0x62] sm:$0xff]
      %v4190 = vld [vmem:[%s3794 + $0x6a] sm:$0xff]
      %v4191 = vld [vmem:[%s3794 + $0x7a] sm:$0xff]
      %v4192 = vld [vmem:[%s3794 + $0x82] sm:$0xff]
      %v4193 = vld [vmem:[%s3794 + $0x92] sm:$0xff]
      %v4194 = vld [vmem:[%s3794 + $0x9a] sm:$0xff]
      %v4195 = vld [vmem:[%s3794 + $0xaa] sm:$0xff]
      %v4196 = vld [vmem:[%s3794 + $0xb2] sm:$0xff]
      %v4197 = vld [vmem:[%s3794 + $0xc2] sm:$0xff]
      %v4198 = vld [vmem:[%s3794 + $0xca] sm:$0xff]
      %v4199 = vld [vmem:[%s3794 + $0xda] sm:$0xff]
      %v4200 = vld [vmem:[%s3794 + $0xe2] sm:$0xff]
      %v4201 = vld [vmem:[%s3794 + $0xf2] sm:$0xff]
      %v4202 = vld [vmem:[%s3794 + $0xfa] sm:$0xff]
      %v4203 = vld [vmem:[%s3794 + $0x10a] sm:$0xff]
      %v4204 = vld [vmem:[%s3794 + $0x112] sm:$0xff]
      %v4205 = vld [vmem:[%s3794 + $0x122] sm:$0xff]
      %v4206 = vld [vmem:[%s3794 + $0x12a] sm:$0xff]
      %v4207 = vld [vmem:[%s3794 + $0x13a] sm:$0xff]
      %v4208 = vld [vmem:[%s3794 + $0x142] sm:$0xff]
      %v4209 = vld [vmem:[%s3794 + $0x152] sm:$0xff]
      %v4210 = vld [vmem:[%s3794 + $0x15a] sm:$0xff]
      %v4211 = vld [vmem:[%s3794 + $0x16a] sm:$0xff]
      %v4212 = vld [vmem:[%s3794 + $0x172] sm:$0xff]
      %4245 = vrot.lane.b32.xlu0 %v4181, 24
      %v4246 = vpop.permute.xlu0 %4245
      %4247 = vrot.lane.b32.xlu0 %v4182, 24
      %v4248 = vpop.permute.xlu0 %4247
      %4249 = vrot.lane.b32.xlu0 %v4183, 24
      %v4250 = vpop.permute.xlu0 %4249
      %4251 = vrot.lane.b32.xlu0 %v4184, 24
      %v4252 = vpop.permute.xlu0 %4251
      %4253 = vrot.lane.b32.xlu0 %v4185, 24
      %v4254 = vpop.permute.xlu0 %4253
      %4255 = vrot.lane.b32.xlu0 %v4186, 24
      %v4256 = vpop.permute.xlu0 %4255
      %4257 = vrot.lane.b32.xlu0 %v4187, 24
      %v4258 = vpop.permute.xlu0 %4257
      %4259 = vrot.lane.b32.xlu0 %v4188, 24
      %v4260 = vpop.permute.xlu0 %4259
      %4261 = vrot.lane.b32.xlu0 %v4189, 24
      %v4262 = vpop.permute.xlu0 %4261
      %4263 = vrot.lane.b32.xlu0 %v4190, 24
      %v4264 = vpop.permute.xlu0 %4263
      %4265 = vrot.lane.b32.xlu0 %v4191, 24
      %v4266 = vpop.permute.xlu0 %4265
      %4267 = vrot.lane.b32.xlu0 %v4192, 24
      %v4268 = vpop.permute.xlu0 %4267
      %4269 = vrot.lane.b32.xlu0 %v4193, 24
      %v4270 = vpop.permute.xlu0 %4269
      %4271 = vrot.lane.b32.xlu0 %v4194, 24
      %v4272 = vpop.permute.xlu0 %4271
      %4273 = vrot.lane.b32.xlu0 %v4195, 24
      %v4274 = vpop.permute.xlu0 %4273
      %4275 = vrot.lane.b32.xlu0 %v4196, 24
      %v4276 = vpop.permute.xlu0 %4275
      %4277 = vrot.lane.b32.xlu0 %v4197, 24
      %v4278 = vpop.permute.xlu0 %4277
      %4279 = vrot.lane.b32.xlu0 %v4198, 24
      %v4280 = vpop.permute.xlu0 %4279
      %4281 = vrot.lane.b32.xlu0 %v4199, 24
      %v4282 = vpop.permute.xlu0 %4281
      %4283 = vrot.lane.b32.xlu0 %v4200, 24
      %v4284 = vpop.permute.xlu0 %4283
      %4285 = vrot.lane.b32.xlu0 %v4201, 24
      %v4286 = vpop.permute.xlu0 %4285
      %4287 = vrot.lane.b32.xlu0 %v4202, 24
      %v4288 = vpop.permute.xlu0 %4287
      %4289 = vrot.lane.b32.xlu0 %v4203, 24
      %v4290 = vpop.permute.xlu0 %4289
      %4291 = vrot.lane.b32.xlu0 %v4204, 24
      %v4292 = vpop.permute.xlu0 %4291
      %4293 = vrot.lane.b32.xlu0 %v4205, 24
      %v4294 = vpop.permute.xlu0 %4293
      %4295 = vrot.lane.b32.xlu0 %v4206, 24
      %v4296 = vpop.permute.xlu0 %4295
      %4297 = vrot.lane.b32.xlu0 %v4207, 24
      %v4298 = vpop.permute.xlu0 %4297
      %4299 = vrot.lane.b32.xlu0 %v4208, 24
      %v4300 = vpop.permute.xlu0 %4299
      %4301 = vrot.lane.b32.xlu0 %v4209, 24
      %v4302 = vpop.permute.xlu0 %4301
      %4303 = vrot.lane.b32.xlu0 %v4210, 24
      %v4304 = vpop.permute.xlu0 %4303
      %4305 = vrot.lane.b32.xlu0 %v4211, 24
      %v4306 = vpop.permute.xlu0 %4305
      %4307 = vrot.lane.b32.xlu0 %v4212, 24
      %v4308 = vpop.permute.xlu0 %4307
      %vm4341 = vcmask 220352
      %4342 = vst.msk [vmem:[#allocation5] sm:$0xff] %vm4341, %v4246
      %4343 = vst.msk [vmem:[#allocation5 + $0x8] sm:$0xff] %vm4341, %v4248
      %4344 = vst.msk [vmem:[#allocation5 + $0x10] sm:$0xff] %vm4341, %v4250
      %4345 = vst.msk [vmem:[#allocation5 + $0x18] sm:$0xff] %vm4341, %v4252
      %4346 = vst.msk [vmem:[#allocation5 + $0x20] sm:$0xff] %vm4341, %v4254
      %4347 = vst.msk [vmem:[#allocation5 + $0x28] sm:$0xff] %vm4341, %v4256
      %4348 = vst.msk [vmem:[#allocation5 + $0x30] sm:$0xff] %vm4341, %v4258
      %4349 = vst.msk [vmem:[#allocation5 + $0x38] sm:$0xff] %vm4341, %v4260
      %4350 = vst.msk [vmem:[#allocation5 + $0x40] sm:$0xff] %vm4341, %v4262
      %4351 = vst.msk [vmem:[#allocation5 + $0x48] sm:$0xff] %vm4341, %v4264
      %4352 = vst.msk [vmem:[#allocation5 + $0x50] sm:$0xff] %vm4341, %v4266
      %4353 = vst.msk [vmem:[#allocation5 + $0x58] sm:$0xff] %vm4341, %v4268
      %4354 = vst.msk [vmem:[#allocation5 + $0x60] sm:$0xff] %vm4341, %v4270
      %4355 = vst.msk [vmem:[#allocation5 + $0x68] sm:$0xff] %vm4341, %v4272
      %4356 = vst.msk [vmem:[#allocation5 + $0x70] sm:$0xff] %vm4341, %v4274
      %4357 = vst.msk [vmem:[#allocation5 + $0x78] sm:$0xff] %vm4341, %v4276
      %4358 = vst.msk [vmem:[#allocation5 + $0x80] sm:$0xff] %vm4341, %v4278
      %4359 = vst.msk [vmem:[#allocation5 + $0x88] sm:$0xff] %vm4341, %v4280
      %4360 = vst.msk [vmem:[#allocation5 + $0x90] sm:$0xff] %vm4341, %v4282
      %4361 = vst.msk [vmem:[#allocation5 + $0x98] sm:$0xff] %vm4341, %v4284
      %4362 = vst.msk [vmem:[#allocation5 + $0xa0] sm:$0xff] %vm4341, %v4286
      %4363 = vst.msk [vmem:[#allocation5 + $0xa8] sm:$0xff] %vm4341, %v4288
      %4364 = vst.msk [vmem:[#allocation5 + $0xb0] sm:$0xff] %vm4341, %v4290
      %4365 = vst.msk [vmem:[#allocation5 + $0xb8] sm:$0xff] %vm4341, %v4292
      %4366 = vst.msk [vmem:[#allocation5 + $0xc0] sm:$0xff] %vm4341, %v4294
      %4367 = vst.msk [vmem:[#allocation5 + $0xc8] sm:$0xff] %vm4341, %v4296
      %4368 = vst.msk [vmem:[#allocation5 + $0xd0] sm:$0xff] %vm4341, %v4298
      %4369 = vst.msk [vmem:[#allocation5 + $0xd8] sm:$0xff] %vm4341, %v4300
      %4370 = vst.msk [vmem:[#allocation5 + $0xe0] sm:$0xff] %vm4341, %v4302
      %4371 = vst.msk [vmem:[#allocation5 + $0xe8] sm:$0xff] %vm4341, %v4304
      %4372 = vst.msk [vmem:[#allocation5 + $0xf0] sm:$0xff] %vm4341, %v4306
      %4373 = vst.msk [vmem:[#allocation5 + $0xf8] sm:$0xff] %vm4341, %v4308
      %v4374 = vld [vmem:[#allocation5] sm:$0xff]
      %v4375 = vld [vmem:[#allocation5 + $0x8] sm:$0xff]
      %v4376 = vld [vmem:[#allocation5 + $0x10] sm:$0xff]
      %v4377 = vld [vmem:[#allocation5 + $0x18] sm:$0xff]
      %v4378 = vld [vmem:[#allocation5 + $0x20] sm:$0xff]
      %v4379 = vld [vmem:[#allocation5 + $0x28] sm:$0xff]
      %v4380 = vld [vmem:[#allocation5 + $0x30] sm:$0xff]
      %v4381 = vld [vmem:[#allocation5 + $0x38] sm:$0xff]
      %v4382 = vld [vmem:[#allocation5 + $0x40] sm:$0xff]
      %v4383 = vld [vmem:[#allocation5 + $0x48] sm:$0xff]
      %v4384 = vld [vmem:[#allocation5 + $0x50] sm:$0xff]
      %v4385 = vld [vmem:[#allocation5 + $0x58] sm:$0xff]
      %v4386 = vld [vmem:[#allocation5 + $0x60] sm:$0xff]
      %v4387 = vld [vmem:[#allocation5 + $0x68] sm:$0xff]
      %v4388 = vld [vmem:[#allocation5 + $0x70] sm:$0xff]
      %v4389 = vld [vmem:[#allocation5 + $0x78] sm:$0xff]
      %v4390 = vld [vmem:[#allocation5 + $0x80] sm:$0xff]
      %v4391 = vld [vmem:[#allocation5 + $0x88] sm:$0xff]
      %v4392 = vld [vmem:[#allocation5 + $0x90] sm:$0xff]
      %v4393 = vld [vmem:[#allocation5 + $0x98] sm:$0xff]
      %v4394 = vld [vmem:[#allocation5 + $0xa0] sm:$0xff]
      %v4395 = vld [vmem:[#allocation5 + $0xa8] sm:$0xff]
      %v4396 = vld [vmem:[#allocation5 + $0xb0] sm:$0xff]
      %v4397 = vld [vmem:[#allocation5 + $0xb8] sm:$0xff]
      %v4398 = vld [vmem:[#allocation5 + $0xc0] sm:$0xff]
      %v4399 = vld [vmem:[#allocation5 + $0xc8] sm:$0xff]
      %v4400 = vld [vmem:[#allocation5 + $0xd0] sm:$0xff]
      %v4401 = vld [vmem:[#allocation5 + $0xd8] sm:$0xff]
      %v4402 = vld [vmem:[#allocation5 + $0xe0] sm:$0xff]
      %v4403 = vld [vmem:[#allocation5 + $0xe8] sm:$0xff]
      %v4404 = vld [vmem:[#allocation5 + $0xf0] sm:$0xff]
      %v4405 = vld [vmem:[#allocation5 + $0xf8] sm:$0xff]
      %v4406 = vld [vmem:[%s4] sm:$0xff]
      %v4407 = vld [vmem:[%s4 + $0x8] sm:$0xff]
      %v4408 = vld [vmem:[%s4 + $0x10] sm:$0xff]
      %v4409 = vld [vmem:[%s4 + $0x18] sm:$0x7]
      %v4410 = vld [vmem:[%s5] sm:$0x1]
      %v4412 = vperm.slane %v4410, 0
      %vm4414 = vcmask 220160
      %v4416 = vsel %vm4414, %v4374, 0
      %v4419 = vsel %vm4414, %v4375, 0
      %v4422 = vsel %vm4414, %v4376, 0
      %v4425 = vsel %vm4414, %v4377, 0
      %v4428 = vsel %vm4414, %v4378, 0
      %v4431 = vsel %vm4414, %v4379, 0
      %v4434 = vsel %vm4414, %v4380, 0
      %v4437 = vsel %vm4414, %v4381, 0
      %v4440 = vsel %vm4414, %v4382, 0
      %v4443 = vsel %vm4414, %v4383, 0
      %v4446 = vsel %vm4414, %v4384, 0
      %v4449 = vsel %vm4414, %v4385, 0
      %v4452 = vsel %vm4414, %v4386, 0
      %v4455 = vsel %vm4414, %v4387, 0
      %v4458 = vsel %vm4414, %v4388, 0
      %v4461 = vsel %vm4414, %v4389, 0
      %v4464 = vsel %vm4414, %v4390, 0
      %v4467 = vsel %vm4414, %v4391, 0
      %v4470 = vsel %vm4414, %v4392, 0
      %v4473 = vsel %vm4414, %v4393, 0
      %v4476 = vsel %vm4414, %v4394, 0
      %v4479 = vsel %vm4414, %v4395, 0
      %v4482 = vsel %vm4414, %v4396, 0
      %v4485 = vsel %vm4414, %v4397, 0
      %v4488 = vsel %vm4414, %v4398, 0
      %v4491 = vsel %vm4414, %v4399, 0
      %v4494 = vsel %vm4414, %v4400, 0
      %v4497 = vsel %vm4414, %v4401, 0
      %v4500 = vsel %vm4414, %v4402, 0
      %v4503 = vsel %vm4414, %v4403, 0
      %v4506 = vsel %vm4414, %v4404, 0
      %v4509 = vsel %vm4414, %v4405, 0
      %vm4511 = vcmask 1042432
      %v4513 = vsel %vm4511, %v4409, 0
      %4515 = vmatpush.msra.mxu0 0.0
      %4516 = vmatpush.msra.mxu0 0.0
      %4517 = vmatpush.msra.mxu0 0.0
      %4518 = vmatpush.msra.mxu0 0.0
      %4519 = vmatpush.msra.mxu0 0.0
      %4520 = vmatpush.msra.mxu0 0.0
      %4521 = vmatpush.msra.mxu0 0.0
      %4522 = vmatpush.msra.mxu0 0.0
      %4523 = vmatpush.msra.mxu0 0.0
      %4524 = vmatpush.msra.mxu0 0.0
      %4525 = vmatpush.msra.mxu0 0.0
      %4526 = vmatpush.msra.mxu0 0.0
      %4527 = vmatpush.msra.mxu0 %v4513
      %4528 = vmatpush.msra.mxu0 %v4408
      %4529 = vmatpush.msra.mxu0 %v4407
      %4530 = vmatpush.msra.mxu0 %v4406
      %4531 = vmatmul.f32.gmra.mxu0 %v4416
      %v4532 = vpop.f32.mrf.mxu0
      %v4533 = vadd.f32 %v4412, %v4532
      %4534 = vmatmul.f32.gmra.mxu0 %v4419
      %v4535 = vpop.f32.mrf.mxu0
      %v4536 = vadd.f32 %v4412, %v4535
      %4537 = vmatmul.f32.gmra.mxu0 %v4422
      %v4538 = vpop.f32.mrf.mxu0
      %v4539 = vadd.f32 %v4412, %v4538
      %4540 = vmatmul.f32.gmra.mxu0 %v4425
      %v4541 = vpop.f32.mrf.mxu0
      %v4542 = vadd.f32 %v4412, %v4541
      %4543 = vmatmul.f32.gmra.mxu0 %v4428
      %v4544 = vpop.f32.mrf.mxu0
      %v4545 = vadd.f32 %v4412, %v4544
      %4546 = vmatmul.f32.gmra.mxu0 %v4431
      %v4547 = vpop.f32.mrf.mxu0
      %v4548 = vadd.f32 %v4412, %v4547
      %4549 = vmatmul.f32.gmra.mxu0 %v4434
      %v4550 = vpop.f32.mrf.mxu0
      %v4551 = vadd.f32 %v4412, %v4550
      %4552 = vmatmul.f32.gmra.mxu0 %v4437
      %v4553 = vpop.f32.mrf.mxu0
      %v4554 = vadd.f32 %v4412, %v4553
      %4555 = vmatmul.f32.gmra.mxu0 %v4440
      %v4556 = vpop.f32.mrf.mxu0
      %v4557 = vadd.f32 %v4412, %v4556
      %4558 = vmatmul.f32.gmra.mxu0 %v4443
      %v4559 = vpop.f32.mrf.mxu0
      %v4560 = vadd.f32 %v4412, %v4559
      %4561 = vmatmul.f32.gmra.mxu0 %v4446
      %v4562 = vpop.f32.mrf.mxu0
      %v4563 = vadd.f32 %v4412, %v4562
      %4564 = vmatmul.f32.gmra.mxu0 %v4449
      %v4565 = vpop.f32.mrf.mxu0
      %v4566 = vadd.f32 %v4412, %v4565
      %4567 = vmatmul.f32.gmra.mxu0 %v4452
      %v4568 = vpop.f32.mrf.mxu0
      %v4569 = vadd.f32 %v4412, %v4568
      %4570 = vmatmul.f32.gmra.mxu0 %v4455
      %v4571 = vpop.f32.mrf.mxu0
      %v4572 = vadd.f32 %v4412, %v4571
      %4573 = vmatmul.f32.gmra.mxu0 %v4458
      %v4574 = vpop.f32.mrf.mxu0
      %v4575 = vadd.f32 %v4412, %v4574
      %4576 = vmatmul.f32.gmra.mxu0 %v4461
      %v4577 = vpop.f32.mrf.mxu0
      %v4578 = vadd.f32 %v4412, %v4577
      %4579 = vmatmul.f32.gmra.mxu0 %v4464
      %v4580 = vpop.f32.mrf.mxu0
      %v4581 = vadd.f32 %v4412, %v4580
      %4582 = vmatmul.f32.gmra.mxu0 %v4467
      %v4583 = vpop.f32.mrf.mxu0
      %v4584 = vadd.f32 %v4412, %v4583
      %4585 = vmatmul.f32.gmra.mxu0 %v4470
      %v4586 = vpop.f32.mrf.mxu0
      %v4587 = vadd.f32 %v4412, %v4586
      %4588 = vmatmul.f32.gmra.mxu0 %v4473
      %v4589 = vpop.f32.mrf.mxu0
      %v4590 = vadd.f32 %v4412, %v4589
      %4591 = vmatmul.f32.gmra.mxu0 %v4476
      %v4592 = vpop.f32.mrf.mxu0
      %v4593 = vadd.f32 %v4412, %v4592
      %4594 = vmatmul.f32.gmra.mxu0 %v4479
      %v4595 = vpop.f32.mrf.mxu0
      %v4596 = vadd.f32 %v4412, %v4595
      %4597 = vmatmul.f32.gmra.mxu0 %v4482
      %v4598 = vpop.f32.mrf.mxu0
      %v4599 = vadd.f32 %v4412, %v4598
      %4600 = vmatmul.f32.gmra.mxu0 %v4485
      %v4601 = vpop.f32.mrf.mxu0
      %v4602 = vadd.f32 %v4412, %v4601
      %4603 = vmatmul.f32.gmra.mxu0 %v4488
      %v4604 = vpop.f32.mrf.mxu0
      %v4605 = vadd.f32 %v4412, %v4604
      %4606 = vmatmul.f32.gmra.mxu0 %v4491
      %v4607 = vpop.f32.mrf.mxu0
      %v4608 = vadd.f32 %v4412, %v4607
      %4609 = vmatmul.f32.gmra.mxu0 %v4494
      %v4610 = vpop.f32.mrf.mxu0
      %v4611 = vadd.f32 %v4412, %v4610
      %4612 = vmatmul.f32.gmra.mxu0 %v4497
      %v4613 = vpop.f32.mrf.mxu0
      %v4614 = vadd.f32 %v4412, %v4613
      %4615 = vmatmul.f32.gmra.mxu0 %v4500
      %v4616 = vpop.f32.mrf.mxu0
      %v4617 = vadd.f32 %v4412, %v4616
      %4618 = vmatmul.f32.gmra.mxu0 %v4503
      %v4619 = vpop.f32.mrf.mxu0
      %v4620 = vadd.f32 %v4412, %v4619
      %4621 = vmatmul.f32.gmra.mxu0 %v4506
      %v4622 = vpop.f32.mrf.mxu0
      %v4623 = vadd.f32 %v4412, %v4622
      %4624 = vmatmul.f32.gmra.mxu0 %v4509
      %v4625 = vpop.f32.mrf.mxu0
      %v4626 = vadd.f32 %v4412, %v4625
      %4627 = vdwg.mxu0
      %v4628 = vxor.u32 %v4533, 2147483648
      %v4629 = vxor.u32 %v4536, 2147483648
      %v4630 = vxor.u32 %v4539, 2147483648
      %v4631 = vxor.u32 %v4542, 2147483648
      %v4632 = vxor.u32 %v4545, 2147483648
      %v4633 = vxor.u32 %v4548, 2147483648
      %v4634 = vxor.u32 %v4551, 2147483648
      %v4635 = vxor.u32 %v4554, 2147483648
      %v4636 = vxor.u32 %v4557, 2147483648
      %v4637 = vxor.u32 %v4560, 2147483648
      %v4638 = vxor.u32 %v4563, 2147483648
      %v4639 = vxor.u32 %v4566, 2147483648
      %v4640 = vxor.u32 %v4569, 2147483648
      %v4641 = vxor.u32 %v4572, 2147483648
      %v4642 = vxor.u32 %v4575, 2147483648
      %v4643 = vxor.u32 %v4578, 2147483648
      %v4644 = vxor.u32 %v4581, 2147483648
      %v4645 = vxor.u32 %v4584, 2147483648
      %v4646 = vxor.u32 %v4587, 2147483648
      %v4647 = vxor.u32 %v4590, 2147483648
      %v4648 = vxor.u32 %v4593, 2147483648
      %v4649 = vxor.u32 %v4596, 2147483648
      %v4650 = vxor.u32 %v4599, 2147483648
      %v4651 = vxor.u32 %v4602, 2147483648
      %v4652 = vxor.u32 %v4605, 2147483648
      %v4653 = vxor.u32 %v4608, 2147483648
      %v4654 = vxor.u32 %v4611, 2147483648
      %v4655 = vxor.u32 %v4614, 2147483648
      %v4656 = vxor.u32 %v4617, 2147483648
      %v4657 = vxor.u32 %v4620, 2147483648
      %v4658 = vxor.u32 %v4623, 2147483648
      %v4659 = vxor.u32 %v4626, 2147483648
      %v4660 = vmul.f32 %v4628, 1.442695
      %v4661 = vpow.pop %v4660
      %v4662 = vmul.f32 %v4629, 1.442695
      %v4663 = vpow.pop %v4662
      %v4664 = vmul.f32 %v4630, 1.442695
      %v4665 = vpow.pop %v4664
      %v4666 = vmul.f32 %v4631, 1.442695
      %v4667 = vpow.pop %v4666
      %v4668 = vmul.f32 %v4632, 1.442695
      %v4669 = vpow.pop %v4668
      %v4670 = vmul.f32 %v4633, 1.442695
      %v4671 = vpow.pop %v4670
      %v4672 = vmul.f32 %v4634, 1.442695
      %v4673 = vpow.pop %v4672
      %v4674 = vmul.f32 %v4635, 1.442695
      %v4675 = vpow.pop %v4674
      %v4676 = vmul.f32 %v4636, 1.442695
      %v4677 = vpow.pop %v4676
      %v4678 = vmul.f32 %v4637, 1.442695
      %v4679 = vpow.pop %v4678
      %v4680 = vmul.f32 %v4638, 1.442695
      %v4681 = vpow.pop %v4680
      %v4682 = vmul.f32 %v4639, 1.442695
      %v4683 = vpow.pop %v4682
      %v4684 = vmul.f32 %v4640, 1.442695
      %v4685 = vpow.pop %v4684
      %v4686 = vmul.f32 %v4641, 1.442695
      %v4687 = vpow.pop %v4686
      %v4688 = vmul.f32 %v4642, 1.442695
      %v4689 = vpow.pop %v4688
      %v4690 = vmul.f32 %v4643, 1.442695
      %v4691 = vpow.pop %v4690
      %v4692 = vmul.f32 %v4644, 1.442695
      %v4693 = vpow.pop %v4692
      %v4694 = vmul.f32 %v4645, 1.442695
      %v4695 = vpow.pop %v4694
      %v4696 = vmul.f32 %v4646, 1.442695
      %v4697 = vpow.pop %v4696
      %v4698 = vmul.f32 %v4647, 1.442695
      %v4699 = vpow.pop %v4698
      %v4700 = vmul.f32 %v4648, 1.442695
      %v4701 = vpow.pop %v4700
      %v4702 = vmul.f32 %v4649, 1.442695
      %v4703 = vpow.pop %v4702
      %v4704 = vmul.f32 %v4650, 1.442695
      %v4705 = vpow.pop %v4704
      %v4706 = vmul.f32 %v4651, 1.442695
      %v4707 = vpow.pop %v4706
      %v4708 = vmul.f32 %v4652, 1.442695
      %v4709 = vpow.pop %v4708
      %v4710 = vmul.f32 %v4653, 1.442695
      %v4711 = vpow.pop %v4710
      %v4712 = vmul.f32 %v4654, 1.442695
      %v4713 = vpow.pop %v4712
      %v4714 = vmul.f32 %v4655, 1.442695
      %v4715 = vpow.pop %v4714
      %v4716 = vmul.f32 %v4656, 1.442695
      %v4717 = vpow.pop %v4716
      %v4718 = vmul.f32 %v4657, 1.442695
      %v4719 = vpow.pop %v4718
      %v4720 = vmul.f32 %v4658, 1.442695
      %v4721 = vpow.pop %v4720
      %v4722 = vmul.f32 %v4659, 1.442695
      %v4723 = vpow.pop %v4722
      %v4724 = vadd.f32 %v4661, 1.0
      %v4725 = vadd.f32 %v4663, 1.0
      %v4726 = vadd.f32 %v4665, 1.0
      %v4727 = vadd.f32 %v4667, 1.0
      %v4728 = vadd.f32 %v4669, 1.0
      %v4729 = vadd.f32 %v4671, 1.0
      %v4730 = vadd.f32 %v4673, 1.0
      %v4731 = vadd.f32 %v4675, 1.0
      %v4732 = vadd.f32 %v4677, 1.0
      %v4733 = vadd.f32 %v4679, 1.0
      %v4734 = vadd.f32 %v4681, 1.0
      %v4735 = vadd.f32 %v4683, 1.0
      %v4736 = vadd.f32 %v4685, 1.0
      %v4737 = vadd.f32 %v4687, 1.0
      %v4738 = vadd.f32 %v4689, 1.0
      %v4739 = vadd.f32 %v4691, 1.0
      %v4740 = vadd.f32 %v4693, 1.0
      %v4741 = vadd.f32 %v4695, 1.0
      %v4742 = vadd.f32 %v4697, 1.0
      %v4743 = vadd.f32 %v4699, 1.0
      %v4744 = vadd.f32 %v4701, 1.0
      %v4745 = vadd.f32 %v4703, 1.0
      %v4746 = vadd.f32 %v4705, 1.0
      %v4747 = vadd.f32 %v4707, 1.0
      %v4748 = vadd.f32 %v4709, 1.0
      %v4749 = vadd.f32 %v4711, 1.0
      %v4750 = vadd.f32 %v4713, 1.0
      %v4751 = vadd.f32 %v4715, 1.0
      %v4752 = vadd.f32 %v4717, 1.0
      %v4753 = vadd.f32 %v4719, 1.0
      %v4754 = vadd.f32 %v4721, 1.0
      %v4755 = vadd.f32 %v4723, 1.0
      %v4756 = vrcp.pop %v4724
      %v4757 = vmul.f32 %v4724, %v4756
      %v4758 = vsub.f32 1.0, %v4757
      %v4759 = vmul.f32 %v4756, %v4758
      %v4760 = vadd.f32 %v4756, %v4759
      %vm4761 = vweird.f32 %v4724
      %vm4762 = vweird.f32 %v4756
      %vm4763 = vmor %vm4761, %vm4762
      %v4764 = vsel %vm4763, %v4756, %v4760
      %v4765 = vand.u32 2147483647, %v4724
      %vm4766 = vcmp.eq.f32.partialorder %v4765, 8.507059e+37
      %v4767 = vand.u32 %v4724, 2147483648
      %v4768 = vor.u32 1.1754944e-38, %v4767
      %v4769 = vsel %vm4766, %v4768, %v4764
      %v4770 = vmul.f32 1.0, %v4769
      %v4771 = vrcp.pop %v4725
      %v4772 = vmul.f32 %v4725, %v4771
      %v4773 = vsub.f32 1.0, %v4772
      %v4774 = vmul.f32 %v4771, %v4773
      %v4775 = vadd.f32 %v4771, %v4774
      %vm4776 = vweird.f32 %v4725
      %vm4777 = vweird.f32 %v4771
      %vm4778 = vmor %vm4776, %vm4777
      %v4779 = vsel %vm4778, %v4771, %v4775
      %v4780 = vand.u32 2147483647, %v4725
      %vm4781 = vcmp.eq.f32.partialorder %v4780, 8.507059e+37
      %v4782 = vand.u32 %v4725, 2147483648
      %v4783 = vor.u32 1.1754944e-38, %v4782
      %v4784 = vsel %vm4781, %v4783, %v4779
      %v4785 = vmul.f32 1.0, %v4784
      %v4786 = vrcp.pop %v4726
      %v4787 = vmul.f32 %v4726, %v4786
      %v4788 = vsub.f32 1.0, %v4787
      %v4789 = vmul.f32 %v4786, %v4788
      %v4790 = vadd.f32 %v4786, %v4789
      %vm4791 = vweird.f32 %v4726
      %vm4792 = vweird.f32 %v4786
      %vm4793 = vmor %vm4791, %vm4792
      %v4794 = vsel %vm4793, %v4786, %v4790
      %v4795 = vand.u32 2147483647, %v4726
      %vm4796 = vcmp.eq.f32.partialorder %v4795, 8.507059e+37
      %v4797 = vand.u32 %v4726, 2147483648
      %v4798 = vor.u32 1.1754944e-38, %v4797
      %v4799 = vsel %vm4796, %v4798, %v4794
      %v4800 = vmul.f32 1.0, %v4799
      %v4801 = vrcp.pop %v4727
      %v4802 = vmul.f32 %v4727, %v4801
      %v4803 = vsub.f32 1.0, %v4802
      %v4804 = vmul.f32 %v4801, %v4803
      %v4805 = vadd.f32 %v4801, %v4804
      %vm4806 = vweird.f32 %v4727
      %vm4807 = vweird.f32 %v4801
      %vm4808 = vmor %vm4806, %vm4807
      %v4809 = vsel %vm4808, %v4801, %v4805
      %v4810 = vand.u32 2147483647, %v4727
      %vm4811 = vcmp.eq.f32.partialorder %v4810, 8.507059e+37
      %v4812 = vand.u32 %v4727, 2147483648
      %v4813 = vor.u32 1.1754944e-38, %v4812
      %v4814 = vsel %vm4811, %v4813, %v4809
      %v4815 = vmul.f32 1.0, %v4814
      %v4816 = vrcp.pop %v4728
      %v4817 = vmul.f32 %v4728, %v4816
      %v4818 = vsub.f32 1.0, %v4817
      %v4819 = vmul.f32 %v4816, %v4818
      %v4820 = vadd.f32 %v4816, %v4819
      %vm4821 = vweird.f32 %v4728
      %vm4822 = vweird.f32 %v4816
      %vm4823 = vmor %vm4821, %vm4822
      %v4824 = vsel %vm4823, %v4816, %v4820
      %v4825 = vand.u32 2147483647, %v4728
      %vm4826 = vcmp.eq.f32.partialorder %v4825, 8.507059e+37
      %v4827 = vand.u32 %v4728, 2147483648
      %v4828 = vor.u32 1.1754944e-38, %v4827
      %v4829 = vsel %vm4826, %v4828, %v4824
      %v4830 = vmul.f32 1.0, %v4829
      %v4831 = vrcp.pop %v4729
      %v4832 = vmul.f32 %v4729, %v4831
      %v4833 = vsub.f32 1.0, %v4832
      %v4834 = vmul.f32 %v4831, %v4833
      %v4835 = vadd.f32 %v4831, %v4834
      %vm4836 = vweird.f32 %v4729
      %vm4837 = vweird.f32 %v4831
      %vm4838 = vmor %vm4836, %vm4837
      %v4839 = vsel %vm4838, %v4831, %v4835
      %v4840 = vand.u32 2147483647, %v4729
      %vm4841 = vcmp.eq.f32.partialorder %v4840, 8.507059e+37
      %v4842 = vand.u32 %v4729, 2147483648
      %v4843 = vor.u32 1.1754944e-38, %v4842
      %v4844 = vsel %vm4841, %v4843, %v4839
      %v4845 = vmul.f32 1.0, %v4844
      %v4846 = vrcp.pop %v4730
      %v4847 = vmul.f32 %v4730, %v4846
      %v4848 = vsub.f32 1.0, %v4847
      %v4849 = vmul.f32 %v4846, %v4848
      %v4850 = vadd.f32 %v4846, %v4849
      %vm4851 = vweird.f32 %v4730
      %vm4852 = vweird.f32 %v4846
      %vm4853 = vmor %vm4851, %vm4852
      %v4854 = vsel %vm4853, %v4846, %v4850
      %v4855 = vand.u32 2147483647, %v4730
      %vm4856 = vcmp.eq.f32.partialorder %v4855, 8.507059e+37
      %v4857 = vand.u32 %v4730, 2147483648
      %v4858 = vor.u32 1.1754944e-38, %v4857
      %v4859 = vsel %vm4856, %v4858, %v4854
      %v4860 = vmul.f32 1.0, %v4859
      %v4861 = vrcp.pop %v4731
      %v4862 = vmul.f32 %v4731, %v4861
      %v4863 = vsub.f32 1.0, %v4862
      %v4864 = vmul.f32 %v4861, %v4863
      %v4865 = vadd.f32 %v4861, %v4864
      %vm4866 = vweird.f32 %v4731
      %vm4867 = vweird.f32 %v4861
      %vm4868 = vmor %vm4866, %vm4867
      %v4869 = vsel %vm4868, %v4861, %v4865
      %v4870 = vand.u32 2147483647, %v4731
      %vm4871 = vcmp.eq.f32.partialorder %v4870, 8.507059e+37
      %v4872 = vand.u32 %v4731, 2147483648
      %v4873 = vor.u32 1.1754944e-38, %v4872
      %v4874 = vsel %vm4871, %v4873, %v4869
      %v4875 = vmul.f32 1.0, %v4874
      %v4876 = vrcp.pop %v4732
      %v4877 = vmul.f32 %v4732, %v4876
      %v4878 = vsub.f32 1.0, %v4877
      %v4879 = vmul.f32 %v4876, %v4878
      %v4880 = vadd.f32 %v4876, %v4879
      %vm4881 = vweird.f32 %v4732
      %vm4882 = vweird.f32 %v4876
      %vm4883 = vmor %vm4881, %vm4882
      %v4884 = vsel %vm4883, %v4876, %v4880
      %v4885 = vand.u32 2147483647, %v4732
      %vm4886 = vcmp.eq.f32.partialorder %v4885, 8.507059e+37
      %v4887 = vand.u32 %v4732, 2147483648
      %v4888 = vor.u32 1.1754944e-38, %v4887
      %v4889 = vsel %vm4886, %v4888, %v4884
      %v4890 = vmul.f32 1.0, %v4889
      %v4891 = vrcp.pop %v4733
      %v4892 = vmul.f32 %v4733, %v4891
      %v4893 = vsub.f32 1.0, %v4892
      %v4894 = vmul.f32 %v4891, %v4893
      %v4895 = vadd.f32 %v4891, %v4894
      %vm4896 = vweird.f32 %v4733
      %vm4897 = vweird.f32 %v4891
      %vm4898 = vmor %vm4896, %vm4897
      %v4899 = vsel %vm4898, %v4891, %v4895
      %v4900 = vand.u32 2147483647, %v4733
      %vm4901 = vcmp.eq.f32.partialorder %v4900, 8.507059e+37
      %v4902 = vand.u32 %v4733, 2147483648
      %v4903 = vor.u32 1.1754944e-38, %v4902
      %v4904 = vsel %vm4901, %v4903, %v4899
      %v4905 = vmul.f32 1.0, %v4904
      %v4906 = vrcp.pop %v4734
      %v4907 = vmul.f32 %v4734, %v4906
      %v4908 = vsub.f32 1.0, %v4907
      %v4909 = vmul.f32 %v4906, %v4908
      %v4910 = vadd.f32 %v4906, %v4909
      %vm4911 = vweird.f32 %v4734
      %vm4912 = vweird.f32 %v4906
      %vm4913 = vmor %vm4911, %vm4912
      %v4914 = vsel %vm4913, %v4906, %v4910
      %v4915 = vand.u32 2147483647, %v4734
      %vm4916 = vcmp.eq.f32.partialorder %v4915, 8.507059e+37
      %v4917 = vand.u32 %v4734, 2147483648
      %v4918 = vor.u32 1.1754944e-38, %v4917
      %v4919 = vsel %vm4916, %v4918, %v4914
      %v4920 = vmul.f32 1.0, %v4919
      %v4921 = vrcp.pop %v4735
      %v4922 = vmul.f32 %v4735, %v4921
      %v4923 = vsub.f32 1.0, %v4922
      %v4924 = vmul.f32 %v4921, %v4923
      %v4925 = vadd.f32 %v4921, %v4924
      %vm4926 = vweird.f32 %v4735
      %vm4927 = vweird.f32 %v4921
      %vm4928 = vmor %vm4926, %vm4927
      %v4929 = vsel %vm4928, %v4921, %v4925
      %v4930 = vand.u32 2147483647, %v4735
      %vm4931 = vcmp.eq.f32.partialorder %v4930, 8.507059e+37
      %v4932 = vand.u32 %v4735, 2147483648
      %v4933 = vor.u32 1.1754944e-38, %v4932
      %v4934 = vsel %vm4931, %v4933, %v4929
      %v4935 = vmul.f32 1.0, %v4934
      %v4936 = vrcp.pop %v4736
      %v4937 = vmul.f32 %v4736, %v4936
      %v4938 = vsub.f32 1.0, %v4937
      %v4939 = vmul.f32 %v4936, %v4938
      %v4940 = vadd.f32 %v4936, %v4939
      %vm4941 = vweird.f32 %v4736
      %vm4942 = vweird.f32 %v4936
      %vm4943 = vmor %vm4941, %vm4942
      %v4944 = vsel %vm4943, %v4936, %v4940
      %v4945 = vand.u32 2147483647, %v4736
      %vm4946 = vcmp.eq.f32.partialorder %v4945, 8.507059e+37
      %v4947 = vand.u32 %v4736, 2147483648
      %v4948 = vor.u32 1.1754944e-38, %v4947
      %v4949 = vsel %vm4946, %v4948, %v4944
      %v4950 = vmul.f32 1.0, %v4949
      %v4951 = vrcp.pop %v4737
      %v4952 = vmul.f32 %v4737, %v4951
      %v4953 = vsub.f32 1.0, %v4952
      %v4954 = vmul.f32 %v4951, %v4953
      %v4955 = vadd.f32 %v4951, %v4954
      %vm4956 = vweird.f32 %v4737
      %vm4957 = vweird.f32 %v4951
      %vm4958 = vmor %vm4956, %vm4957
      %v4959 = vsel %vm4958, %v4951, %v4955
      %v4960 = vand.u32 2147483647, %v4737
      %vm4961 = vcmp.eq.f32.partialorder %v4960, 8.507059e+37
      %v4962 = vand.u32 %v4737, 2147483648
      %v4963 = vor.u32 1.1754944e-38, %v4962
      %v4964 = vsel %vm4961, %v4963, %v4959
      %v4965 = vmul.f32 1.0, %v4964
      %v4966 = vrcp.pop %v4738
      %v4967 = vmul.f32 %v4738, %v4966
      %v4968 = vsub.f32 1.0, %v4967
      %v4969 = vmul.f32 %v4966, %v4968
      %v4970 = vadd.f32 %v4966, %v4969
      %vm4971 = vweird.f32 %v4738
      %vm4972 = vweird.f32 %v4966
      %vm4973 = vmor %vm4971, %vm4972
      %v4974 = vsel %vm4973, %v4966, %v4970
      %v4975 = vand.u32 2147483647, %v4738
      %vm4976 = vcmp.eq.f32.partialorder %v4975, 8.507059e+37
      %v4977 = vand.u32 %v4738, 2147483648
      %v4978 = vor.u32 1.1754944e-38, %v4977
      %v4979 = vsel %vm4976, %v4978, %v4974
      %v4980 = vmul.f32 1.0, %v4979
      %v4981 = vrcp.pop %v4739
      %v4982 = vmul.f32 %v4739, %v4981
      %v4983 = vsub.f32 1.0, %v4982
      %v4984 = vmul.f32 %v4981, %v4983
      %v4985 = vadd.f32 %v4981, %v4984
      %vm4986 = vweird.f32 %v4739
      %vm4987 = vweird.f32 %v4981
      %vm4988 = vmor %vm4986, %vm4987
      %v4989 = vsel %vm4988, %v4981, %v4985
      %v4990 = vand.u32 2147483647, %v4739
      %vm4991 = vcmp.eq.f32.partialorder %v4990, 8.507059e+37
      %v4992 = vand.u32 %v4739, 2147483648
      %v4993 = vor.u32 1.1754944e-38, %v4992
      %v4994 = vsel %vm4991, %v4993, %v4989
      %v4995 = vmul.f32 1.0, %v4994
      %v4996 = vrcp.pop %v4740
      %v4997 = vmul.f32 %v4740, %v4996
      %v4998 = vsub.f32 1.0, %v4997
      %v4999 = vmul.f32 %v4996, %v4998
      %v5000 = vadd.f32 %v4996, %v4999
      %vm5001 = vweird.f32 %v4740
      %vm5002 = vweird.f32 %v4996
      %vm5003 = vmor %vm5001, %vm5002
      %v5004 = vsel %vm5003, %v4996, %v5000
      %v5005 = vand.u32 2147483647, %v4740
      %vm5006 = vcmp.eq.f32.partialorder %v5005, 8.507059e+37
      %v5007 = vand.u32 %v4740, 2147483648
      %v5008 = vor.u32 1.1754944e-38, %v5007
      %v5009 = vsel %vm5006, %v5008, %v5004
      %v5010 = vmul.f32 1.0, %v5009
      %v5011 = vrcp.pop %v4741
      %v5012 = vmul.f32 %v4741, %v5011
      %v5013 = vsub.f32 1.0, %v5012
      %v5014 = vmul.f32 %v5011, %v5013
      %v5015 = vadd.f32 %v5011, %v5014
      %vm5016 = vweird.f32 %v4741
      %vm5017 = vweird.f32 %v5011
      %vm5018 = vmor %vm5016, %vm5017
      %v5019 = vsel %vm5018, %v5011, %v5015
      %v5020 = vand.u32 2147483647, %v4741
      %vm5021 = vcmp.eq.f32.partialorder %v5020, 8.507059e+37
      %v5022 = vand.u32 %v4741, 2147483648
      %v5023 = vor.u32 1.1754944e-38, %v5022
      %v5024 = vsel %vm5021, %v5023, %v5019
      %v5025 = vmul.f32 1.0, %v5024
      %v5026 = vrcp.pop %v4742
      %v5027 = vmul.f32 %v4742, %v5026
      %v5028 = vsub.f32 1.0, %v5027
      %v5029 = vmul.f32 %v5026, %v5028
      %v5030 = vadd.f32 %v5026, %v5029
      %vm5031 = vweird.f32 %v4742
      %vm5032 = vweird.f32 %v5026
      %vm5033 = vmor %vm5031, %vm5032
      %v5034 = vsel %vm5033, %v5026, %v5030
      %v5035 = vand.u32 2147483647, %v4742
      %vm5036 = vcmp.eq.f32.partialorder %v5035, 8.507059e+37
      %v5037 = vand.u32 %v4742, 2147483648
      %v5038 = vor.u32 1.1754944e-38, %v5037
      %v5039 = vsel %vm5036, %v5038, %v5034
      %v5040 = vmul.f32 1.0, %v5039
      %v5041 = vrcp.pop %v4743
      %v5042 = vmul.f32 %v4743, %v5041
      %v5043 = vsub.f32 1.0, %v5042
      %v5044 = vmul.f32 %v5041, %v5043
      %v5045 = vadd.f32 %v5041, %v5044
      %vm5046 = vweird.f32 %v4743
      %vm5047 = vweird.f32 %v5041
      %vm5048 = vmor %vm5046, %vm5047
      %v5049 = vsel %vm5048, %v5041, %v5045
      %v5050 = vand.u32 2147483647, %v4743
      %vm5051 = vcmp.eq.f32.partialorder %v5050, 8.507059e+37
      %v5052 = vand.u32 %v4743, 2147483648
      %v5053 = vor.u32 1.1754944e-38, %v5052
      %v5054 = vsel %vm5051, %v5053, %v5049
      %v5055 = vmul.f32 1.0, %v5054
      %v5056 = vrcp.pop %v4744
      %v5057 = vmul.f32 %v4744, %v5056
      %v5058 = vsub.f32 1.0, %v5057
      %v5059 = vmul.f32 %v5056, %v5058
      %v5060 = vadd.f32 %v5056, %v5059
      %vm5061 = vweird.f32 %v4744
      %vm5062 = vweird.f32 %v5056
      %vm5063 = vmor %vm5061, %vm5062
      %v5064 = vsel %vm5063, %v5056, %v5060
      %v5065 = vand.u32 2147483647, %v4744
      %vm5066 = vcmp.eq.f32.partialorder %v5065, 8.507059e+37
      %v5067 = vand.u32 %v4744, 2147483648
      %v5068 = vor.u32 1.1754944e-38, %v5067
      %v5069 = vsel %vm5066, %v5068, %v5064
      %v5070 = vmul.f32 1.0, %v5069
      %v5071 = vrcp.pop %v4745
      %v5072 = vmul.f32 %v4745, %v5071
      %v5073 = vsub.f32 1.0, %v5072
      %v5074 = vmul.f32 %v5071, %v5073
      %v5075 = vadd.f32 %v5071, %v5074
      %vm5076 = vweird.f32 %v4745
      %vm5077 = vweird.f32 %v5071
      %vm5078 = vmor %vm5076, %vm5077
      %v5079 = vsel %vm5078, %v5071, %v5075
      %v5080 = vand.u32 2147483647, %v4745
      %vm5081 = vcmp.eq.f32.partialorder %v5080, 8.507059e+37
      %v5082 = vand.u32 %v4745, 2147483648
      %v5083 = vor.u32 1.1754944e-38, %v5082
      %v5084 = vsel %vm5081, %v5083, %v5079
      %v5085 = vmul.f32 1.0, %v5084
      %v5086 = vrcp.pop %v4746
      %v5087 = vmul.f32 %v4746, %v5086
      %v5088 = vsub.f32 1.0, %v5087
      %v5089 = vmul.f32 %v5086, %v5088
      %v5090 = vadd.f32 %v5086, %v5089
      %vm5091 = vweird.f32 %v4746
      %vm5092 = vweird.f32 %v5086
      %vm5093 = vmor %vm5091, %vm5092
      %v5094 = vsel %vm5093, %v5086, %v5090
      %v5095 = vand.u32 2147483647, %v4746
      %vm5096 = vcmp.eq.f32.partialorder %v5095, 8.507059e+37
      %v5097 = vand.u32 %v4746, 2147483648
      %v5098 = vor.u32 1.1754944e-38, %v5097
      %v5099 = vsel %vm5096, %v5098, %v5094
      %v5100 = vmul.f32 1.0, %v5099
      %v5101 = vrcp.pop %v4747
      %v5102 = vmul.f32 %v4747, %v5101
      %v5103 = vsub.f32 1.0, %v5102
      %v5104 = vmul.f32 %v5101, %v5103
      %v5105 = vadd.f32 %v5101, %v5104
      %vm5106 = vweird.f32 %v4747
      %vm5107 = vweird.f32 %v5101
      %vm5108 = vmor %vm5106, %vm5107
      %v5109 = vsel %vm5108, %v5101, %v5105
      %v5110 = vand.u32 2147483647, %v4747
      %vm5111 = vcmp.eq.f32.partialorder %v5110, 8.507059e+37
      %v5112 = vand.u32 %v4747, 2147483648
      %v5113 = vor.u32 1.1754944e-38, %v5112
      %v5114 = vsel %vm5111, %v5113, %v5109
      %v5115 = vmul.f32 1.0, %v5114
      %v5116 = vrcp.pop %v4748
      %v5117 = vmul.f32 %v4748, %v5116
      %v5118 = vsub.f32 1.0, %v5117
      %v5119 = vmul.f32 %v5116, %v5118
      %v5120 = vadd.f32 %v5116, %v5119
      %vm5121 = vweird.f32 %v4748
      %vm5122 = vweird.f32 %v5116
      %vm5123 = vmor %vm5121, %vm5122
      %v5124 = vsel %vm5123, %v5116, %v5120
      %v5125 = vand.u32 2147483647, %v4748
      %vm5126 = vcmp.eq.f32.partialorder %v5125, 8.507059e+37
      %v5127 = vand.u32 %v4748, 2147483648
      %v5128 = vor.u32 1.1754944e-38, %v5127
      %v5129 = vsel %vm5126, %v5128, %v5124
      %v5130 = vmul.f32 1.0, %v5129
      %v5131 = vrcp.pop %v4749
      %v5132 = vmul.f32 %v4749, %v5131
      %v5133 = vsub.f32 1.0, %v5132
      %v5134 = vmul.f32 %v5131, %v5133
      %v5135 = vadd.f32 %v5131, %v5134
      %vm5136 = vweird.f32 %v4749
      %vm5137 = vweird.f32 %v5131
      %vm5138 = vmor %vm5136, %vm5137
      %v5139 = vsel %vm5138, %v5131, %v5135
      %v5140 = vand.u32 2147483647, %v4749
      %vm5141 = vcmp.eq.f32.partialorder %v5140, 8.507059e+37
      %v5142 = vand.u32 %v4749, 2147483648
      %v5143 = vor.u32 1.1754944e-38, %v5142
      %v5144 = vsel %vm5141, %v5143, %v5139
      %v5145 = vmul.f32 1.0, %v5144
      %v5146 = vrcp.pop %v4750
      %v5147 = vmul.f32 %v4750, %v5146
      %v5148 = vsub.f32 1.0, %v5147
      %v5149 = vmul.f32 %v5146, %v5148
      %v5150 = vadd.f32 %v5146, %v5149
      %vm5151 = vweird.f32 %v4750
      %vm5152 = vweird.f32 %v5146
      %vm5153 = vmor %vm5151, %vm5152
      %v5154 = vsel %vm5153, %v5146, %v5150
      %v5155 = vand.u32 2147483647, %v4750
      %vm5156 = vcmp.eq.f32.partialorder %v5155, 8.507059e+37
      %v5157 = vand.u32 %v4750, 2147483648
      %v5158 = vor.u32 1.1754944e-38, %v5157
      %v5159 = vsel %vm5156, %v5158, %v5154
      %v5160 = vmul.f32 1.0, %v5159
      %v5161 = vrcp.pop %v4751
      %v5162 = vmul.f32 %v4751, %v5161
      %v5163 = vsub.f32 1.0, %v5162
      %v5164 = vmul.f32 %v5161, %v5163
      %v5165 = vadd.f32 %v5161, %v5164
      %vm5166 = vweird.f32 %v4751
      %vm5167 = vweird.f32 %v5161
      %vm5168 = vmor %vm5166, %vm5167
      %v5169 = vsel %vm5168, %v5161, %v5165
      %v5170 = vand.u32 2147483647, %v4751
      %vm5171 = vcmp.eq.f32.partialorder %v5170, 8.507059e+37
      %v5172 = vand.u32 %v4751, 2147483648
      %v5173 = vor.u32 1.1754944e-38, %v5172
      %v5174 = vsel %vm5171, %v5173, %v5169
      %v5175 = vmul.f32 1.0, %v5174
      %v5176 = vrcp.pop %v4752
      %v5177 = vmul.f32 %v4752, %v5176
      %v5178 = vsub.f32 1.0, %v5177
      %v5179 = vmul.f32 %v5176, %v5178
      %v5180 = vadd.f32 %v5176, %v5179
      %vm5181 = vweird.f32 %v4752
      %vm5182 = vweird.f32 %v5176
      %vm5183 = vmor %vm5181, %vm5182
      %v5184 = vsel %vm5183, %v5176, %v5180
      %v5185 = vand.u32 2147483647, %v4752
      %vm5186 = vcmp.eq.f32.partialorder %v5185, 8.507059e+37
      %v5187 = vand.u32 %v4752, 2147483648
      %v5188 = vor.u32 1.1754944e-38, %v5187
      %v5189 = vsel %vm5186, %v5188, %v5184
      %v5190 = vmul.f32 1.0, %v5189
      %v5191 = vrcp.pop %v4753
      %v5192 = vmul.f32 %v4753, %v5191
      %v5193 = vsub.f32 1.0, %v5192
      %v5194 = vmul.f32 %v5191, %v5193
      %v5195 = vadd.f32 %v5191, %v5194
      %vm5196 = vweird.f32 %v4753
      %vm5197 = vweird.f32 %v5191
      %vm5198 = vmor %vm5196, %vm5197
      %v5199 = vsel %vm5198, %v5191, %v5195
      %v5200 = vand.u32 2147483647, %v4753
      %vm5201 = vcmp.eq.f32.partialorder %v5200, 8.507059e+37
      %v5202 = vand.u32 %v4753, 2147483648
      %v5203 = vor.u32 1.1754944e-38, %v5202
      %v5204 = vsel %vm5201, %v5203, %v5199
      %v5205 = vmul.f32 1.0, %v5204
      %v5206 = vrcp.pop %v4754
      %v5207 = vmul.f32 %v4754, %v5206
      %v5208 = vsub.f32 1.0, %v5207
      %v5209 = vmul.f32 %v5206, %v5208
      %v5210 = vadd.f32 %v5206, %v5209
      %vm5211 = vweird.f32 %v4754
      %vm5212 = vweird.f32 %v5206
      %vm5213 = vmor %vm5211, %vm5212
      %v5214 = vsel %vm5213, %v5206, %v5210
      %v5215 = vand.u32 2147483647, %v4754
      %vm5216 = vcmp.eq.f32.partialorder %v5215, 8.507059e+37
      %v5217 = vand.u32 %v4754, 2147483648
      %v5218 = vor.u32 1.1754944e-38, %v5217
      %v5219 = vsel %vm5216, %v5218, %v5214
      %v5220 = vmul.f32 1.0, %v5219
      %v5221 = vrcp.pop %v4755
      %v5222 = vmul.f32 %v4755, %v5221
      %v5223 = vsub.f32 1.0, %v5222
      %v5224 = vmul.f32 %v5221, %v5223
      %v5225 = vadd.f32 %v5221, %v5224
      %vm5226 = vweird.f32 %v4755
      %vm5227 = vweird.f32 %v5221
      %vm5228 = vmor %vm5226, %vm5227
      %v5229 = vsel %vm5228, %v5221, %v5225
      %v5230 = vand.u32 2147483647, %v4755
      %vm5231 = vcmp.eq.f32.partialorder %v5230, 8.507059e+37
      %v5232 = vand.u32 %v4755, 2147483648
      %v5233 = vor.u32 1.1754944e-38, %v5232
      %v5234 = vsel %vm5231, %v5233, %v5229
      %v5235 = vmul.f32 1.0, %v5234
      %v5236 = vmul.f32 %v2286, %v4770
      %v5237 = vmul.f32 %v2289, %v4785
      %v5238 = vmul.f32 %v2292, %v4800
      %v5239 = vmul.f32 %v2295, %v4815
      %v5240 = vmul.f32 %v2298, %v4830
      %v5241 = vmul.f32 %v2301, %v4845
      %v5242 = vmul.f32 %v2304, %v4860
      %v5243 = vmul.f32 %v2307, %v4875
      %v5244 = vmul.f32 %v2310, %v4890
      %v5245 = vmul.f32 %v2313, %v4905
      %v5246 = vmul.f32 %v2316, %v4920
      %v5247 = vmul.f32 %v2319, %v4935
      %v5248 = vmul.f32 %v2322, %v4950
      %v5249 = vmul.f32 %v2325, %v4965
      %v5250 = vmul.f32 %v2328, %v4980
      %v5251 = vmul.f32 %v2331, %v4995
      %v5252 = vmul.f32 %v2334, %v5010
      %v5253 = vmul.f32 %v2337, %v5025
      %v5254 = vmul.f32 %v2340, %v5040
      %v5255 = vmul.f32 %v2343, %v5055
      %v5256 = vmul.f32 %v2346, %v5070
      %v5257 = vmul.f32 %v2349, %v5085
      %v5258 = vmul.f32 %v2352, %v5100
      %v5259 = vmul.f32 %v2355, %v5115
      %v5260 = vmul.f32 %v2358, %v5130
      %v5261 = vmul.f32 %v2361, %v5145
      %v5262 = vmul.f32 %v2364, %v5160
      %v5263 = vmul.f32 %v2367, %v5175
      %v5264 = vmul.f32 %v2370, %v5190
      %v5265 = vmul.f32 %v2373, %v5205
      %v5266 = vmul.f32 %v2376, %v5220
      %v5267 = vmul.f32 %v2379, %v5235
      %v5268 = vld [vmem:[%s296] sm:$0xff]
      %v5269 = vld [vmem:[%s296 + $0x8] sm:$0xff]
      %v5270 = vld [vmem:[%s296 + $0x10] sm:$0xff]
      %v5271 = vld [vmem:[%s296 + $0x18] sm:$0xff]
      %v5272 = vld [vmem:[%s296 + $0x20] sm:$0xff]
      %v5273 = vld [vmem:[%s296 + $0x28] sm:$0xff]
      %v5274 = vld [vmem:[%s296 + $0x30] sm:$0xff]
      %v5275 = vld [vmem:[%s296 + $0x38] sm:$0xff]
      %v5276 = vld [vmem:[%s296 + $0x40] sm:$0xff]
      %v5277 = vld [vmem:[%s296 + $0x48] sm:$0xff]
      %v5278 = vld [vmem:[%s296 + $0x50] sm:$0xff]
      %v5279 = vld [vmem:[%s296 + $0x58] sm:$0xff]
      %v5280 = vld [vmem:[%s296 + $0x60] sm:$0xff]
      %v5281 = vld [vmem:[%s296 + $0x68] sm:$0xff]
      %v5282 = vld [vmem:[%s296 + $0x70] sm:$0xff]
      %v5283 = vld [vmem:[%s296 + $0x78] sm:$0xff]
      %v5284 = vld [vmem:[%s296 + $0x80] sm:$0xff]
      %v5285 = vld [vmem:[%s296 + $0x88] sm:$0xff]
      %v5286 = vld [vmem:[%s296 + $0x90] sm:$0xff]
      %v5287 = vld [vmem:[%s296 + $0x98] sm:$0xff]
      %v5288 = vld [vmem:[%s296 + $0xa0] sm:$0xff]
      %v5289 = vld [vmem:[%s296 + $0xa8] sm:$0xff]
      %v5290 = vld [vmem:[%s296 + $0xb0] sm:$0xff]
      %v5291 = vld [vmem:[%s296 + $0xb8] sm:$0xff]
      %v5292 = vld [vmem:[%s296 + $0xc0] sm:$0xff]
      %v5293 = vld [vmem:[%s296 + $0xc8] sm:$0xff]
      %v5294 = vld [vmem:[%s296 + $0xd0] sm:$0xff]
      %v5295 = vld [vmem:[%s296 + $0xd8] sm:$0xff]
      %v5296 = vld [vmem:[%s296 + $0xe0] sm:$0xff]
      %v5297 = vld [vmem:[%s296 + $0xe8] sm:$0xff]
      %v5298 = vld [vmem:[%s296 + $0xf0] sm:$0xff]
      %v5299 = vld [vmem:[%s296 + $0xf8] sm:$0xff]
      %v5300 = vadd.f32 %v5236, %v5268
      %v5301 = vadd.f32 %v5237, %v5269
      %v5302 = vadd.f32 %v5238, %v5270
      %v5303 = vadd.f32 %v5239, %v5271
      %v5304 = vadd.f32 %v5240, %v5272
      %v5305 = vadd.f32 %v5241, %v5273
      %v5306 = vadd.f32 %v5242, %v5274
      %v5307 = vadd.f32 %v5243, %v5275
      %v5308 = vadd.f32 %v5244, %v5276
      %v5309 = vadd.f32 %v5245, %v5277
      %v5310 = vadd.f32 %v5246, %v5278
      %v5311 = vadd.f32 %v5247, %v5279
      %v5312 = vadd.f32 %v5248, %v5280
      %v5313 = vadd.f32 %v5249, %v5281
      %v5314 = vadd.f32 %v5250, %v5282
      %v5315 = vadd.f32 %v5251, %v5283
      %v5316 = vadd.f32 %v5252, %v5284
      %v5317 = vadd.f32 %v5253, %v5285
      %v5318 = vadd.f32 %v5254, %v5286
      %v5319 = vadd.f32 %v5255, %v5287
      %v5320 = vadd.f32 %v5256, %v5288
      %v5321 = vadd.f32 %v5257, %v5289
      %v5322 = vadd.f32 %v5258, %v5290
      %v5323 = vadd.f32 %v5259, %v5291
      %v5324 = vadd.f32 %v5260, %v5292
      %v5325 = vadd.f32 %v5261, %v5293
      %v5326 = vadd.f32 %v5262, %v5294
      %v5327 = vadd.f32 %v5263, %v5295
      %v5328 = vadd.f32 %v5264, %v5296
      %v5329 = vadd.f32 %v5265, %v5297
      %v5330 = vadd.f32 %v5266, %v5298
      %v5331 = vadd.f32 %v5267, %v5299
      %5332 = vst.msk [vmem:[%s306] sm:$0xff] %vm312, %v5300
      %5333 = vst.msk [vmem:[%s306 + $0x8] sm:$0xff] %vm312, %v5301
      %5334 = vst.msk [vmem:[%s306 + $0x10] sm:$0xff] %vm312, %v5302
      %5335 = vst.msk [vmem:[%s306 + $0x18] sm:$0xff] %vm312, %v5303
      %5336 = vst.msk [vmem:[%s306 + $0x20] sm:$0xff] %vm312, %v5304
      %5337 = vst.msk [vmem:[%s306 + $0x28] sm:$0xff] %vm312, %v5305
      %5338 = vst.msk [vmem:[%s306 + $0x30] sm:$0xff] %vm312, %v5306
      %5339 = vst.msk [vmem:[%s306 + $0x38] sm:$0xff] %vm312, %v5307
      %5340 = vst.msk [vmem:[%s306 + $0x40] sm:$0xff] %vm312, %v5308
      %5341 = vst.msk [vmem:[%s306 + $0x48] sm:$0xff] %vm312, %v5309
      %5342 = vst.msk [vmem:[%s306 + $0x50] sm:$0xff] %vm312, %v5310
      %5343 = vst.msk [vmem:[%s306 + $0x58] sm:$0xff] %vm312, %v5311
      %5344 = vst.msk [vmem:[%s306 + $0x60] sm:$0xff] %vm312, %v5312
      %5345 = vst.msk [vmem:[%s306 + $0x68] sm:$0xff] %vm312, %v5313
      %5346 = vst.msk [vmem:[%s306 + $0x70] sm:$0xff] %vm312, %v5314
      %5347 = vst.msk [vmem:[%s306 + $0x78] sm:$0xff] %vm312, %v5315
      %5348 = vst.msk [vmem:[%s306 + $0x80] sm:$0xff] %vm312, %v5316
      %5349 = vst.msk [vmem:[%s306 + $0x88] sm:$0xff] %vm312, %v5317
      %5350 = vst.msk [vmem:[%s306 + $0x90] sm:$0xff] %vm312, %v5318
      %5351 = vst.msk [vmem:[%s306 + $0x98] sm:$0xff] %vm312, %v5319
      %5352 = vst.msk [vmem:[%s306 + $0xa0] sm:$0xff] %vm312, %v5320
      %5353 = vst.msk [vmem:[%s306 + $0xa8] sm:$0xff] %vm312, %v5321
      %5354 = vst.msk [vmem:[%s306 + $0xb0] sm:$0xff] %vm312, %v5322
      %5355 = vst.msk [vmem:[%s306 + $0xb8] sm:$0xff] %vm312, %v5323
      %5356 = vst.msk [vmem:[%s306 + $0xc0] sm:$0xff] %vm312, %v5324
      %5357 = vst.msk [vmem:[%s306 + $0xc8] sm:$0xff] %vm312, %v5325
      %5358 = vst.msk [vmem:[%s306 + $0xd0] sm:$0xff] %vm312, %v5326
      %5359 = vst.msk [vmem:[%s306 + $0xd8] sm:$0xff] %vm312, %v5327
      %5360 = vst.msk [vmem:[%s306 + $0xe0] sm:$0xff] %vm312, %v5328
      %5361 = vst.msk [vmem:[%s306 + $0xe8] sm:$0xff] %vm312, %v5329
      %5362 = vst.msk [vmem:[%s306 + $0xf0] sm:$0xff] %vm312, %v5330
      %5363 = vst.msk [vmem:[%s306 + $0xf8] sm:$0xff] %vm312, %v5331
      %p5364 = scmp.lt.s32.totalorder %s19, 1
      %s5365 = scalar_select %p5364, %s19, 1
      %s5366 = smul.addr %s5365, 32
      %s5367 = smul.addr %s5366, 8
      %s5368 = scalar_lea.vmem %s6, %s5367
      %p5369 = scmp.lt.s32.totalorder %s19, 1
      %s5370 = scalar_select %p5369, %s19, 1
      %s5371 = smul.addr %s5370, 32
      %s5372 = smul.addr %s5371, 8
      %s5373 = scalar_lea.vmem %s7, %s5372
      // Predicated region
      $region45: #{tpu_custom_call.1} parent=43 // pred_check
        %p5374 = pneg %p173
      $region46: #{tpu_custom_call.1} parent=43 // pred_check_branch
        %5376 = sbr.rel (%p5374) target = $region48
      $region47: #{tpu_custom_call.1} parent=43 // pred_region
        _
      $region48: #{tpu_custom_call.1} parent=43 // pred_fallthru
        _
      // Predicated region
      $region49: #{tpu_custom_call.1} parent=43 // pred_check
        %p5377 = pneg %p199
      $region50: #{tpu_custom_call.1} parent=43 // pred_check_branch
        %5379 = sbr.rel (%p5377) target = $region52
      $region51: #{tpu_custom_call.1} parent=43 // pred_region
        _
      $region52: #{tpu_custom_call.1} parent=43 // pred_fallthru
        _
    $region44: #{tpu_custom_call.1} parent=5 // pred_fallthru
      _
    %p5380 = scmp.le.s32.totalorder 2, %s14
    // Predicated region
    $region53: #{tpu_custom_call.1} parent=5 // pred_check
      %p5381 = pneg %p5380
    $region54: #{tpu_custom_call.1} parent=5 // pred_check_branch
      %5383 = sbr.rel (%p5381) target = $region56
    $region55: #{tpu_custom_call.1} parent=5 // pred_region
      %s5384 = ssub.s32 %s14, 2
      // Predicated region
      $region57: #{tpu_custom_call.1} parent=55 // pred_check
        %p5385 = pneg %p179
      $region58: #{tpu_custom_call.1} parent=55 // pred_check_branch
        %5387 = sbr.rel (%p5385) target = $region60
      $region59: #{tpu_custom_call.1} parent=55 // pred_region
        %p5388 = scmp.lt.s32.totalorder %s20, 1
        %s5389 = scalar_select %p5388, %s20, 1
        %s5390 = smul.addr %s5389, 32
        %s5391 = smul.addr %s5390, 8
        %s5392 = scalar_lea.vmem %s6, %s5391
      $region60: #{tpu_custom_call.1} parent=55 // pred_fallthru
        _
      // Predicated region
      $region61: #{tpu_custom_call.1} parent=55 // pred_check
        %p5393 = pneg %p205
      $region62: #{tpu_custom_call.1} parent=55 // pred_check_branch
        %5395 = sbr.rel (%p5393) target = $region64
      $region63: #{tpu_custom_call.1} parent=55 // pred_region
        %p5396 = scmp.lt.s32.totalorder %s20, 1
        %s5397 = scalar_select %p5396, %s20, 1
        %s5398 = smul.addr %s5397, 32
        %s5399 = smul.addr %s5398, 8
        %s5400 = scalar_lea.vmem %s7, %s5399
      $region64: #{tpu_custom_call.1} parent=55 // pred_fallthru
        _
    $region56: #{tpu_custom_call.1} parent=5 // pred_fallthru
      _
  $region6: #{tpu_custom_call.1} parent=0 // loop_footer
    %s18 = sadd.s32 1, %s14
  $region7: #{tpu_custom_call.1} parent=0 // loop_footer_branch
    %13 = sbr.rel target = $region3
  $region8: #{tpu_custom_call.1} parent=0 // loop_exit
    _

</llo_original>
